<compile_context>
chip_gen: v5e
topology: v5e:2x2
jax: 0.10.0
libtpu: 0.0.40
codegen_flags: <defaults>
</compile_context>

<pallas_src>
import functools

import jax
import jax.numpy as jnp
from jax import lax
from jax.experimental import pallas as pl
from jax.experimental.pallas import tpu as pltpu

EPS = 1e-5
CIN, C1, C2, HID = 4, 16, 32, 256
K1, S1, K2, S2 = 8, 4, 4, 2
OH1, OH2 = 20, 9                 # conv1 / conv2 output spatial sizes
FEAT2 = C1 * K2 * K2             # 256 = conv2 im2col features (cin, kh, kw)
NSPAT = OH2 * OH2                # 81 valid conv2 output positions
NLANE = 128                      # lane-padded conv2 spatial positions
OUT_PAD = 128                    # lane-padded final layer width
FLAT = C2 * NLANE                # 4096 = padded flatten width fed to l1


# ----------------------------------------------------------------------------
# Fused kernel: conv2(+BN2+ReLU) -> flatten -> l1(+ReLU) -> out, TB samples
# per grid step.
# ----------------------------------------------------------------------------
def _qnet_tail_kernel(p_ref, w2_ref, b2_ref, wl1_ref, bl1_ref, wo_ref, bo_ref,
                      o_ref):
    tb = o_ref.shape[0]

    # conv2 + folded BN2 + ReLU as a single (32,256)@(256,TB*128) matmul.
    z2 = jnp.dot(w2_ref[...], p_ref[...], preferred_element_type=jnp.float32)
    z2 = jnp.maximum(z2 + b2_ref[...], 0.0)                  # (32, TB*128) f32

    # The one sublane<->lane relayout: (32, TB*128) -> (TB, 32*128).
    # x1[t, c*128 + s] = z2[c, t*128 + s].  Lanes s >= 81 hold relu(b2) junk;
    # wl1 zero-weights them.
    rows = [z2[:, t * NLANE:(t + 1) * NLANE].reshape(1, FLAT)
            for t in range(tb)]
    x1 = jnp.concatenate(rows, axis=0).astype(wl1_ref.dtype)  # (TB, 4096) bf16

    # l1 + ReLU: one (TB,4096)@(4096,256) matmul.
    h = jnp.dot(x1, wl1_ref[...], preferred_element_type=jnp.float32)
    h = jnp.maximum(h + bl1_ref[...], 0.0).astype(wo_ref.dtype)   # (TB, 256)

    # Output layer, lane padded to 128 -> the only HBM store is lane dense.
    o_ref[...] = (jnp.dot(h, wo_ref[...], preferred_element_type=jnp.float32)
                  + bo_ref[...])


def qnet_pallas(patches, packed, tb):
    b_pad = patches.shape[1] // NLANE
    nlt = tb * NLANE

    def fixed(shape):
        return pl.BlockSpec(shape, lambda i: (0,) * len(shape))

    grid_spec = pltpu.PrefetchScalarGridSpec(
        num_scalar_prefetch=0,
        grid=(b_pad // tb,),
        in_specs=[
            pl.BlockSpec((FEAT2, nlt), lambda i: (0, i)),  # conv2 im2col patches
            fixed((C2, FEAT2)),       # w2   (BN2 folded, bf16)
            fixed((C2, 1)),           # b2   (f32)
            fixed((FLAT, HID)),       # wl1  (flatten-permuted, zero-padded, bf16)
            fixed((1, HID)),          # bl1  (f32)
            fixed((HID, OUT_PAD)),    # wo   (lane padded, bf16)
            fixed((1, OUT_PAD)),      # bo   (f32)
        ],
        out_specs=pl.BlockSpec((tb, OUT_PAD), lambda i: (i, 0)),
    )
    return pl.pallas_call(
        _qnet_tail_kernel,
        out_shape=jax.ShapeDtypeStruct((b_pad, OUT_PAD), jnp.float32),
        grid_spec=grid_spec,
        compiler_params=pltpu.CompilerParams(
            dimension_semantics=("parallel",)),
    )(patches, packed["w2"], packed["b2"], packed["wl1"], packed["bl1"],
      packed["wo"], packed["bo"])


# ----------------------------------------------------------------------------
# Wrapper glue (XLA): conv1 (+folded BN1 +ReLU) and conv2 im2col from static
# strided slices.  No gathers, no 8-D transposes.
# ----------------------------------------------------------------------------
def conv1_bn_relu(x, packed):
    y = lax.conv_general_dilated(
        x, packed["w1"], (S1, S1), "VALID",
        dimension_numbers=("NCHW", "OIHW", "NCHW"))
    return jnp.maximum(y + packed["b1"][None, :, None, None], 0.0)


def conv2_patches(y1, b_pad):
    """im2col for the 4x4 / stride-2 conv2 from conv1 output (B,16,20,20).

    Returns (256, b_pad*128) bf16 with feature f = cin*16 + kh*4 + kw
    (matching conv2_w.reshape(32, 256)) and lane = sample*128 + (oi*9 + oj),
    zero padded in both the spatial (81->128) and batch (B->b_pad) directions.
    """
    B = y1.shape[0]
    cols = []
    for kh in range(K2):
        for kw in range(K2):
            cols.append(y1[:, :, kh::S2, kw::S2][:, :, :OH2, :OH2])
    p = jnp.stack(cols, axis=2)                     # (B, 16, 16, 9, 9)
    p = p.reshape(B, FEAT2, NSPAT)                  # (B, 256, 81)
    p = jnp.pad(p, ((0, b_pad - B), (0, 0), (0, NLANE - NSPAT)))
    p = p.transpose(1, 0, 2).reshape(FEAT2, b_pad * NLANE)
    return p.astype(jnp.bfloat16)


# ----------------------------------------------------------------------------
# One-time weight packing (outside the traced forward).
# ----------------------------------------------------------------------------
def pack_params(params, action_size):
    assert action_size <= OUT_PAD
    # conv1 + BN1 folded (stays f32: it runs as an XLA conv in the wrapper).
    s1 = params["bn1_gamma"] / jnp.sqrt(params["bn1_var"] + EPS)
    w1 = params["conv1_w"] * s1[:, None, None, None]
    b1 = (params["conv1_b"] - params["bn1_mean"]) * s1 + params["bn1_beta"]

    # conv2 + BN2 folded, flattened to (32, 256) in (cin, kh, kw) order.
    s2 = params["bn2_gamma"] / jnp.sqrt(params["bn2_var"] + EPS)
    w2 = (params["conv2_w"] * s2[:, None, None, None]).reshape(C2, FEAT2)
    b2 = ((params["conv2_b"] - params["bn2_mean"]) * s2
          + params["bn2_beta"])[:, None]

    # l1 weights: torch flatten index c*81 + s  ->  kernel index c*128 + s,
    # rows for padded spatial lanes (s >= 81) are zero.
    wl1 = params["l1_w"].T.reshape(C2, NSPAT, HID)
    wl1 = jnp.pad(wl1, ((0, 0), (0, NLANE - NSPAT), (0, 0)))
    wl1 = wl1.reshape(FLAT, HID)
    bl1 = params["l1_b"][None, :]

    wo = jnp.pad(params["out_w"].T, ((0, 0), (0, OUT_PAD - action_size)))
    bo = jnp.pad(params["out_b"][None, :], ((0, 0), (0, OUT_PAD - action_size)))
    return dict(
        w1=w1.astype(jnp.float32), b1=b1.astype(jnp.float32),
        w2=w2.astype(jnp.bfloat16), b2=b2.astype(jnp.float32),
        wl1=wl1.astype(jnp.bfloat16), bl1=bl1.astype(jnp.float32),
        wo=wo.astype(jnp.bfloat16), bo=bo.astype(jnp.float32))


def pong_qnet_forward(x, packed, action_size, tb=None):
    B = x.shape[0]
    if tb is None:
        # Batch tile: multiple of 8 (sublane alignment), capped at 32 so the
        # per-step patch block fits default scoped VMEM on every generation.
        tb = min(32, -(-B // 8) * 8)
    b_pad = -(-B // tb) * tb

    y1 = conv1_bn_relu(x, packed)            # (B, 16, 20, 20) f32
    patches = conv2_patches(y1, b_pad)       # (256, b_pad*128) bf16
    out = qnet_pallas(patches, packed, tb)   # (b_pad, 128) f32
    return out[:B, :action_size]


# ----------------------------------------------------------------------------
# Parameter construction (deterministic, synthetic)
# ----------------------------------------------------------------------------
def init_params(key, action_size):
    ks = jax.random.split(key, 12)
    f = lambda k, shape, std=0.05: (std * jax.random.normal(k, shape)).astype(jnp.float32)
    flat_in = C2 * OH2 * OH2  # 2592
    return dict(
        conv1_w=f(ks[0], (C1, CIN, K1, K1)),
        conv1_b=f(ks[1], (C1,)),
        bn1_gamma=1.0 + f(ks[2], (C1,)),
        bn1_beta=f(ks[3], (C1,)),
        bn1_mean=f(ks[4], (C1,)),
        bn1_var=jnp.abs(1.0 + f(ks[5], (C1,))),
        conv2_w=f(ks[6], (C2, C1, K2, K2)),
        conv2_b=f(ks[7], (C2,)),
        bn2_gamma=1.0 + f(ks[8], (C2,)),
        bn2_beta=f(ks[9], (C2,)),
        bn2_mean=f(ks[10], (C2,)),
        bn2_var=jnp.abs(1.0 + f(ks[11], (C2,))),
        l1_w=f(jax.random.fold_in(key, 100), (HID, flat_in)),
        l1_b=f(jax.random.fold_in(key, 101), (HID,)),
        out_w=f(jax.random.fold_in(key, 102), (action_size, HID)),
        out_b=f(jax.random.fold_in(key, 103), (action_size,)),
    )


# ----------------------------------------------------------------------------
# Pure-JAX f32 reference (sanity check)
# ----------------------------------------------------------------------------
def reference_forward(x, params):
    def conv_bn_relu(x, w, b, gamma, beta, mean, var, stride):
        y = lax.conv_general_dilated(
            x, w, (stride, stride), "VALID",
            dimension_numbers=("NCHW", "OIHW", "NCHW"))
        y = y + b[None, :, None, None]
        s = gamma / jnp.sqrt(var + EPS)
        y = (y - mean[None, :, None, None]) * s[None, :, None, None] \
            + beta[None, :, None, None]
        return jnp.maximum(y, 0.0)

    y = conv_bn_relu(x, params["conv1_w"], params["conv1_b"], params["bn1_gamma"],
                     params["bn1_beta"], params["bn1_mean"], params["bn1_var"], S1)
    y = conv_bn_relu(y, params["conv2_w"], params["conv2_b"], params["bn2_gamma"],
                     params["bn2_beta"], params["bn2_mean"], params["bn2_var"], S2)
    B = y.shape[0]
    flat = y.reshape(B, -1)
    h = jnp.maximum(flat @ params["l1_w"].T + params["l1_b"], 0.0)
    return h @ params["out_w"].T + params["out_b"]


if __name__ == "__main__":
    ACTION_SIZE = 6   # Pong action space
    B = 4             # module definition fixes the input to 4x84x84 frames

    key = jax.random.PRNGKey(0)
    k_x, k_p = jax.random.split(key)
    x = jax.random.normal(k_x, (B, CIN, 84, 84), dtype=jnp.float32)
    params = init_params(k_p, ACTION_SIZE)

    packed = pack_params(params, ACTION_SIZE)          # one-time weight packing

    fwd = jax.jit(functools.partial(pong_qnet_forward, action_size=ACTION_SIZE))
    out = jax.block_until_ready(fwd(x, packed))

    ref = reference_forward(x, params)
    assert out.shape == (B, ACTION_SIZE)
    max_err = jnp.max(jnp.abs(out - ref))
    # bf16 matmul operands with f32 accumulation -> loosened tolerance.
    assert jnp.allclose(out, ref, rtol=2e-2, atol=3e-2), \
        f"mismatch vs JAX reference (max abs err {max_err})"

    print("KERNEL_OK")
</pallas_src>

<mosaic_0001>
module attributes {stable_mosaic.version = 11 : i64} {
  func.func @_qnet_tail_kernel(%arg0: i32, %arg1: memref<256x1024xbf16, #tpu.memory_space<vmem>>, %arg2: memref<32x256xbf16, #tpu.memory_space<vmem>>, %arg3: memref<32x1xf32, #tpu.memory_space<vmem>>, %arg4: memref<4096x256xbf16, #tpu.memory_space<vmem>>, %arg5: memref<1x256xf32, #tpu.memory_space<vmem>>, %arg6: memref<256x128xbf16, #tpu.memory_space<vmem>>, %arg7: memref<1x128xf32, #tpu.memory_space<vmem>>, %arg8: memref<8x128xf32, #tpu.memory_space<vmem>>) attributes {dimension_semantics = [#tpu.dimension_semantics<parallel>], iteration_bounds = array<i64: 1>, scalar_prefetch = 0 : i64, scratch_operands = 0 : i64, tpu.core_type = #tpu.core_type<tc>, window_params = [{transform_indices = @transform_0, window_bounds = array<i64: 256, 1024>}, {pipeline_mode = #tpu.pipeline_mode<synchronous>, transform_indices = @transform_1, window_bounds = array<i64: 32, 256>}, {pipeline_mode = #tpu.pipeline_mode<synchronous>, transform_indices = @transform_2, window_bounds = array<i64: 32, 1>}, {pipeline_mode = #tpu.pipeline_mode<synchronous>, transform_indices = @transform_3, window_bounds = array<i64: 4096, 256>}, {pipeline_mode = #tpu.pipeline_mode<synchronous>, transform_indices = @transform_4, window_bounds = array<i64: 1, 256>}, {pipeline_mode = #tpu.pipeline_mode<synchronous>, transform_indices = @transform_5, window_bounds = array<i64: 256, 128>}, {pipeline_mode = #tpu.pipeline_mode<synchronous>, transform_indices = @transform_6, window_bounds = array<i64: 1, 128>}, {transform_indices = @transform_7, window_bounds = array<i64: 8, 128>}]} {
    %c0 = arith.constant 0 : index
    %c0_0 = arith.constant 0 : index
    %0 = vector.load %arg2[%c0, %c0_0] : memref<32x256xbf16, #tpu.memory_space<vmem>>, vector<32x256xbf16>
    %c0_1 = arith.constant 0 : index
    %c0_2 = arith.constant 0 : index
    %1 = vector.load %arg1[%c0_1, %c0_2] : memref<256x1024xbf16, #tpu.memory_space<vmem>>, vector<256x1024xbf16>
    %cst = arith.constant dense<0.000000e+00> : vector<32x1024xf32>
    %2 = tpu.matmul %0, %1, %cst {dimension_numbers = #tpu.dot_dimension_numbers<[1], [0], [0], [1], [0, 0, 1, 1], [], []>} : vector<32x256xbf16>, vector<256x1024xbf16>, vector<32x1024xf32> -> vector<32x1024xf32>
    %c0_3 = arith.constant 0 : index
    %c0_4 = arith.constant 0 : index
    %3 = vector.load %arg3[%c0_3, %c0_4] : memref<32x1xf32, #tpu.memory_space<vmem>>, vector<32x1xf32>
    %4 = vector.broadcast %3 : vector<32x1xf32> to vector<32x1024xf32>
    %5 = arith.addf %2, %4 : vector<32x1024xf32>
    %cst_5 = arith.constant 0.000000e+00 : f32
    %6 = vector.broadcast %cst_5 : f32 to vector<32x1024xf32>
    %7 = arith.maximumf %5, %6 : vector<32x1024xf32>
    %8 = vector.extract_strided_slice %7 {offsets = [0, 0], sizes = [32, 128], strides = [1, 1]} : vector<32x1024xf32> to vector<32x128xf32>
    %9 = vector.shape_cast %8 : vector<32x128xf32> to vector<1x4096xf32>
    %10 = vector.extract_strided_slice %7 {offsets = [0, 128], sizes = [32, 128], strides = [1, 1]} : vector<32x1024xf32> to vector<32x128xf32>
    %11 = vector.shape_cast %10 : vector<32x128xf32> to vector<1x4096xf32>
    %12 = vector.extract_strided_slice %7 {offsets = [0, 256], sizes = [32, 128], strides = [1, 1]} : vector<32x1024xf32> to vector<32x128xf32>
    %13 = vector.shape_cast %12 : vector<32x128xf32> to vector<1x4096xf32>
    %14 = vector.extract_strided_slice %7 {offsets = [0, 384], sizes = [32, 128], strides = [1, 1]} : vector<32x1024xf32> to vector<32x128xf32>
    %15 = vector.shape_cast %14 : vector<32x128xf32> to vector<1x4096xf32>
    %16 = vector.extract_strided_slice %7 {offsets = [0, 512], sizes = [32, 128], strides = [1, 1]} : vector<32x1024xf32> to vector<32x128xf32>
    %17 = vector.shape_cast %16 : vector<32x128xf32> to vector<1x4096xf32>
    %18 = vector.extract_strided_slice %7 {offsets = [0, 640], sizes = [32, 128], strides = [1, 1]} : vector<32x1024xf32> to vector<32x128xf32>
    %19 = vector.shape_cast %18 : vector<32x128xf32> to vector<1x4096xf32>
    %20 = vector.extract_strided_slice %7 {offsets = [0, 768], sizes = [32, 128], strides = [1, 1]} : vector<32x1024xf32> to vector<32x128xf32>
    %21 = vector.shape_cast %20 : vector<32x128xf32> to vector<1x4096xf32>
    %22 = vector.extract_strided_slice %7 {offsets = [0, 896], sizes = [32, 128], strides = [1, 1]} : vector<32x1024xf32> to vector<32x128xf32>
    %23 = vector.shape_cast %22 : vector<32x128xf32> to vector<1x4096xf32>
    %24 = tpu.concatenate %9, %11, %13, %15, %17, %19, %21, %23 in 0 : vector<1x4096xf32>, vector<1x4096xf32>, vector<1x4096xf32>, vector<1x4096xf32>, vector<1x4096xf32>, vector<1x4096xf32>, vector<1x4096xf32>, vector<1x4096xf32> -> vector<8x4096xf32>
    %25 = arith.truncf %24 : vector<8x4096xf32> to vector<8x4096xbf16>
    %c0_6 = arith.constant 0 : index
    %c0_7 = arith.constant 0 : index
    %26 = vector.load %arg4[%c0_6, %c0_7] : memref<4096x256xbf16, #tpu.memory_space<vmem>>, vector<4096x256xbf16>
    %cst_8 = arith.constant dense<0.000000e+00> : vector<8x256xf32>
    %27 = tpu.matmul %25, %26, %cst_8 {dimension_numbers = #tpu.dot_dimension_numbers<[1], [0], [0], [1], [0, 0, 1, 1], [], []>} : vector<8x4096xbf16>, vector<4096x256xbf16>, vector<8x256xf32> -> vector<8x256xf32>
    %c0_9 = arith.constant 0 : index
    %c0_10 = arith.constant 0 : index
    %28 = vector.load %arg5[%c0_9, %c0_10] : memref<1x256xf32, #tpu.memory_space<vmem>>, vector<1x256xf32>
    %29 = vector.broadcast %28 : vector<1x256xf32> to vector<8x256xf32>
    %30 = arith.addf %27, %29 : vector<8x256xf32>
    %cst_11 = arith.constant 0.000000e+00 : f32
    %31 = vector.broadcast %cst_11 : f32 to vector<8x256xf32>
    %32 = arith.maximumf %30, %31 : vector<8x256xf32>
    %33 = arith.truncf %32 : vector<8x256xf32> to vector<8x256xbf16>
    %c0_12 = arith.constant 0 : index
    %c0_13 = arith.constant 0 : index
    %34 = vector.load %arg6[%c0_12, %c0_13] : memref<256x128xbf16, #tpu.memory_space<vmem>>, vector<256x128xbf16>
    %cst_14 = arith.constant dense<0.000000e+00> : vector<8x128xf32>
    %35 = tpu.matmul %33, %34, %cst_14 {dimension_numbers = #tpu.dot_dimension_numbers<[1], [0], [0], [1], [0, 0, 1, 1], [], []>} : vector<8x256xbf16>, vector<256x128xbf16>, vector<8x128xf32> -> vector<8x128xf32>
    %c0_15 = arith.constant 0 : index
    %c0_16 = arith.constant 0 : index
    %36 = vector.load %arg7[%c0_15, %c0_16] : memref<1x128xf32, #tpu.memory_space<vmem>>, vector<1x128xf32>
    %37 = vector.broadcast %36 : vector<1x128xf32> to vector<8x128xf32>
    %38 = arith.addf %35, %37 : vector<8x128xf32>
    %c0_17 = arith.constant 0 : index
    %c0_18 = arith.constant 0 : index
    %39 = vector.load %arg8[%c0_17, %c0_18] : memref<8x128xf32, #tpu.memory_space<vmem>>, vector<8x128xf32>
    tpu.vector_store %arg8[%c0_17, %c0_18], %38 {strides = array<i32>} : memref<8x128xf32, #tpu.memory_space<vmem>>, vector<8x128xf32>,
    return
  }
  func.func @transform_0(%arg0: i32) -> (i32, i32) {
    %c0_i32 = arith.constant 0 : i32
    %c0_i32_0 = arith.constant 0 : i32
    return %c0_i32, %arg0 : i32, i32
  }
  func.func @transform_1(%arg0: i32) -> (i32, i32) {
    %c0_i32 = arith.constant 0 : i32
    %c0_i32_0 = arith.constant 0 : i32
    %c0_i32_1 = arith.constant 0 : i32
    return %c0_i32, %c0_i32_0 : i32, i32
  }
  func.func @transform_2(%arg0: i32) -> (i32, i32) {
    %c0_i32 = arith.constant 0 : i32
    %c0_i32_0 = arith.constant 0 : i32
    %c0_i32_1 = arith.constant 0 : i32
    return %c0_i32, %c0_i32_0 : i32, i32
  }
  func.func @transform_3(%arg0: i32) -> (i32, i32) {
    %c0_i32 = arith.constant 0 : i32
    %c0_i32_0 = arith.constant 0 : i32
    %c0_i32_1 = arith.constant 0 : i32
    return %c0_i32, %c0_i32_0 : i32, i32
  }
  func.func @transform_4(%arg0: i32) -> (i32, i32) {
    %c0_i32 = arith.constant 0 : i32
    %c0_i32_0 = arith.constant 0 : i32
    %c0_i32_1 = arith.constant 0 : i32
    return %c0_i32, %c0_i32_0 : i32, i32
  }
  func.func @transform_5(%arg0: i32) -> (i32, i32) {
    %c0_i32 = arith.constant 0 : i32
    %c0_i32_0 = arith.constant 0 : i32
    %c0_i32_1 = arith.constant 0 : i32
    return %c0_i32, %c0_i32_0 : i32, i32
  }
  func.func @transform_6(%arg0: i32) -> (i32, i32) {
    %c0_i32 = arith.constant 0 : i32
    %c0_i32_0 = arith.constant 0 : i32
    %c0_i32_1 = arith.constant 0 : i32
    return %c0_i32, %c0_i32_0 : i32, i32
  }
  func.func @transform_7(%arg0: i32) -> (i32, i32) {
    %c0_i32 = arith.constant 0 : i32
    %c0_i32_0 = arith.constant 0 : i32
    return %arg0, %c0_i32 : i32, i32
  }
}

</mosaic_0001>

<llo_original>
// kernel: pong_qnet_forward.1
$region0: #{pong_qnet_forward.1}
  #allocation0 [shape = 'u32[]', space=smem, size = 0x4, offset = 0x4, fixed_abs, tag = 'smem constant byte address 0x4 - core index']
  #allocation1 [shape = 'u32[72,128]{1,0:T(1,128)}', space=vmem, size = 0x9000, scoped, tag = 'internal scratch']
  %s0 = inlined_call_operand.vmem [shape: bf16[256,1024], index: 0, kind: input, shape index: {}]
  %s1 = inlined_call_operand.vmem [shape: bf16[32,256], index: 1, kind: input, shape index: {}]
  %s2 = inlined_call_operand.vmem [shape: f32[32,1], index: 2, kind: input, shape index: {}]
  %s3 = inlined_call_operand.vmem [shape: bf16[4096,256], index: 3, kind: input, shape index: {}]
  %s4 = inlined_call_operand.vmem [shape: f32[1,256], index: 4, kind: input, shape index: {}]
  %s5 = inlined_call_operand.vmem [shape: bf16[256,128], index: 5, kind: input, shape index: {}]
  %s6 = inlined_call_operand.vmem [shape: f32[1,128], index: 6, kind: input, shape index: {}]
  %s7 = inlined_call_operand.vmem [shape: f32[8,128], index: 7, kind: output, shape index: {}]
  %s8 = sld [smem:[#allocation0]]
  $region38: #{pong_qnet_forward.1} parent=0
    _
  %s10 = ssub.s32 1, %s8
  %s11 = scalar_select 0, %s10, %s8
  // Predicated region
  $region2: #{pong_qnet_forward.1} parent=0 // pred_check
    _
  $region3: #{pong_qnet_forward.1} parent=0 // pred_check_branch
    %13 = sbr.rel (0) target = $region5
  $region4: #{pong_qnet_forward.1} parent=0 // pred_region
    _
  $region5: #{pong_qnet_forward.1} parent=0 // pred_fallthru
    _
  // Predicated region
  $region6: #{pong_qnet_forward.1} parent=0 // pred_check
    _
  $region7: #{pong_qnet_forward.1} parent=0 // pred_check_branch
    %15 = sbr.rel (0) target = $region9
  $region8: #{pong_qnet_forward.1} parent=0 // pred_region
    _
  $region9: #{pong_qnet_forward.1} parent=0 // pred_fallthru
    _
  // Predicated region
  $region10: #{pong_qnet_forward.1} parent=0 // pred_check
    _
  $region11: #{pong_qnet_forward.1} parent=0 // pred_check_branch
    %17 = sbr.rel (0) target = $region13
  $region12: #{pong_qnet_forward.1} parent=0 // pred_region
    _
  $region13: #{pong_qnet_forward.1} parent=0 // pred_fallthru
    _
  // Predicated region
  $region14: #{pong_qnet_forward.1} parent=0 // pred_check
    _
  $region15: #{pong_qnet_forward.1} parent=0 // pred_check_branch
    %19 = sbr.rel (0) target = $region17
  $region16: #{pong_qnet_forward.1} parent=0 // pred_region
    _
  $region17: #{pong_qnet_forward.1} parent=0 // pred_fallthru
    _
  // Predicated region
  $region18: #{pong_qnet_forward.1} parent=0 // pred_check
    _
  $region19: #{pong_qnet_forward.1} parent=0 // pred_check_branch
    %21 = sbr.rel (0) target = $region21
  $region20: #{pong_qnet_forward.1} parent=0 // pred_region
    _
  $region21: #{pong_qnet_forward.1} parent=0 // pred_fallthru
    _
  // Predicated region
  $region22: #{pong_qnet_forward.1} parent=0 // pred_check
    _
  $region23: #{pong_qnet_forward.1} parent=0 // pred_check_branch
    %23 = sbr.rel (0) target = $region25
  $region24: #{pong_qnet_forward.1} parent=0 // pred_region
    _
  $region25: #{pong_qnet_forward.1} parent=0 // pred_fallthru
    _
  // Predicated region
  $region26: #{pong_qnet_forward.1} parent=0 // pred_check
    _
  $region27: #{pong_qnet_forward.1} parent=0 // pred_check_branch
    %25 = sbr.rel (0) target = $region29
  $region28: #{pong_qnet_forward.1} parent=0 // pred_region
    _
  $region29: #{pong_qnet_forward.1} parent=0 // pred_fallthru
    _
  %v26 = vld [vmem:[%s1] sm:$0xff]
  %v27 = vld [vmem:[%s1 + $0x8] sm:$0xff]
  %v28 = vld [vmem:[%s1 + $0x10] sm:$0xff]
  %v29 = vld [vmem:[%s1 + $0x18] sm:$0xff]
  %v30 = vld [vmem:[%s0] sm:$0xff]
  %v31 = vld [vmem:[%s0 + $0x8] sm:$0xff]
  %v32 = vld [vmem:[%s0 + $0x10] sm:$0xff]
  %v33 = vld [vmem:[%s0 + $0x18] sm:$0xff]
  %v34 = vld [vmem:[%s0 + $0x20] sm:$0xff]
  %v35 = vld [vmem:[%s0 + $0x28] sm:$0xff]
  %v36 = vld [vmem:[%s0 + $0x30] sm:$0xff]
  %v37 = vld [vmem:[%s0 + $0x38] sm:$0xff]
  %v38 = vld [vmem:[%s0 + $0x40] sm:$0xff]
  %v39 = vld [vmem:[%s0 + $0x48] sm:$0xff]
  %v40 = vld [vmem:[%s0 + $0x50] sm:$0xff]
  %v41 = vld [vmem:[%s0 + $0x58] sm:$0xff]
  %v42 = vld [vmem:[%s0 + $0x60] sm:$0xff]
  %v43 = vld [vmem:[%s0 + $0x68] sm:$0xff]
  %v44 = vld [vmem:[%s0 + $0x70] sm:$0xff]
  %v45 = vld [vmem:[%s0 + $0x78] sm:$0xff]
  %v46 = vld [vmem:[%s0 + $0x80] sm:$0xff]
  %v47 = vld [vmem:[%s0 + $0x88] sm:$0xff]
  %v48 = vld [vmem:[%s0 + $0x90] sm:$0xff]
  %v49 = vld [vmem:[%s0 + $0x98] sm:$0xff]
  %v50 = vld [vmem:[%s0 + $0xa0] sm:$0xff]
  %v51 = vld [vmem:[%s0 + $0xa8] sm:$0xff]
  %v52 = vld [vmem:[%s0 + $0xb0] sm:$0xff]
  %v53 = vld [vmem:[%s0 + $0xb8] sm:$0xff]
  %v54 = vld [vmem:[%s0 + $0xc0] sm:$0xff]
  %v55 = vld [vmem:[%s0 + $0xc8] sm:$0xff]
  %v56 = vld [vmem:[%s0 + $0xd0] sm:$0xff]
  %v57 = vld [vmem:[%s0 + $0xd8] sm:$0xff]
  %v58 = vld [vmem:[%s0 + $0xe0] sm:$0xff]
  %v59 = vld [vmem:[%s0 + $0xe8] sm:$0xff]
  %v60 = vld [vmem:[%s0 + $0xf0] sm:$0xff]
  %v61 = vld [vmem:[%s0 + $0xf8] sm:$0xff]
  %v62 = vld [vmem:[%s0 + $0x100] sm:$0xff]
  %v63 = vld [vmem:[%s0 + $0x108] sm:$0xff]
  %v64 = vld [vmem:[%s0 + $0x110] sm:$0xff]
  %v65 = vld [vmem:[%s0 + $0x118] sm:$0xff]
  %v66 = vld [vmem:[%s0 + $0x120] sm:$0xff]
  %v67 = vld [vmem:[%s0 + $0x128] sm:$0xff]
  %v68 = vld [vmem:[%s0 + $0x130] sm:$0xff]
  %v69 = vld [vmem:[%s0 + $0x138] sm:$0xff]
  %v70 = vld [vmem:[%s0 + $0x140] sm:$0xff]
  %v71 = vld [vmem:[%s0 + $0x148] sm:$0xff]
  %v72 = vld [vmem:[%s0 + $0x150] sm:$0xff]
  %v73 = vld [vmem:[%s0 + $0x158] sm:$0xff]
  %v74 = vld [vmem:[%s0 + $0x160] sm:$0xff]
  %v75 = vld [vmem:[%s0 + $0x168] sm:$0xff]
  %v76 = vld [vmem:[%s0 + $0x170] sm:$0xff]
  %v77 = vld [vmem:[%s0 + $0x178] sm:$0xff]
  %v78 = vld [vmem:[%s0 + $0x180] sm:$0xff]
  %v79 = vld [vmem:[%s0 + $0x188] sm:$0xff]
  %v80 = vld [vmem:[%s0 + $0x190] sm:$0xff]
  %v81 = vld [vmem:[%s0 + $0x198] sm:$0xff]
  %v82 = vld [vmem:[%s0 + $0x1a0] sm:$0xff]
  %v83 = vld [vmem:[%s0 + $0x1a8] sm:$0xff]
  %v84 = vld [vmem:[%s0 + $0x1b0] sm:$0xff]
  %v85 = vld [vmem:[%s0 + $0x1b8] sm:$0xff]
  %v86 = vld [vmem:[%s0 + $0x1c0] sm:$0xff]
  %v87 = vld [vmem:[%s0 + $0x1c8] sm:$0xff]
  %v88 = vld [vmem:[%s0 + $0x1d0] sm:$0xff]
  %v89 = vld [vmem:[%s0 + $0x1d8] sm:$0xff]
  %v90 = vld [vmem:[%s0 + $0x1e0] sm:$0xff]
  %v91 = vld [vmem:[%s0 + $0x1e8] sm:$0xff]
  %v92 = vld [vmem:[%s0 + $0x1f0] sm:$0xff]
  %v93 = vld [vmem:[%s0 + $0x1f8] sm:$0xff]
  %v94 = vld [vmem:[%s0 + $0x200] sm:$0xff]
  %v95 = vld [vmem:[%s0 + $0x208] sm:$0xff]
  %v96 = vld [vmem:[%s0 + $0x210] sm:$0xff]
  %v97 = vld [vmem:[%s0 + $0x218] sm:$0xff]
  %v98 = vld [vmem:[%s0 + $0x220] sm:$0xff]
  %v99 = vld [vmem:[%s0 + $0x228] sm:$0xff]
  %v100 = vld [vmem:[%s0 + $0x230] sm:$0xff]
  %v101 = vld [vmem:[%s0 + $0x238] sm:$0xff]
  %v102 = vld [vmem:[%s0 + $0x240] sm:$0xff]
  %v103 = vld [vmem:[%s0 + $0x248] sm:$0xff]
  %v104 = vld [vmem:[%s0 + $0x250] sm:$0xff]
  %v105 = vld [vmem:[%s0 + $0x258] sm:$0xff]
  %v106 = vld [vmem:[%s0 + $0x260] sm:$0xff]
  %v107 = vld [vmem:[%s0 + $0x268] sm:$0xff]
  %v108 = vld [vmem:[%s0 + $0x270] sm:$0xff]
  %v109 = vld [vmem:[%s0 + $0x278] sm:$0xff]
  %v110 = vld [vmem:[%s0 + $0x280] sm:$0xff]
  %v111 = vld [vmem:[%s0 + $0x288] sm:$0xff]
  %v112 = vld [vmem:[%s0 + $0x290] sm:$0xff]
  %v113 = vld [vmem:[%s0 + $0x298] sm:$0xff]
  %v114 = vld [vmem:[%s0 + $0x2a0] sm:$0xff]
  %v115 = vld [vmem:[%s0 + $0x2a8] sm:$0xff]
  %v116 = vld [vmem:[%s0 + $0x2b0] sm:$0xff]
  %v117 = vld [vmem:[%s0 + $0x2b8] sm:$0xff]
  %v118 = vld [vmem:[%s0 + $0x2c0] sm:$0xff]
  %v119 = vld [vmem:[%s0 + $0x2c8] sm:$0xff]
  %v120 = vld [vmem:[%s0 + $0x2d0] sm:$0xff]
  %v121 = vld [vmem:[%s0 + $0x2d8] sm:$0xff]
  %v122 = vld [vmem:[%s0 + $0x2e0] sm:$0xff]
  %v123 = vld [vmem:[%s0 + $0x2e8] sm:$0xff]
  %v124 = vld [vmem:[%s0 + $0x2f0] sm:$0xff]
  %v125 = vld [vmem:[%s0 + $0x2f8] sm:$0xff]
  %v126 = vld [vmem:[%s0 + $0x300] sm:$0xff]
  %v127 = vld [vmem:[%s0 + $0x308] sm:$0xff]
  %v128 = vld [vmem:[%s0 + $0x310] sm:$0xff]
  %v129 = vld [vmem:[%s0 + $0x318] sm:$0xff]
  %v130 = vld [vmem:[%s0 + $0x320] sm:$0xff]
  %v131 = vld [vmem:[%s0 + $0x328] sm:$0xff]
  %v132 = vld [vmem:[%s0 + $0x330] sm:$0xff]
  %v133 = vld [vmem:[%s0 + $0x338] sm:$0xff]
  %v134 = vld [vmem:[%s0 + $0x340] sm:$0xff]
  %v135 = vld [vmem:[%s0 + $0x348] sm:$0xff]
  %v136 = vld [vmem:[%s0 + $0x350] sm:$0xff]
  %v137 = vld [vmem:[%s0 + $0x358] sm:$0xff]
  %v138 = vld [vmem:[%s0 + $0x360] sm:$0xff]
  %v139 = vld [vmem:[%s0 + $0x368] sm:$0xff]
  %v140 = vld [vmem:[%s0 + $0x370] sm:$0xff]
  %v141 = vld [vmem:[%s0 + $0x378] sm:$0xff]
  %v142 = vld [vmem:[%s0 + $0x380] sm:$0xff]
  %v143 = vld [vmem:[%s0 + $0x388] sm:$0xff]
  %v144 = vld [vmem:[%s0 + $0x390] sm:$0xff]
  %v145 = vld [vmem:[%s0 + $0x398] sm:$0xff]
  %v146 = vld [vmem:[%s0 + $0x3a0] sm:$0xff]
  %v147 = vld [vmem:[%s0 + $0x3a8] sm:$0xff]
  %v148 = vld [vmem:[%s0 + $0x3b0] sm:$0xff]
  %v149 = vld [vmem:[%s0 + $0x3b8] sm:$0xff]
  %v150 = vld [vmem:[%s0 + $0x3c0] sm:$0xff]
  %v151 = vld [vmem:[%s0 + $0x3c8] sm:$0xff]
  %v152 = vld [vmem:[%s0 + $0x3d0] sm:$0xff]
  %v153 = vld [vmem:[%s0 + $0x3d8] sm:$0xff]
  %v154 = vld [vmem:[%s0 + $0x3e0] sm:$0xff]
  %v155 = vld [vmem:[%s0 + $0x3e8] sm:$0xff]
  %v156 = vld [vmem:[%s0 + $0x3f0] sm:$0xff]
  %v157 = vld [vmem:[%s0 + $0x3f8] sm:$0xff]
  %v158 = vld [vmem:[%s2] sm:$0xff]
  %v159 = vld [vmem:[%s2 + $0x8] sm:$0xff]
  %v160 = vld [vmem:[%s2 + $0x10] sm:$0xff]
  %v161 = vld [vmem:[%s2 + $0x18] sm:$0xff]
  %163 = vset.pattern.permute.xlu0 0
  %164 = vperm.xlu0 %163, %v158
  %v165 = vpop.permute.xlu0 %164
  %168 = vset.pattern.permute.xlu0 0
  %169 = vperm.xlu0 %168, %v159
  %v170 = vpop.permute.xlu0 %169
  %173 = vset.pattern.permute.xlu0 0
  %174 = vperm.xlu0 %173, %v160
  %v175 = vpop.permute.xlu0 %174
  %178 = vset.pattern.permute.xlu0 0
  %179 = vperm.xlu0 %178, %v161
  %v180 = vpop.permute.xlu0 %179
  %v186 = vunpack.c.l.b16 %v26
  %v187 = vunpack.c.h.b16 %v26
  %v188 = vunpack.c.l.b16 %v27
  %v189 = vunpack.c.h.b16 %v27
  %v190 = vunpack.c.l.b16 %v28
  %v191 = vunpack.c.h.b16 %v28
  %v192 = vunpack.c.l.b16 %v29
  %v193 = vunpack.c.h.b16 %v29
  %v194 = vpack.c.b16 %v188, %v186
  %v195 = vpack.c.b16 %v189, %v187
  %v196 = vpack.c.b16 %v192, %v190
  %v197 = vpack.c.b16 %v193, %v191
  %v330 = vunpack.c.l.b16 %v30
  %v331 = vunpack.c.h.b16 %v30
  %v332 = vunpack.c.l.b16 %v31
  %v333 = vunpack.c.h.b16 %v31
  %v334 = vunpack.c.l.b16 %v32
  %v335 = vunpack.c.h.b16 %v32
  %v336 = vunpack.c.l.b16 %v33
  %v337 = vunpack.c.h.b16 %v33
  %v338 = vunpack.c.l.b16 %v34
  %v339 = vunpack.c.h.b16 %v34
  %v340 = vunpack.c.l.b16 %v35
  %v341 = vunpack.c.h.b16 %v35
  %v342 = vunpack.c.l.b16 %v36
  %v343 = vunpack.c.h.b16 %v36
  %v344 = vunpack.c.l.b16 %v37
  %v345 = vunpack.c.h.b16 %v37
  %v346 = vunpack.c.l.b16 %v38
  %v347 = vunpack.c.h.b16 %v38
  %v348 = vunpack.c.l.b16 %v39
  %v349 = vunpack.c.h.b16 %v39
  %v350 = vunpack.c.l.b16 %v40
  %v351 = vunpack.c.h.b16 %v40
  %v352 = vunpack.c.l.b16 %v41
  %v353 = vunpack.c.h.b16 %v41
  %v354 = vunpack.c.l.b16 %v42
  %v355 = vunpack.c.h.b16 %v42
  %v356 = vunpack.c.l.b16 %v43
  %v357 = vunpack.c.h.b16 %v43
  %v358 = vunpack.c.l.b16 %v44
  %v359 = vunpack.c.h.b16 %v44
  %v360 = vunpack.c.l.b16 %v45
  %v361 = vunpack.c.h.b16 %v45
  %v362 = vunpack.c.l.b16 %v46
  %v363 = vunpack.c.h.b16 %v46
  %v364 = vunpack.c.l.b16 %v47
  %v365 = vunpack.c.h.b16 %v47
  %v366 = vunpack.c.l.b16 %v48
  %v367 = vunpack.c.h.b16 %v48
  %v368 = vunpack.c.l.b16 %v49
  %v369 = vunpack.c.h.b16 %v49
  %v370 = vunpack.c.l.b16 %v50
  %v371 = vunpack.c.h.b16 %v50
  %v372 = vunpack.c.l.b16 %v51
  %v373 = vunpack.c.h.b16 %v51
  %v374 = vunpack.c.l.b16 %v52
  %v375 = vunpack.c.h.b16 %v52
  %v376 = vunpack.c.l.b16 %v53
  %v377 = vunpack.c.h.b16 %v53
  %v378 = vunpack.c.l.b16 %v54
  %v379 = vunpack.c.h.b16 %v54
  %v380 = vunpack.c.l.b16 %v55
  %v381 = vunpack.c.h.b16 %v55
  %v382 = vunpack.c.l.b16 %v56
  %v383 = vunpack.c.h.b16 %v56
  %v384 = vunpack.c.l.b16 %v57
  %v385 = vunpack.c.h.b16 %v57
  %v386 = vunpack.c.l.b16 %v58
  %v387 = vunpack.c.h.b16 %v58
  %v388 = vunpack.c.l.b16 %v59
  %v389 = vunpack.c.h.b16 %v59
  %v390 = vunpack.c.l.b16 %v60
  %v391 = vunpack.c.h.b16 %v60
  %v392 = vunpack.c.l.b16 %v61
  %v393 = vunpack.c.h.b16 %v61
  %v394 = vunpack.c.l.b16 %v62
  %v395 = vunpack.c.h.b16 %v62
  %v396 = vunpack.c.l.b16 %v63
  %v397 = vunpack.c.h.b16 %v63
  %v398 = vunpack.c.l.b16 %v64
  %v399 = vunpack.c.h.b16 %v64
  %v400 = vunpack.c.l.b16 %v65
  %v401 = vunpack.c.h.b16 %v65
  %v402 = vunpack.c.l.b16 %v66
  %v403 = vunpack.c.h.b16 %v66
  %v404 = vunpack.c.l.b16 %v67
  %v405 = vunpack.c.h.b16 %v67
  %v406 = vunpack.c.l.b16 %v68
  %v407 = vunpack.c.h.b16 %v68
  %v408 = vunpack.c.l.b16 %v69
  %v409 = vunpack.c.h.b16 %v69
  %v410 = vunpack.c.l.b16 %v70
  %v411 = vunpack.c.h.b16 %v70
  %v412 = vunpack.c.l.b16 %v71
  %v413 = vunpack.c.h.b16 %v71
  %v414 = vunpack.c.l.b16 %v72
  %v415 = vunpack.c.h.b16 %v72
  %v416 = vunpack.c.l.b16 %v73
  %v417 = vunpack.c.h.b16 %v73
  %v418 = vunpack.c.l.b16 %v74
  %v419 = vunpack.c.h.b16 %v74
  %v420 = vunpack.c.l.b16 %v75
  %v421 = vunpack.c.h.b16 %v75
  %v422 = vunpack.c.l.b16 %v76
  %v423 = vunpack.c.h.b16 %v76
  %v424 = vunpack.c.l.b16 %v77
  %v425 = vunpack.c.h.b16 %v77
  %v426 = vunpack.c.l.b16 %v78
  %v427 = vunpack.c.h.b16 %v78
  %v428 = vunpack.c.l.b16 %v79
  %v429 = vunpack.c.h.b16 %v79
  %v430 = vunpack.c.l.b16 %v80
  %v431 = vunpack.c.h.b16 %v80
  %v432 = vunpack.c.l.b16 %v81
  %v433 = vunpack.c.h.b16 %v81
  %v434 = vunpack.c.l.b16 %v82
  %v435 = vunpack.c.h.b16 %v82
  %v436 = vunpack.c.l.b16 %v83
  %v437 = vunpack.c.h.b16 %v83
  %v438 = vunpack.c.l.b16 %v84
  %v439 = vunpack.c.h.b16 %v84
  %v440 = vunpack.c.l.b16 %v85
  %v441 = vunpack.c.h.b16 %v85
  %v442 = vunpack.c.l.b16 %v86
  %v443 = vunpack.c.h.b16 %v86
  %v444 = vunpack.c.l.b16 %v87
  %v445 = vunpack.c.h.b16 %v87
  %v446 = vunpack.c.l.b16 %v88
  %v447 = vunpack.c.h.b16 %v88
  %v448 = vunpack.c.l.b16 %v89
  %v449 = vunpack.c.h.b16 %v89
  %v450 = vunpack.c.l.b16 %v90
  %v451 = vunpack.c.h.b16 %v90
  %v452 = vunpack.c.l.b16 %v91
  %v453 = vunpack.c.h.b16 %v91
  %v454 = vunpack.c.l.b16 %v92
  %v455 = vunpack.c.h.b16 %v92
  %v456 = vunpack.c.l.b16 %v93
  %v457 = vunpack.c.h.b16 %v93
  %v458 = vunpack.c.l.b16 %v94
  %v459 = vunpack.c.h.b16 %v94
  %v460 = vunpack.c.l.b16 %v95
  %v461 = vunpack.c.h.b16 %v95
  %v462 = vunpack.c.l.b16 %v96
  %v463 = vunpack.c.h.b16 %v96
  %v464 = vunpack.c.l.b16 %v97
  %v465 = vunpack.c.h.b16 %v97
  %v466 = vunpack.c.l.b16 %v98
  %v467 = vunpack.c.h.b16 %v98
  %v468 = vunpack.c.l.b16 %v99
  %v469 = vunpack.c.h.b16 %v99
  %v470 = vunpack.c.l.b16 %v100
  %v471 = vunpack.c.h.b16 %v100
  %v472 = vunpack.c.l.b16 %v101
  %v473 = vunpack.c.h.b16 %v101
  %v474 = vunpack.c.l.b16 %v102
  %v475 = vunpack.c.h.b16 %v102
  %v476 = vunpack.c.l.b16 %v103
  %v477 = vunpack.c.h.b16 %v103
  %v478 = vunpack.c.l.b16 %v104
  %v479 = vunpack.c.h.b16 %v104
  %v480 = vunpack.c.l.b16 %v105
  %v481 = vunpack.c.h.b16 %v105
  %v482 = vunpack.c.l.b16 %v106
  %v483 = vunpack.c.h.b16 %v106
  %v484 = vunpack.c.l.b16 %v107
  %v485 = vunpack.c.h.b16 %v107
  %v486 = vunpack.c.l.b16 %v108
  %v487 = vunpack.c.h.b16 %v108
  %v488 = vunpack.c.l.b16 %v109
  %v489 = vunpack.c.h.b16 %v109
  %v490 = vunpack.c.l.b16 %v110
  %v491 = vunpack.c.h.b16 %v110
  %v492 = vunpack.c.l.b16 %v111
  %v493 = vunpack.c.h.b16 %v111
  %v494 = vunpack.c.l.b16 %v112
  %v495 = vunpack.c.h.b16 %v112
  %v496 = vunpack.c.l.b16 %v113
  %v497 = vunpack.c.h.b16 %v113
  %v498 = vunpack.c.l.b16 %v114
  %v499 = vunpack.c.h.b16 %v114
  %v500 = vunpack.c.l.b16 %v115
  %v501 = vunpack.c.h.b16 %v115
  %v502 = vunpack.c.l.b16 %v116
  %v503 = vunpack.c.h.b16 %v116
  %v504 = vunpack.c.l.b16 %v117
  %v505 = vunpack.c.h.b16 %v117
  %v506 = vunpack.c.l.b16 %v118
  %v507 = vunpack.c.h.b16 %v118
  %v508 = vunpack.c.l.b16 %v119
  %v509 = vunpack.c.h.b16 %v119
  %v510 = vunpack.c.l.b16 %v120
  %v511 = vunpack.c.h.b16 %v120
  %v512 = vunpack.c.l.b16 %v121
  %v513 = vunpack.c.h.b16 %v121
  %v514 = vunpack.c.l.b16 %v122
  %v515 = vunpack.c.h.b16 %v122
  %v516 = vunpack.c.l.b16 %v123
  %v517 = vunpack.c.h.b16 %v123
  %v518 = vunpack.c.l.b16 %v124
  %v519 = vunpack.c.h.b16 %v124
  %v520 = vunpack.c.l.b16 %v125
  %v521 = vunpack.c.h.b16 %v125
  %v522 = vunpack.c.l.b16 %v126
  %v523 = vunpack.c.h.b16 %v126
  %v524 = vunpack.c.l.b16 %v127
  %v525 = vunpack.c.h.b16 %v127
  %v526 = vunpack.c.l.b16 %v128
  %v527 = vunpack.c.h.b16 %v128
  %v528 = vunpack.c.l.b16 %v129
  %v529 = vunpack.c.h.b16 %v129
  %v530 = vunpack.c.l.b16 %v130
  %v531 = vunpack.c.h.b16 %v130
  %v532 = vunpack.c.l.b16 %v131
  %v533 = vunpack.c.h.b16 %v131
  %v534 = vunpack.c.l.b16 %v132
  %v535 = vunpack.c.h.b16 %v132
  %v536 = vunpack.c.l.b16 %v133
  %v537 = vunpack.c.h.b16 %v133
  %v538 = vunpack.c.l.b16 %v134
  %v539 = vunpack.c.h.b16 %v134
  %v540 = vunpack.c.l.b16 %v135
  %v541 = vunpack.c.h.b16 %v135
  %v542 = vunpack.c.l.b16 %v136
  %v543 = vunpack.c.h.b16 %v136
  %v544 = vunpack.c.l.b16 %v137
  %v545 = vunpack.c.h.b16 %v137
  %v546 = vunpack.c.l.b16 %v138
  %v547 = vunpack.c.h.b16 %v138
  %v548 = vunpack.c.l.b16 %v139
  %v549 = vunpack.c.h.b16 %v139
  %v550 = vunpack.c.l.b16 %v140
  %v551 = vunpack.c.h.b16 %v140
  %v552 = vunpack.c.l.b16 %v141
  %v553 = vunpack.c.h.b16 %v141
  %v554 = vunpack.c.l.b16 %v142
  %v555 = vunpack.c.h.b16 %v142
  %v556 = vunpack.c.l.b16 %v143
  %v557 = vunpack.c.h.b16 %v143
  %v558 = vunpack.c.l.b16 %v144
  %v559 = vunpack.c.h.b16 %v144
  %v560 = vunpack.c.l.b16 %v145
  %v561 = vunpack.c.h.b16 %v145
  %v562 = vunpack.c.l.b16 %v146
  %v563 = vunpack.c.h.b16 %v146
  %v564 = vunpack.c.l.b16 %v147
  %v565 = vunpack.c.h.b16 %v147
  %v566 = vunpack.c.l.b16 %v148
  %v567 = vunpack.c.h.b16 %v148
  %v568 = vunpack.c.l.b16 %v149
  %v569 = vunpack.c.h.b16 %v149
  %v570 = vunpack.c.l.b16 %v150
  %v571 = vunpack.c.h.b16 %v150
  %v572 = vunpack.c.l.b16 %v151
  %v573 = vunpack.c.h.b16 %v151
  %v574 = vunpack.c.l.b16 %v152
  %v575 = vunpack.c.h.b16 %v152
  %v576 = vunpack.c.l.b16 %v153
  %v577 = vunpack.c.h.b16 %v153
  %v578 = vunpack.c.l.b16 %v154
  %v579 = vunpack.c.h.b16 %v154
  %v580 = vunpack.c.l.b16 %v155
  %v581 = vunpack.c.h.b16 %v155
  %v582 = vunpack.c.l.b16 %v156
  %v583 = vunpack.c.h.b16 %v156
  %v584 = vunpack.c.l.b16 %v157
  %v585 = vunpack.c.h.b16 %v157
  %v586 = vpack.c.b16 %v338, %v330
  %v587 = vpack.c.b16 %v339, %v331
  %v588 = vpack.c.b16 %v340, %v332
  %v589 = vpack.c.b16 %v341, %v333
  %v590 = vpack.c.b16 %v342, %v334
  %v591 = vpack.c.b16 %v343, %v335
  %v592 = vpack.c.b16 %v344, %v336
  %v593 = vpack.c.b16 %v345, %v337
  %v594 = vpack.c.b16 %v354, %v346
  %v595 = vpack.c.b16 %v355, %v347
  %v596 = vpack.c.b16 %v356, %v348
  %v597 = vpack.c.b16 %v357, %v349
  %v598 = vpack.c.b16 %v358, %v350
  %v599 = vpack.c.b16 %v359, %v351
  %v600 = vpack.c.b16 %v360, %v352
  %v601 = vpack.c.b16 %v361, %v353
  %v602 = vpack.c.b16 %v370, %v362
  %v603 = vpack.c.b16 %v371, %v363
  %v604 = vpack.c.b16 %v372, %v364
  %v605 = vpack.c.b16 %v373, %v365
  %v606 = vpack.c.b16 %v374, %v366
  %v607 = vpack.c.b16 %v375, %v367
  %v608 = vpack.c.b16 %v376, %v368
  %v609 = vpack.c.b16 %v377, %v369
  %v610 = vpack.c.b16 %v386, %v378
  %v611 = vpack.c.b16 %v387, %v379
  %v612 = vpack.c.b16 %v388, %v380
  %v613 = vpack.c.b16 %v389, %v381
  %v614 = vpack.c.b16 %v390, %v382
  %v615 = vpack.c.b16 %v391, %v383
  %v616 = vpack.c.b16 %v392, %v384
  %v617 = vpack.c.b16 %v393, %v385
  %v618 = vpack.c.b16 %v402, %v394
  %v619 = vpack.c.b16 %v403, %v395
  %v620 = vpack.c.b16 %v404, %v396
  %v621 = vpack.c.b16 %v405, %v397
  %v622 = vpack.c.b16 %v406, %v398
  %v623 = vpack.c.b16 %v407, %v399
  %v624 = vpack.c.b16 %v408, %v400
  %v625 = vpack.c.b16 %v409, %v401
  %v626 = vpack.c.b16 %v418, %v410
  %v627 = vpack.c.b16 %v419, %v411
  %v628 = vpack.c.b16 %v420, %v412
  %v629 = vpack.c.b16 %v421, %v413
  %v630 = vpack.c.b16 %v422, %v414
  %v631 = vpack.c.b16 %v423, %v415
  %v632 = vpack.c.b16 %v424, %v416
  %v633 = vpack.c.b16 %v425, %v417
  %v634 = vpack.c.b16 %v434, %v426
  %v635 = vpack.c.b16 %v435, %v427
  %v636 = vpack.c.b16 %v436, %v428
  %v637 = vpack.c.b16 %v437, %v429
  %v638 = vpack.c.b16 %v438, %v430
  %v639 = vpack.c.b16 %v439, %v431
  %v640 = vpack.c.b16 %v440, %v432
  %v641 = vpack.c.b16 %v441, %v433
  %v642 = vpack.c.b16 %v450, %v442
  %v643 = vpack.c.b16 %v451, %v443
  %v644 = vpack.c.b16 %v452, %v444
  %v645 = vpack.c.b16 %v453, %v445
  %v646 = vpack.c.b16 %v454, %v446
  %v647 = vpack.c.b16 %v455, %v447
  %v648 = vpack.c.b16 %v456, %v448
  %v649 = vpack.c.b16 %v457, %v449
  %v650 = vpack.c.b16 %v466, %v458
  %v651 = vpack.c.b16 %v467, %v459
  %v652 = vpack.c.b16 %v468, %v460
  %v653 = vpack.c.b16 %v469, %v461
  %v654 = vpack.c.b16 %v470, %v462
  %v655 = vpack.c.b16 %v471, %v463
  %v656 = vpack.c.b16 %v472, %v464
  %v657 = vpack.c.b16 %v473, %v465
  %v658 = vpack.c.b16 %v482, %v474
  %v659 = vpack.c.b16 %v483, %v475
  %v660 = vpack.c.b16 %v484, %v476
  %v661 = vpack.c.b16 %v485, %v477
  %v662 = vpack.c.b16 %v486, %v478
  %v663 = vpack.c.b16 %v487, %v479
  %v664 = vpack.c.b16 %v488, %v480
  %v665 = vpack.c.b16 %v489, %v481
  %v666 = vpack.c.b16 %v498, %v490
  %v667 = vpack.c.b16 %v499, %v491
  %v668 = vpack.c.b16 %v500, %v492
  %v669 = vpack.c.b16 %v501, %v493
  %v670 = vpack.c.b16 %v502, %v494
  %v671 = vpack.c.b16 %v503, %v495
  %v672 = vpack.c.b16 %v504, %v496
  %v673 = vpack.c.b16 %v505, %v497
  %v674 = vpack.c.b16 %v514, %v506
  %v675 = vpack.c.b16 %v515, %v507
  %v676 = vpack.c.b16 %v516, %v508
  %v677 = vpack.c.b16 %v517, %v509
  %v678 = vpack.c.b16 %v518, %v510
  %v679 = vpack.c.b16 %v519, %v511
  %v680 = vpack.c.b16 %v520, %v512
  %v681 = vpack.c.b16 %v521, %v513
  %v682 = vpack.c.b16 %v530, %v522
  %v683 = vpack.c.b16 %v531, %v523
  %v684 = vpack.c.b16 %v532, %v524
  %v685 = vpack.c.b16 %v533, %v525
  %v686 = vpack.c.b16 %v534, %v526
  %v687 = vpack.c.b16 %v535, %v527
  %v688 = vpack.c.b16 %v536, %v528
  %v689 = vpack.c.b16 %v537, %v529
  %v690 = vpack.c.b16 %v546, %v538
  %v691 = vpack.c.b16 %v547, %v539
  %v692 = vpack.c.b16 %v548, %v540
  %v693 = vpack.c.b16 %v549, %v541
  %v694 = vpack.c.b16 %v550, %v542
  %v695 = vpack.c.b16 %v551, %v543
  %v696 = vpack.c.b16 %v552, %v544
  %v697 = vpack.c.b16 %v553, %v545
  %v698 = vpack.c.b16 %v562, %v554
  %v699 = vpack.c.b16 %v563, %v555
  %v700 = vpack.c.b16 %v564, %v556
  %v701 = vpack.c.b16 %v565, %v557
  %v702 = vpack.c.b16 %v566, %v558
  %v703 = vpack.c.b16 %v567, %v559
  %v704 = vpack.c.b16 %v568, %v560
  %v705 = vpack.c.b16 %v569, %v561
  %v706 = vpack.c.b16 %v578, %v570
  %v707 = vpack.c.b16 %v579, %v571
  %v708 = vpack.c.b16 %v580, %v572
  %v709 = vpack.c.b16 %v581, %v573
  %v710 = vpack.c.b16 %v582, %v574
  %v711 = vpack.c.b16 %v583, %v575
  %v712 = vpack.c.b16 %v584, %v576
  %v713 = vpack.c.b16 %v585, %v577
  %842 = vmatpush.bf16.msra.mxu0 %v642
  %843 = vmatpush.bf16.msra.mxu0 %v634
  %844 = vmatpush.bf16.msra.mxu0 %v626
  %845 = vmatpush.bf16.msra.mxu0 %v618
  %846 = vmatpush.bf16.msra.mxu0 %v610
  %847 = vmatpush.bf16.msra.mxu0 %v602
  %848 = vmatpush.bf16.msra.mxu0 %v594
  %849 = vmatpush.bf16.msra.mxu0 %v586
  %850 = vmatmul.bf16.gmra.mxu0 %v194
  %v851 = vpop.f32.mrf.mxu0
  %v852 = vadd.f32 %v165, %v851
  %v853 = vpop.f32.mrf.mxu0
  %v854 = vadd.f32 %v170, %v853
  %855 = vmatmul.bf16.gmra.mxu0 %v196
  %v856 = vpop.f32.mrf.mxu0
  %v857 = vadd.f32 %v175, %v856
  %v858 = vpop.f32.mrf.mxu0
  %v859 = vadd.f32 %v180, %v858
  %860 = vdwg.mxu0
  %861 = vmatpush.bf16.msra.mxu0 %v706
  %862 = vmatpush.bf16.msra.mxu0 %v698
  %863 = vmatpush.bf16.msra.mxu0 %v690
  %864 = vmatpush.bf16.msra.mxu0 %v682
  %865 = vmatpush.bf16.msra.mxu0 %v674
  %866 = vmatpush.bf16.msra.mxu0 %v666
  %867 = vmatpush.bf16.msra.mxu0 %v658
  %868 = vmatpush.bf16.msra.mxu0 %v650
  %869 = vmatmul.bf16.gmra.mxu0 %v195
  %v870 = vpop.f32.mrf.mxu0
  %v871 = vadd.f32 %v852, %v870
  %v872 = vpop.f32.mrf.mxu0
  %v873 = vadd.f32 %v854, %v872
  %874 = vmatmul.bf16.gmra.mxu0 %v197
  %v875 = vpop.f32.mrf.mxu0
  %v876 = vadd.f32 %v857, %v875
  %v877 = vpop.f32.mrf.mxu0
  %v878 = vadd.f32 %v859, %v877
  %879 = vdwg.mxu0
  %880 = vmatpush.bf16.msra.mxu0 %v643
  %881 = vmatpush.bf16.msra.mxu0 %v635
  %882 = vmatpush.bf16.msra.mxu0 %v627
  %883 = vmatpush.bf16.msra.mxu0 %v619
  %884 = vmatpush.bf16.msra.mxu0 %v611
  %885 = vmatpush.bf16.msra.mxu0 %v603
  %886 = vmatpush.bf16.msra.mxu0 %v595
  %887 = vmatpush.bf16.msra.mxu0 %v587
  %888 = vmatmul.bf16.gmra.mxu0 %v194
  %v889 = vpop.f32.mrf.mxu0
  %v890 = vadd.f32 %v165, %v889
  %v891 = vpop.f32.mrf.mxu0
  %v892 = vadd.f32 %v170, %v891
  %893 = vmatmul.bf16.gmra.mxu0 %v196
  %v894 = vpop.f32.mrf.mxu0
  %v895 = vadd.f32 %v175, %v894
  %v896 = vpop.f32.mrf.mxu0
  %v897 = vadd.f32 %v180, %v896
  %898 = vdwg.mxu0
  %899 = vmatpush.bf16.msra.mxu0 %v707
  %900 = vmatpush.bf16.msra.mxu0 %v699
  %901 = vmatpush.bf16.msra.mxu0 %v691
  %902 = vmatpush.bf16.msra.mxu0 %v683
  %903 = vmatpush.bf16.msra.mxu0 %v675
  %904 = vmatpush.bf16.msra.mxu0 %v667
  %905 = vmatpush.bf16.msra.mxu0 %v659
  %906 = vmatpush.bf16.msra.mxu0 %v651
  %907 = vmatmul.bf16.gmra.mxu0 %v195
  %v908 = vpop.f32.mrf.mxu0
  %v909 = vadd.f32 %v890, %v908
  %v910 = vpop.f32.mrf.mxu0
  %v911 = vadd.f32 %v892, %v910
  %912 = vmatmul.bf16.gmra.mxu0 %v197
  %v913 = vpop.f32.mrf.mxu0
  %v914 = vadd.f32 %v895, %v913
  %v915 = vpop.f32.mrf.mxu0
  %v916 = vadd.f32 %v897, %v915
  %917 = vdwg.mxu0
  %918 = vmatpush.bf16.msra.mxu0 %v644
  %919 = vmatpush.bf16.msra.mxu0 %v636
  %920 = vmatpush.bf16.msra.mxu0 %v628
  %921 = vmatpush.bf16.msra.mxu0 %v620
  %922 = vmatpush.bf16.msra.mxu0 %v612
  %923 = vmatpush.bf16.msra.mxu0 %v604
  %924 = vmatpush.bf16.msra.mxu0 %v596
  %925 = vmatpush.bf16.msra.mxu0 %v588
  %926 = vmatmul.bf16.gmra.mxu0 %v194
  %v927 = vpop.f32.mrf.mxu0
  %v928 = vadd.f32 %v165, %v927
  %v929 = vpop.f32.mrf.mxu0
  %v930 = vadd.f32 %v170, %v929
  %931 = vmatmul.bf16.gmra.mxu0 %v196
  %v932 = vpop.f32.mrf.mxu0
  %v933 = vadd.f32 %v175, %v932
  %v934 = vpop.f32.mrf.mxu0
  %v935 = vadd.f32 %v180, %v934
  %936 = vdwg.mxu0
  %937 = vmatpush.bf16.msra.mxu0 %v708
  %938 = vmatpush.bf16.msra.mxu0 %v700
  %939 = vmatpush.bf16.msra.mxu0 %v692
  %940 = vmatpush.bf16.msra.mxu0 %v684
  %941 = vmatpush.bf16.msra.mxu0 %v676
  %942 = vmatpush.bf16.msra.mxu0 %v668
  %943 = vmatpush.bf16.msra.mxu0 %v660
  %944 = vmatpush.bf16.msra.mxu0 %v652
  %945 = vmatmul.bf16.gmra.mxu0 %v195
  %v946 = vpop.f32.mrf.mxu0
  %v947 = vadd.f32 %v928, %v946
  %v948 = vpop.f32.mrf.mxu0
  %v949 = vadd.f32 %v930, %v948
  %950 = vmatmul.bf16.gmra.mxu0 %v197
  %v951 = vpop.f32.mrf.mxu0
  %v952 = vadd.f32 %v933, %v951
  %v953 = vpop.f32.mrf.mxu0
  %v954 = vadd.f32 %v935, %v953
  %955 = vdwg.mxu0
  %956 = vmatpush.bf16.msra.mxu0 %v645
  %957 = vmatpush.bf16.msra.mxu0 %v637
  %958 = vmatpush.bf16.msra.mxu0 %v629
  %959 = vmatpush.bf16.msra.mxu0 %v621
  %960 = vmatpush.bf16.msra.mxu0 %v613
  %961 = vmatpush.bf16.msra.mxu0 %v605
  %962 = vmatpush.bf16.msra.mxu0 %v597
  %963 = vmatpush.bf16.msra.mxu0 %v589
  %964 = vmatmul.bf16.gmra.mxu0 %v194
  %v965 = vpop.f32.mrf.mxu0
  %v966 = vadd.f32 %v165, %v965
  %v967 = vpop.f32.mrf.mxu0
  %v968 = vadd.f32 %v170, %v967
  %969 = vmatmul.bf16.gmra.mxu0 %v196
  %v970 = vpop.f32.mrf.mxu0
  %v971 = vadd.f32 %v175, %v970
  %v972 = vpop.f32.mrf.mxu0
  %v973 = vadd.f32 %v180, %v972
  %974 = vdwg.mxu0
  %975 = vmatpush.bf16.msra.mxu0 %v709
  %976 = vmatpush.bf16.msra.mxu0 %v701
  %977 = vmatpush.bf16.msra.mxu0 %v693
  %978 = vmatpush.bf16.msra.mxu0 %v685
  %979 = vmatpush.bf16.msra.mxu0 %v677
  %980 = vmatpush.bf16.msra.mxu0 %v669
  %981 = vmatpush.bf16.msra.mxu0 %v661
  %982 = vmatpush.bf16.msra.mxu0 %v653
  %983 = vmatmul.bf16.gmra.mxu0 %v195
  %v984 = vpop.f32.mrf.mxu0
  %v985 = vadd.f32 %v966, %v984
  %v986 = vpop.f32.mrf.mxu0
  %v987 = vadd.f32 %v968, %v986
  %988 = vmatmul.bf16.gmra.mxu0 %v197
  %v989 = vpop.f32.mrf.mxu0
  %v990 = vadd.f32 %v971, %v989
  %v991 = vpop.f32.mrf.mxu0
  %v992 = vadd.f32 %v973, %v991
  %993 = vdwg.mxu0
  %994 = vmatpush.bf16.msra.mxu0 %v646
  %995 = vmatpush.bf16.msra.mxu0 %v638
  %996 = vmatpush.bf16.msra.mxu0 %v630
  %997 = vmatpush.bf16.msra.mxu0 %v622
  %998 = vmatpush.bf16.msra.mxu0 %v614
  %999 = vmatpush.bf16.msra.mxu0 %v606
  %1000 = vmatpush.bf16.msra.mxu0 %v598
  %1001 = vmatpush.bf16.msra.mxu0 %v590
  %1002 = vmatmul.bf16.gmra.mxu0 %v194
  %v1003 = vpop.f32.mrf.mxu0
  %v1004 = vadd.f32 %v165, %v1003
  %v1005 = vpop.f32.mrf.mxu0
  %v1006 = vadd.f32 %v170, %v1005
  %1007 = vmatmul.bf16.gmra.mxu0 %v196
  %v1008 = vpop.f32.mrf.mxu0
  %v1009 = vadd.f32 %v175, %v1008
  %v1010 = vpop.f32.mrf.mxu0
  %v1011 = vadd.f32 %v180, %v1010
  %1012 = vdwg.mxu0
  %1013 = vmatpush.bf16.msra.mxu0 %v710
  %1014 = vmatpush.bf16.msra.mxu0 %v702
  %1015 = vmatpush.bf16.msra.mxu0 %v694
  %1016 = vmatpush.bf16.msra.mxu0 %v686
  %1017 = vmatpush.bf16.msra.mxu0 %v678
  %1018 = vmatpush.bf16.msra.mxu0 %v670
  %1019 = vmatpush.bf16.msra.mxu0 %v662
  %1020 = vmatpush.bf16.msra.mxu0 %v654
  %1021 = vmatmul.bf16.gmra.mxu0 %v195
  %v1022 = vpop.f32.mrf.mxu0
  %v1023 = vadd.f32 %v1004, %v1022
  %v1024 = vpop.f32.mrf.mxu0
  %v1025 = vadd.f32 %v1006, %v1024
  %1026 = vmatmul.bf16.gmra.mxu0 %v197
  %v1027 = vpop.f32.mrf.mxu0
  %v1028 = vadd.f32 %v1009, %v1027
  %v1029 = vpop.f32.mrf.mxu0
  %v1030 = vadd.f32 %v1011, %v1029
  %1031 = vdwg.mxu0
  %1032 = vmatpush.bf16.msra.mxu0 %v647
  %1033 = vmatpush.bf16.msra.mxu0 %v639
  %1034 = vmatpush.bf16.msra.mxu0 %v631
  %1035 = vmatpush.bf16.msra.mxu0 %v623
  %1036 = vmatpush.bf16.msra.mxu0 %v615
  %1037 = vmatpush.bf16.msra.mxu0 %v607
  %1038 = vmatpush.bf16.msra.mxu0 %v599
  %1039 = vmatpush.bf16.msra.mxu0 %v591
  %1040 = vmatmul.bf16.gmra.mxu0 %v194
  %v1041 = vpop.f32.mrf.mxu0
  %v1042 = vadd.f32 %v165, %v1041
  %v1043 = vpop.f32.mrf.mxu0
  %v1044 = vadd.f32 %v170, %v1043
  %1045 = vmatmul.bf16.gmra.mxu0 %v196
  %v1046 = vpop.f32.mrf.mxu0
  %v1047 = vadd.f32 %v175, %v1046
  %v1048 = vpop.f32.mrf.mxu0
  %v1049 = vadd.f32 %v180, %v1048
  %1050 = vdwg.mxu0
  %1051 = vmatpush.bf16.msra.mxu0 %v711
  %1052 = vmatpush.bf16.msra.mxu0 %v703
  %1053 = vmatpush.bf16.msra.mxu0 %v695
  %1054 = vmatpush.bf16.msra.mxu0 %v687
  %1055 = vmatpush.bf16.msra.mxu0 %v679
  %1056 = vmatpush.bf16.msra.mxu0 %v671
  %1057 = vmatpush.bf16.msra.mxu0 %v663
  %1058 = vmatpush.bf16.msra.mxu0 %v655
  %1059 = vmatmul.bf16.gmra.mxu0 %v195
  %v1060 = vpop.f32.mrf.mxu0
  %v1061 = vadd.f32 %v1042, %v1060
  %v1062 = vpop.f32.mrf.mxu0
  %v1063 = vadd.f32 %v1044, %v1062
  %1064 = vmatmul.bf16.gmra.mxu0 %v197
  %v1065 = vpop.f32.mrf.mxu0
  %v1066 = vadd.f32 %v1047, %v1065
  %v1067 = vpop.f32.mrf.mxu0
  %v1068 = vadd.f32 %v1049, %v1067
  %1069 = vdwg.mxu0
  %1070 = vmatpush.bf16.msra.mxu0 %v648
  %1071 = vmatpush.bf16.msra.mxu0 %v640
  %1072 = vmatpush.bf16.msra.mxu0 %v632
  %1073 = vmatpush.bf16.msra.mxu0 %v624
  %1074 = vmatpush.bf16.msra.mxu0 %v616
  %1075 = vmatpush.bf16.msra.mxu0 %v608
  %1076 = vmatpush.bf16.msra.mxu0 %v600
  %1077 = vmatpush.bf16.msra.mxu0 %v592
  %1078 = vmatmul.bf16.gmra.mxu0 %v194
  %v1079 = vpop.f32.mrf.mxu0
  %v1080 = vadd.f32 %v165, %v1079
  %v1081 = vpop.f32.mrf.mxu0
  %v1082 = vadd.f32 %v170, %v1081
  %1083 = vmatmul.bf16.gmra.mxu0 %v196
  %v1084 = vpop.f32.mrf.mxu0
  %v1085 = vadd.f32 %v175, %v1084
  %v1086 = vpop.f32.mrf.mxu0
  %v1087 = vadd.f32 %v180, %v1086
  %1088 = vdwg.mxu0
  %1089 = vmatpush.bf16.msra.mxu0 %v712
  %1090 = vmatpush.bf16.msra.mxu0 %v704
  %1091 = vmatpush.bf16.msra.mxu0 %v696
  %1092 = vmatpush.bf16.msra.mxu0 %v688
  %1093 = vmatpush.bf16.msra.mxu0 %v680
  %1094 = vmatpush.bf16.msra.mxu0 %v672
  %1095 = vmatpush.bf16.msra.mxu0 %v664
  %1096 = vmatpush.bf16.msra.mxu0 %v656
  %1097 = vmatmul.bf16.gmra.mxu0 %v195
  %v1098 = vpop.f32.mrf.mxu0
  %v1099 = vadd.f32 %v1080, %v1098
  %v1100 = vpop.f32.mrf.mxu0
  %v1101 = vadd.f32 %v1082, %v1100
  %1102 = vmatmul.bf16.gmra.mxu0 %v197
  %v1103 = vpop.f32.mrf.mxu0
  %v1104 = vadd.f32 %v1085, %v1103
  %v1105 = vpop.f32.mrf.mxu0
  %v1106 = vadd.f32 %v1087, %v1105
  %1107 = vdwg.mxu0
  %1108 = vmatpush.bf16.msra.mxu0 %v649
  %1109 = vmatpush.bf16.msra.mxu0 %v641
  %1110 = vmatpush.bf16.msra.mxu0 %v633
  %1111 = vmatpush.bf16.msra.mxu0 %v625
  %1112 = vmatpush.bf16.msra.mxu0 %v617
  %1113 = vmatpush.bf16.msra.mxu0 %v609
  %1114 = vmatpush.bf16.msra.mxu0 %v601
  %1115 = vmatpush.bf16.msra.mxu0 %v593
  %1116 = vmatmul.bf16.gmra.mxu0 %v194
  %v1117 = vpop.f32.mrf.mxu0
  %v1118 = vadd.f32 %v165, %v1117
  %v1119 = vpop.f32.mrf.mxu0
  %v1120 = vadd.f32 %v170, %v1119
  %1121 = vmatmul.bf16.gmra.mxu0 %v196
  %v1122 = vpop.f32.mrf.mxu0
  %v1123 = vadd.f32 %v175, %v1122
  %v1124 = vpop.f32.mrf.mxu0
  %v1125 = vadd.f32 %v180, %v1124
  %1126 = vdwg.mxu0
  %1127 = vmatpush.bf16.msra.mxu0 %v713
  %1128 = vmatpush.bf16.msra.mxu0 %v705
  %1129 = vmatpush.bf16.msra.mxu0 %v697
  %1130 = vmatpush.bf16.msra.mxu0 %v689
  %1131 = vmatpush.bf16.msra.mxu0 %v681
  %1132 = vmatpush.bf16.msra.mxu0 %v673
  %1133 = vmatpush.bf16.msra.mxu0 %v665
  %1134 = vmatpush.bf16.msra.mxu0 %v657
  %1135 = vmatmul.bf16.gmra.mxu0 %v195
  %v1136 = vpop.f32.mrf.mxu0
  %v1137 = vadd.f32 %v1118, %v1136
  %v1138 = vpop.f32.mrf.mxu0
  %v1139 = vadd.f32 %v1120, %v1138
  %1140 = vmatmul.bf16.gmra.mxu0 %v197
  %v1141 = vpop.f32.mrf.mxu0
  %v1142 = vadd.f32 %v1123, %v1141
  %v1143 = vpop.f32.mrf.mxu0
  %v1144 = vadd.f32 %v1125, %v1143
  %1145 = vdwg.mxu0
  %v1146 = vmax.f32 %v871, 0.0
  %v1147 = vmax.f32 %v909, 0.0
  %v1148 = vmax.f32 %v947, 0.0
  %v1149 = vmax.f32 %v985, 0.0
  %v1150 = vmax.f32 %v1023, 0.0
  %v1151 = vmax.f32 %v1061, 0.0
  %v1152 = vmax.f32 %v1099, 0.0
  %v1153 = vmax.f32 %v1137, 0.0
  %v1154 = vmax.f32 %v873, 0.0
  %v1155 = vmax.f32 %v911, 0.0
  %v1156 = vmax.f32 %v949, 0.0
  %v1157 = vmax.f32 %v987, 0.0
  %v1158 = vmax.f32 %v1025, 0.0
  %v1159 = vmax.f32 %v1063, 0.0
  %v1160 = vmax.f32 %v1101, 0.0
  %v1161 = vmax.f32 %v1139, 0.0
  %v1162 = vmax.f32 %v876, 0.0
  %v1163 = vmax.f32 %v914, 0.0
  %v1164 = vmax.f32 %v952, 0.0
  %v1165 = vmax.f32 %v990, 0.0
  %v1166 = vmax.f32 %v1028, 0.0
  %v1167 = vmax.f32 %v1066, 0.0
  %v1168 = vmax.f32 %v1104, 0.0
  %v1169 = vmax.f32 %v1142, 0.0
  %v1170 = vmax.f32 %v878, 0.0
  %v1171 = vmax.f32 %v916, 0.0
  %v1172 = vmax.f32 %v954, 0.0
  %v1173 = vmax.f32 %v992, 0.0
  %v1174 = vmax.f32 %v1030, 0.0
  %v1175 = vmax.f32 %v1068, 0.0
  %v1176 = vmax.f32 %v1106, 0.0
  %v1177 = vmax.f32 %v1144, 0.0
  %v1182 = vperm.slane %v1146, 0
  %v1183 = vperm.slane %v1146, 1
  %v1184 = vperm.slane %v1146, 2
  %v1185 = vperm.slane %v1146, 3
  %v1186 = vperm.slane %v1146, 4
  %v1187 = vperm.slane %v1146, 5
  %v1188 = vperm.slane %v1146, 6
  %v1189 = vperm.slane %v1146, 7
  %v1190 = vperm.slane %v1154, 0
  %v1191 = vperm.slane %v1154, 1
  %v1192 = vperm.slane %v1154, 2
  %v1193 = vperm.slane %v1154, 3
  %v1194 = vperm.slane %v1154, 4
  %v1195 = vperm.slane %v1154, 5
  %v1196 = vperm.slane %v1154, 6
  %v1197 = vperm.slane %v1154, 7
  %v1198 = vperm.slane %v1162, 0
  %v1199 = vperm.slane %v1162, 1
  %v1200 = vperm.slane %v1162, 2
  %v1201 = vperm.slane %v1162, 3
  %v1202 = vperm.slane %v1162, 4
  %v1203 = vperm.slane %v1162, 5
  %v1204 = vperm.slane %v1162, 6
  %v1205 = vperm.slane %v1162, 7
  %v1206 = vperm.slane %v1170, 0
  %v1207 = vperm.slane %v1170, 1
  %v1208 = vperm.slane %v1170, 2
  %v1209 = vperm.slane %v1170, 3
  %v1210 = vperm.slane %v1170, 4
  %v1211 = vperm.slane %v1170, 5
  %v1212 = vperm.slane %v1170, 6
  %v1213 = vperm.slane %v1170, 7
  %v1250 = vperm.slane %v1147, 0
  %v1251 = vperm.slane %v1147, 1
  %v1252 = vperm.slane %v1147, 2
  %v1253 = vperm.slane %v1147, 3
  %v1254 = vperm.slane %v1147, 4
  %v1255 = vperm.slane %v1147, 5
  %v1256 = vperm.slane %v1147, 6
  %v1257 = vperm.slane %v1147, 7
  %v1258 = vperm.slane %v1155, 0
  %v1259 = vperm.slane %v1155, 1
  %v1260 = vperm.slane %v1155, 2
  %v1261 = vperm.slane %v1155, 3
  %v1262 = vperm.slane %v1155, 4
  %v1263 = vperm.slane %v1155, 5
  %v1264 = vperm.slane %v1155, 6
  %v1265 = vperm.slane %v1155, 7
  %v1266 = vperm.slane %v1163, 0
  %v1267 = vperm.slane %v1163, 1
  %v1268 = vperm.slane %v1163, 2
  %v1269 = vperm.slane %v1163, 3
  %v1270 = vperm.slane %v1163, 4
  %v1271 = vperm.slane %v1163, 5
  %v1272 = vperm.slane %v1163, 6
  %v1273 = vperm.slane %v1163, 7
  %v1274 = vperm.slane %v1171, 0
  %v1275 = vperm.slane %v1171, 1
  %v1276 = vperm.slane %v1171, 2
  %v1277 = vperm.slane %v1171, 3
  %v1278 = vperm.slane %v1171, 4
  %v1279 = vperm.slane %v1171, 5
  %v1280 = vperm.slane %v1171, 6
  %v1281 = vperm.slane %v1171, 7
  %v1318 = vperm.slane %v1148, 0
  %v1319 = vperm.slane %v1148, 1
  %v1320 = vperm.slane %v1148, 2
  %v1321 = vperm.slane %v1148, 3
  %v1322 = vperm.slane %v1148, 4
  %v1323 = vperm.slane %v1148, 5
  %v1324 = vperm.slane %v1148, 6
  %v1325 = vperm.slane %v1148, 7
  %v1326 = vperm.slane %v1156, 0
  %v1327 = vperm.slane %v1156, 1
  %v1328 = vperm.slane %v1156, 2
  %v1329 = vperm.slane %v1156, 3
  %v1330 = vperm.slane %v1156, 4
  %v1331 = vperm.slane %v1156, 5
  %v1332 = vperm.slane %v1156, 6
  %v1333 = vperm.slane %v1156, 7
  %v1334 = vperm.slane %v1164, 0
  %v1335 = vperm.slane %v1164, 1
  %v1336 = vperm.slane %v1164, 2
  %v1337 = vperm.slane %v1164, 3
  %v1338 = vperm.slane %v1164, 4
  %v1339 = vperm.slane %v1164, 5
  %v1340 = vperm.slane %v1164, 6
  %v1341 = vperm.slane %v1164, 7
  %v1342 = vperm.slane %v1172, 0
  %v1343 = vperm.slane %v1172, 1
  %v1344 = vperm.slane %v1172, 2
  %v1345 = vperm.slane %v1172, 3
  %v1346 = vperm.slane %v1172, 4
  %v1347 = vperm.slane %v1172, 5
  %v1348 = vperm.slane %v1172, 6
  %v1349 = vperm.slane %v1172, 7
  %v1386 = vperm.slane %v1149, 0
  %v1387 = vperm.slane %v1149, 1
  %v1388 = vperm.slane %v1149, 2
  %v1389 = vperm.slane %v1149, 3
  %v1390 = vperm.slane %v1149, 4
  %v1391 = vperm.slane %v1149, 5
  %v1392 = vperm.slane %v1149, 6
  %v1393 = vperm.slane %v1149, 7
  %v1394 = vperm.slane %v1157, 0
  %v1395 = vperm.slane %v1157, 1
  %v1396 = vperm.slane %v1157, 2
  %v1397 = vperm.slane %v1157, 3
  %v1398 = vperm.slane %v1157, 4
  %v1399 = vperm.slane %v1157, 5
  %v1400 = vperm.slane %v1157, 6
  %v1401 = vperm.slane %v1157, 7
  %v1402 = vperm.slane %v1165, 0
  %v1403 = vperm.slane %v1165, 1
  %v1404 = vperm.slane %v1165, 2
  %v1405 = vperm.slane %v1165, 3
  %v1406 = vperm.slane %v1165, 4
  %v1407 = vperm.slane %v1165, 5
  %v1408 = vperm.slane %v1165, 6
  %v1409 = vperm.slane %v1165, 7
  %v1410 = vperm.slane %v1173, 0
  %v1411 = vperm.slane %v1173, 1
  %v1412 = vperm.slane %v1173, 2
  %v1413 = vperm.slane %v1173, 3
  %v1414 = vperm.slane %v1173, 4
  %v1415 = vperm.slane %v1173, 5
  %v1416 = vperm.slane %v1173, 6
  %v1417 = vperm.slane %v1173, 7
  %v1454 = vperm.slane %v1150, 0
  %v1455 = vperm.slane %v1150, 1
  %v1456 = vperm.slane %v1150, 2
  %v1457 = vperm.slane %v1150, 3
  %v1458 = vperm.slane %v1150, 4
  %v1459 = vperm.slane %v1150, 5
  %v1460 = vperm.slane %v1150, 6
  %v1461 = vperm.slane %v1150, 7
  %v1462 = vperm.slane %v1158, 0
  %v1463 = vperm.slane %v1158, 1
  %v1464 = vperm.slane %v1158, 2
  %v1465 = vperm.slane %v1158, 3
  %v1466 = vperm.slane %v1158, 4
  %v1467 = vperm.slane %v1158, 5
  %v1468 = vperm.slane %v1158, 6
  %v1469 = vperm.slane %v1158, 7
  %v1470 = vperm.slane %v1166, 0
  %v1471 = vperm.slane %v1166, 1
  %v1472 = vperm.slane %v1166, 2
  %v1473 = vperm.slane %v1166, 3
  %v1474 = vperm.slane %v1166, 4
  %v1475 = vperm.slane %v1166, 5
  %v1476 = vperm.slane %v1166, 6
  %v1477 = vperm.slane %v1166, 7
  %v1478 = vperm.slane %v1174, 0
  %v1479 = vperm.slane %v1174, 1
  %v1480 = vperm.slane %v1174, 2
  %v1481 = vperm.slane %v1174, 3
  %v1482 = vperm.slane %v1174, 4
  %v1483 = vperm.slane %v1174, 5
  %v1484 = vperm.slane %v1174, 6
  %v1485 = vperm.slane %v1174, 7
  %v1522 = vperm.slane %v1151, 0
  %v1523 = vperm.slane %v1151, 1
  %v1524 = vperm.slane %v1151, 2
  %v1525 = vperm.slane %v1151, 3
  %v1526 = vperm.slane %v1151, 4
  %v1527 = vperm.slane %v1151, 5
  %v1528 = vperm.slane %v1151, 6
  %v1529 = vperm.slane %v1151, 7
  %v1530 = vperm.slane %v1159, 0
  %v1531 = vperm.slane %v1159, 1
  %v1532 = vperm.slane %v1159, 2
  %v1533 = vperm.slane %v1159, 3
  %v1534 = vperm.slane %v1159, 4
  %v1535 = vperm.slane %v1159, 5
  %v1536 = vperm.slane %v1159, 6
  %v1537 = vperm.slane %v1159, 7
  %v1538 = vperm.slane %v1167, 0
  %v1539 = vperm.slane %v1167, 1
  %v1540 = vperm.slane %v1167, 2
  %v1541 = vperm.slane %v1167, 3
  %v1542 = vperm.slane %v1167, 4
  %v1543 = vperm.slane %v1167, 5
  %v1544 = vperm.slane %v1167, 6
  %v1545 = vperm.slane %v1167, 7
  %v1546 = vperm.slane %v1175, 0
  %v1547 = vperm.slane %v1175, 1
  %v1548 = vperm.slane %v1175, 2
  %v1549 = vperm.slane %v1175, 3
  %v1550 = vperm.slane %v1175, 4
  %v1551 = vperm.slane %v1175, 5
  %v1552 = vperm.slane %v1175, 6
  %v1553 = vperm.slane %v1175, 7
  %v1590 = vperm.slane %v1152, 0
  %v1591 = vperm.slane %v1152, 1
  %v1592 = vperm.slane %v1152, 2
  %v1593 = vperm.slane %v1152, 3
  %v1594 = vperm.slane %v1152, 4
  %v1595 = vperm.slane %v1152, 5
  %v1596 = vperm.slane %v1152, 6
  %v1597 = vperm.slane %v1152, 7
  %v1598 = vperm.slane %v1160, 0
  %v1599 = vperm.slane %v1160, 1
  %v1600 = vperm.slane %v1160, 2
  %v1601 = vperm.slane %v1160, 3
  %v1602 = vperm.slane %v1160, 4
  %v1603 = vperm.slane %v1160, 5
  %v1604 = vperm.slane %v1160, 6
  %v1605 = vperm.slane %v1160, 7
  %v1606 = vperm.slane %v1168, 0
  %v1607 = vperm.slane %v1168, 1
  %v1608 = vperm.slane %v1168, 2
  %v1609 = vperm.slane %v1168, 3
  %v1610 = vperm.slane %v1168, 4
  %v1611 = vperm.slane %v1168, 5
  %v1612 = vperm.slane %v1168, 6
  %v1613 = vperm.slane %v1168, 7
  %v1614 = vperm.slane %v1176, 0
  %v1615 = vperm.slane %v1176, 1
  %v1616 = vperm.slane %v1176, 2
  %v1617 = vperm.slane %v1176, 3
  %v1618 = vperm.slane %v1176, 4
  %v1619 = vperm.slane %v1176, 5
  %v1620 = vperm.slane %v1176, 6
  %v1621 = vperm.slane %v1176, 7
  %v1658 = vperm.slane %v1153, 0
  %v1659 = vperm.slane %v1153, 1
  %v1660 = vperm.slane %v1153, 2
  %v1661 = vperm.slane %v1153, 3
  %v1662 = vperm.slane %v1153, 4
  %v1663 = vperm.slane %v1153, 5
  %v1664 = vperm.slane %v1153, 6
  %v1665 = vperm.slane %v1153, 7
  %v1666 = vperm.slane %v1161, 0
  %v1667 = vperm.slane %v1161, 1
  %v1668 = vperm.slane %v1161, 2
  %v1669 = vperm.slane %v1161, 3
  %v1670 = vperm.slane %v1161, 4
  %v1671 = vperm.slane %v1161, 5
  %v1672 = vperm.slane %v1161, 6
  %v1673 = vperm.slane %v1161, 7
  %v1674 = vperm.slane %v1169, 0
  %v1675 = vperm.slane %v1169, 1
  %v1676 = vperm.slane %v1169, 2
  %v1677 = vperm.slane %v1169, 3
  %v1678 = vperm.slane %v1169, 4
  %v1679 = vperm.slane %v1169, 5
  %v1680 = vperm.slane %v1169, 6
  %v1681 = vperm.slane %v1169, 7
  %v1682 = vperm.slane %v1177, 0
  %v1683 = vperm.slane %v1177, 1
  %v1684 = vperm.slane %v1177, 2
  %v1685 = vperm.slane %v1177, 3
  %v1686 = vperm.slane %v1177, 4
  %v1687 = vperm.slane %v1177, 5
  %v1688 = vperm.slane %v1177, 6
  %v1689 = vperm.slane %v1177, 7
  %vm1722 = vcmask 1040384
  %v1723 = vsel %vm1722, %v1182, %v1250
  %v1724 = vsel %vm1722, %v1183, %v1251
  %v1725 = vsel %vm1722, %v1184, %v1252
  %v1726 = vsel %vm1722, %v1185, %v1253
  %v1727 = vsel %vm1722, %v1186, %v1254
  %v1728 = vsel %vm1722, %v1187, %v1255
  %v1729 = vsel %vm1722, %v1188, %v1256
  %v1730 = vsel %vm1722, %v1189, %v1257
  %v1731 = vsel %vm1722, %v1190, %v1258
  %v1732 = vsel %vm1722, %v1191, %v1259
  %v1733 = vsel %vm1722, %v1192, %v1260
  %v1734 = vsel %vm1722, %v1193, %v1261
  %v1735 = vsel %vm1722, %v1194, %v1262
  %v1736 = vsel %vm1722, %v1195, %v1263
  %v1737 = vsel %vm1722, %v1196, %v1264
  %v1738 = vsel %vm1722, %v1197, %v1265
  %v1739 = vsel %vm1722, %v1198, %v1266
  %v1740 = vsel %vm1722, %v1199, %v1267
  %v1741 = vsel %vm1722, %v1200, %v1268
  %v1742 = vsel %vm1722, %v1201, %v1269
  %v1743 = vsel %vm1722, %v1202, %v1270
  %v1744 = vsel %vm1722, %v1203, %v1271
  %v1745 = vsel %vm1722, %v1204, %v1272
  %v1746 = vsel %vm1722, %v1205, %v1273
  %v1747 = vsel %vm1722, %v1206, %v1274
  %v1748 = vsel %vm1722, %v1207, %v1275
  %v1749 = vsel %vm1722, %v1208, %v1276
  %v1750 = vsel %vm1722, %v1209, %v1277
  %v1751 = vsel %vm1722, %v1210, %v1278
  %v1752 = vsel %vm1722, %v1211, %v1279
  %v1753 = vsel %vm1722, %v1212, %v1280
  %v1754 = vsel %vm1722, %v1213, %v1281
  %vm1755 = vcmask 1041408
  %v1756 = vsel %vm1755, %v1723, %v1318
  %v1757 = vsel %vm1755, %v1724, %v1319
  %v1758 = vsel %vm1755, %v1725, %v1320
  %v1759 = vsel %vm1755, %v1726, %v1321
  %v1760 = vsel %vm1755, %v1727, %v1322
  %v1761 = vsel %vm1755, %v1728, %v1323
  %v1762 = vsel %vm1755, %v1729, %v1324
  %v1763 = vsel %vm1755, %v1730, %v1325
  %v1764 = vsel %vm1755, %v1731, %v1326
  %v1765 = vsel %vm1755, %v1732, %v1327
  %v1766 = vsel %vm1755, %v1733, %v1328
  %v1767 = vsel %vm1755, %v1734, %v1329
  %v1768 = vsel %vm1755, %v1735, %v1330
  %v1769 = vsel %vm1755, %v1736, %v1331
  %v1770 = vsel %vm1755, %v1737, %v1332
  %v1771 = vsel %vm1755, %v1738, %v1333
  %v1772 = vsel %vm1755, %v1739, %v1334
  %v1773 = vsel %vm1755, %v1740, %v1335
  %v1774 = vsel %vm1755, %v1741, %v1336
  %v1775 = vsel %vm1755, %v1742, %v1337
  %v1776 = vsel %vm1755, %v1743, %v1338
  %v1777 = vsel %vm1755, %v1744, %v1339
  %v1778 = vsel %vm1755, %v1745, %v1340
  %v1779 = vsel %vm1755, %v1746, %v1341
  %v1780 = vsel %vm1755, %v1747, %v1342
  %v1781 = vsel %vm1755, %v1748, %v1343
  %v1782 = vsel %vm1755, %v1749, %v1344
  %v1783 = vsel %vm1755, %v1750, %v1345
  %v1784 = vsel %vm1755, %v1751, %v1346
  %v1785 = vsel %vm1755, %v1752, %v1347
  %v1786 = vsel %vm1755, %v1753, %v1348
  %v1787 = vsel %vm1755, %v1754, %v1349
  %vm1788 = vcmask 1042432
  %v1789 = vsel %vm1788, %v1756, %v1386
  %v1790 = vsel %vm1788, %v1757, %v1387
  %v1791 = vsel %vm1788, %v1758, %v1388
  %v1792 = vsel %vm1788, %v1759, %v1389
  %v1793 = vsel %vm1788, %v1760, %v1390
  %v1794 = vsel %vm1788, %v1761, %v1391
  %v1795 = vsel %vm1788, %v1762, %v1392
  %v1796 = vsel %vm1788, %v1763, %v1393
  %v1797 = vsel %vm1788, %v1764, %v1394
  %v1798 = vsel %vm1788, %v1765, %v1395
  %v1799 = vsel %vm1788, %v1766, %v1396
  %v1800 = vsel %vm1788, %v1767, %v1397
  %v1801 = vsel %vm1788, %v1768, %v1398
  %v1802 = vsel %vm1788, %v1769, %v1399
  %v1803 = vsel %vm1788, %v1770, %v1400
  %v1804 = vsel %vm1788, %v1771, %v1401
  %v1805 = vsel %vm1788, %v1772, %v1402
  %v1806 = vsel %vm1788, %v1773, %v1403
  %v1807 = vsel %vm1788, %v1774, %v1404
  %v1808 = vsel %vm1788, %v1775, %v1405
  %v1809 = vsel %vm1788, %v1776, %v1406
  %v1810 = vsel %vm1788, %v1777, %v1407
  %v1811 = vsel %vm1788, %v1778, %v1408
  %v1812 = vsel %vm1788, %v1779, %v1409
  %v1813 = vsel %vm1788, %v1780, %v1410
  %v1814 = vsel %vm1788, %v1781, %v1411
  %v1815 = vsel %vm1788, %v1782, %v1412
  %v1816 = vsel %vm1788, %v1783, %v1413
  %v1817 = vsel %vm1788, %v1784, %v1414
  %v1818 = vsel %vm1788, %v1785, %v1415
  %v1819 = vsel %vm1788, %v1786, %v1416
  %v1820 = vsel %vm1788, %v1787, %v1417
  %vm1821 = vcmask 1043456
  %v1822 = vsel %vm1821, %v1789, %v1454
  %v1823 = vsel %vm1821, %v1790, %v1455
  %v1824 = vsel %vm1821, %v1791, %v1456
  %v1825 = vsel %vm1821, %v1792, %v1457
  %v1826 = vsel %vm1821, %v1793, %v1458
  %v1827 = vsel %vm1821, %v1794, %v1459
  %v1828 = vsel %vm1821, %v1795, %v1460
  %v1829 = vsel %vm1821, %v1796, %v1461
  %v1830 = vsel %vm1821, %v1797, %v1462
  %v1831 = vsel %vm1821, %v1798, %v1463
  %v1832 = vsel %vm1821, %v1799, %v1464
  %v1833 = vsel %vm1821, %v1800, %v1465
  %v1834 = vsel %vm1821, %v1801, %v1466
  %v1835 = vsel %vm1821, %v1802, %v1467
  %v1836 = vsel %vm1821, %v1803, %v1468
  %v1837 = vsel %vm1821, %v1804, %v1469
  %v1838 = vsel %vm1821, %v1805, %v1470
  %v1839 = vsel %vm1821, %v1806, %v1471
  %v1840 = vsel %vm1821, %v1807, %v1472
  %v1841 = vsel %vm1821, %v1808, %v1473
  %v1842 = vsel %vm1821, %v1809, %v1474
  %v1843 = vsel %vm1821, %v1810, %v1475
  %v1844 = vsel %vm1821, %v1811, %v1476
  %v1845 = vsel %vm1821, %v1812, %v1477
  %v1846 = vsel %vm1821, %v1813, %v1478
  %v1847 = vsel %vm1821, %v1814, %v1479
  %v1848 = vsel %vm1821, %v1815, %v1480
  %v1849 = vsel %vm1821, %v1816, %v1481
  %v1850 = vsel %vm1821, %v1817, %v1482
  %v1851 = vsel %vm1821, %v1818, %v1483
  %v1852 = vsel %vm1821, %v1819, %v1484
  %v1853 = vsel %vm1821, %v1820, %v1485
  %vm1854 = vcmask 1044480
  %v1855 = vsel %vm1854, %v1822, %v1522
  %v1856 = vsel %vm1854, %v1823, %v1523
  %v1857 = vsel %vm1854, %v1824, %v1524
  %v1858 = vsel %vm1854, %v1825, %v1525
  %v1859 = vsel %vm1854, %v1826, %v1526
  %v1860 = vsel %vm1854, %v1827, %v1527
  %v1861 = vsel %vm1854, %v1828, %v1528
  %v1862 = vsel %vm1854, %v1829, %v1529
  %v1863 = vsel %vm1854, %v1830, %v1530
  %v1864 = vsel %vm1854, %v1831, %v1531
  %v1865 = vsel %vm1854, %v1832, %v1532
  %v1866 = vsel %vm1854, %v1833, %v1533
  %v1867 = vsel %vm1854, %v1834, %v1534
  %v1868 = vsel %vm1854, %v1835, %v1535
  %v1869 = vsel %vm1854, %v1836, %v1536
  %v1870 = vsel %vm1854, %v1837, %v1537
  %v1871 = vsel %vm1854, %v1838, %v1538
  %v1872 = vsel %vm1854, %v1839, %v1539
  %v1873 = vsel %vm1854, %v1840, %v1540
  %v1874 = vsel %vm1854, %v1841, %v1541
  %v1875 = vsel %vm1854, %v1842, %v1542
  %v1876 = vsel %vm1854, %v1843, %v1543
  %v1877 = vsel %vm1854, %v1844, %v1544
  %v1878 = vsel %vm1854, %v1845, %v1545
  %v1879 = vsel %vm1854, %v1846, %v1546
  %v1880 = vsel %vm1854, %v1847, %v1547
  %v1881 = vsel %vm1854, %v1848, %v1548
  %v1882 = vsel %vm1854, %v1849, %v1549
  %v1883 = vsel %vm1854, %v1850, %v1550
  %v1884 = vsel %vm1854, %v1851, %v1551
  %v1885 = vsel %vm1854, %v1852, %v1552
  %v1886 = vsel %vm1854, %v1853, %v1553
  %vm1887 = vcmask 1045504
  %v1888 = vsel %vm1887, %v1855, %v1590
  %v1889 = vsel %vm1887, %v1856, %v1591
  %v1890 = vsel %vm1887, %v1857, %v1592
  %v1891 = vsel %vm1887, %v1858, %v1593
  %v1892 = vsel %vm1887, %v1859, %v1594
  %v1893 = vsel %vm1887, %v1860, %v1595
  %v1894 = vsel %vm1887, %v1861, %v1596
  %v1895 = vsel %vm1887, %v1862, %v1597
  %v1896 = vsel %vm1887, %v1863, %v1598
  %v1897 = vsel %vm1887, %v1864, %v1599
  %v1898 = vsel %vm1887, %v1865, %v1600
  %v1899 = vsel %vm1887, %v1866, %v1601
  %v1900 = vsel %vm1887, %v1867, %v1602
  %v1901 = vsel %vm1887, %v1868, %v1603
  %v1902 = vsel %vm1887, %v1869, %v1604
  %v1903 = vsel %vm1887, %v1870, %v1605
  %v1904 = vsel %vm1887, %v1871, %v1606
  %v1905 = vsel %vm1887, %v1872, %v1607
  %v1906 = vsel %vm1887, %v1873, %v1608
  %v1907 = vsel %vm1887, %v1874, %v1609
  %v1908 = vsel %vm1887, %v1875, %v1610
  %v1909 = vsel %vm1887, %v1876, %v1611
  %v1910 = vsel %vm1887, %v1877, %v1612
  %v1911 = vsel %vm1887, %v1878, %v1613
  %v1912 = vsel %vm1887, %v1879, %v1614
  %v1913 = vsel %vm1887, %v1880, %v1615
  %v1914 = vsel %vm1887, %v1881, %v1616
  %v1915 = vsel %vm1887, %v1882, %v1617
  %v1916 = vsel %vm1887, %v1883, %v1618
  %v1917 = vsel %vm1887, %v1884, %v1619
  %v1918 = vsel %vm1887, %v1885, %v1620
  %v1919 = vsel %vm1887, %v1886, %v1621
  %vm1920 = vcmask 1046528
  %v1921 = vsel %vm1920, %v1888, %v1658
  %v1922 = vsel %vm1920, %v1889, %v1659
  %v1923 = vsel %vm1920, %v1890, %v1660
  %v1924 = vsel %vm1920, %v1891, %v1661
  %v1925 = vsel %vm1920, %v1892, %v1662
  %v1926 = vsel %vm1920, %v1893, %v1663
  %v1927 = vsel %vm1920, %v1894, %v1664
  %v1928 = vsel %vm1920, %v1895, %v1665
  %v1929 = vsel %vm1920, %v1896, %v1666
  %v1930 = vsel %vm1920, %v1897, %v1667
  %v1931 = vsel %vm1920, %v1898, %v1668
  %v1932 = vsel %vm1920, %v1899, %v1669
  %v1933 = vsel %vm1920, %v1900, %v1670
  %v1934 = vsel %vm1920, %v1901, %v1671
  %v1935 = vsel %vm1920, %v1902, %v1672
  %v1936 = vsel %vm1920, %v1903, %v1673
  %v1937 = vsel %vm1920, %v1904, %v1674
  %v1938 = vsel %vm1920, %v1905, %v1675
  %v1939 = vsel %vm1920, %v1906, %v1676
  %v1940 = vsel %vm1920, %v1907, %v1677
  %v1941 = vsel %vm1920, %v1908, %v1678
  %v1942 = vsel %vm1920, %v1909, %v1679
  %v1943 = vsel %vm1920, %v1910, %v1680
  %v1944 = vsel %vm1920, %v1911, %v1681
  %v1945 = vsel %vm1920, %v1912, %v1682
  %v1946 = vsel %vm1920, %v1913, %v1683
  %v1947 = vsel %vm1920, %v1914, %v1684
  %v1948 = vsel %vm1920, %v1915, %v1685
  %v1949 = vsel %vm1920, %v1916, %v1686
  %v1950 = vsel %vm1920, %v1917, %v1687
  %v1951 = vsel %vm1920, %v1918, %v1688
  %v1952 = vsel %vm1920, %v1919, %v1689
  %v1953 = vpack.c.bf16 %v1921, %v1921
  %v1954 = vpack.c.bf16 %v1922, %v1922
  %v1955 = vpack.c.bf16 %v1923, %v1923
  %v1956 = vpack.c.bf16 %v1924, %v1924
  %v1957 = vpack.c.bf16 %v1925, %v1925
  %v1958 = vpack.c.bf16 %v1926, %v1926
  %v1959 = vpack.c.bf16 %v1927, %v1927
  %v1960 = vpack.c.bf16 %v1928, %v1928
  %v1961 = vpack.c.bf16 %v1929, %v1929
  %v1962 = vpack.c.bf16 %v1930, %v1930
  %v1963 = vpack.c.bf16 %v1931, %v1931
  %v1964 = vpack.c.bf16 %v1932, %v1932
  %v1965 = vpack.c.bf16 %v1933, %v1933
  %v1966 = vpack.c.bf16 %v1934, %v1934
  %v1967 = vpack.c.bf16 %v1935, %v1935
  %v1968 = vpack.c.bf16 %v1936, %v1936
  %v1969 = vpack.c.bf16 %v1937, %v1937
  %v1970 = vpack.c.bf16 %v1938, %v1938
  %v1971 = vpack.c.bf16 %v1939, %v1939
  %v1972 = vpack.c.bf16 %v1940, %v1940
  %v1973 = vpack.c.bf16 %v1941, %v1941
  %v1974 = vpack.c.bf16 %v1942, %v1942
  %v1975 = vpack.c.bf16 %v1943, %v1943
  %v1976 = vpack.c.bf16 %v1944, %v1944
  %v1977 = vpack.c.bf16 %v1945, %v1945
  %v1978 = vpack.c.bf16 %v1946, %v1946
  %v1979 = vpack.c.bf16 %v1947, %v1947
  %v1980 = vpack.c.bf16 %v1948, %v1948
  %v1981 = vpack.c.bf16 %v1949, %v1949
  %v1982 = vpack.c.bf16 %v1950, %v1950
  %v1983 = vpack.c.bf16 %v1951, %v1951
  %v1984 = vpack.c.bf16 %v1952, %v1952
  %v1985 = vld [vmem:[%s3] sm:$0xff]
  %v1986 = vld [vmem:[%s3 + $0x8] sm:$0xff]
  %v1987 = vld [vmem:[%s3 + $0x10] sm:$0xff]
  %v1988 = vld [vmem:[%s3 + $0x18] sm:$0xff]
  %v1989 = vld [vmem:[%s3 + $0x20] sm:$0xff]
  %v1990 = vld [vmem:[%s3 + $0x28] sm:$0xff]
  %v1991 = vld [vmem:[%s3 + $0x30] sm:$0xff]
  %v1992 = vld [vmem:[%s3 + $0x38] sm:$0xff]
  %v1993 = vld [vmem:[%s3 + $0x40] sm:$0xff]
  %v1994 = vld [vmem:[%s3 + $0x48] sm:$0xff]
  %v1995 = vld [vmem:[%s3 + $0x50] sm:$0xff]
  %v1996 = vld [vmem:[%s3 + $0x58] sm:$0xff]
  %v1997 = vld [vmem:[%s3 + $0x60] sm:$0xff]
  %v1998 = vld [vmem:[%s3 + $0x68] sm:$0xff]
  %v1999 = vld [vmem:[%s3 + $0x70] sm:$0xff]
  %v2000 = vld [vmem:[%s3 + $0x78] sm:$0xff]
  %v2001 = vld [vmem:[%s3 + $0x80] sm:$0xff]
  %v2002 = vld [vmem:[%s3 + $0x88] sm:$0xff]
  %v2003 = vld [vmem:[%s3 + $0x90] sm:$0xff]
  %v2004 = vld [vmem:[%s3 + $0x98] sm:$0xff]
  %v2005 = vld [vmem:[%s3 + $0xa0] sm:$0xff]
  %v2006 = vld [vmem:[%s3 + $0xa8] sm:$0xff]
  %v2007 = vld [vmem:[%s3 + $0xb0] sm:$0xff]
  %v2008 = vld [vmem:[%s3 + $0xb8] sm:$0xff]
  %v2009 = vld [vmem:[%s3 + $0xc0] sm:$0xff]
  %v2010 = vld [vmem:[%s3 + $0xc8] sm:$0xff]
  %v2011 = vld [vmem:[%s3 + $0xd0] sm:$0xff]
  %v2012 = vld [vmem:[%s3 + $0xd8] sm:$0xff]
  %v2013 = vld [vmem:[%s3 + $0xe0] sm:$0xff]
  %v2014 = vld [vmem:[%s3 + $0xe8] sm:$0xff]
  %v2015 = vld [vmem:[%s3 + $0xf0] sm:$0xff]
  %v2016 = vld [vmem:[%s3 + $0xf8] sm:$0xff]
  %v2017 = vld [vmem:[%s3 + $0x100] sm:$0xff]
  %v2018 = vld [vmem:[%s3 + $0x108] sm:$0xff]
  %v2019 = vld [vmem:[%s3 + $0x110] sm:$0xff]
  %v2020 = vld [vmem:[%s3 + $0x118] sm:$0xff]
  %v2021 = vld [vmem:[%s3 + $0x120] sm:$0xff]
  %v2022 = vld [vmem:[%s3 + $0x128] sm:$0xff]
  %v2023 = vld [vmem:[%s3 + $0x130] sm:$0xff]
  %v2024 = vld [vmem:[%s3 + $0x138] sm:$0xff]
  %v2025 = vld [vmem:[%s3 + $0x140] sm:$0xff]
  %v2026 = vld [vmem:[%s3 + $0x148] sm:$0xff]
  %v2027 = vld [vmem:[%s3 + $0x150] sm:$0xff]
  %v2028 = vld [vmem:[%s3 + $0x158] sm:$0xff]
  %v2029 = vld [vmem:[%s3 + $0x160] sm:$0xff]
  %v2030 = vld [vmem:[%s3 + $0x168] sm:$0xff]
  %v2031 = vld [vmem:[%s3 + $0x170] sm:$0xff]
  %v2032 = vld [vmem:[%s3 + $0x178] sm:$0xff]
  %v2033 = vld [vmem:[%s3 + $0x180] sm:$0xff]
  %v2034 = vld [vmem:[%s3 + $0x188] sm:$0xff]
  %v2035 = vld [vmem:[%s3 + $0x190] sm:$0xff]
  %v2036 = vld [vmem:[%s3 + $0x198] sm:$0xff]
  %v2037 = vld [vmem:[%s3 + $0x1a0] sm:$0xff]
  %v2038 = vld [vmem:[%s3 + $0x1a8] sm:$0xff]
  %v2039 = vld [vmem:[%s3 + $0x1b0] sm:$0xff]
  %v2040 = vld [vmem:[%s3 + $0x1b8] sm:$0xff]
  %v2041 = vld [vmem:[%s3 + $0x1c0] sm:$0xff]
  %v2042 = vld [vmem:[%s3 + $0x1c8] sm:$0xff]
  %v2043 = vld [vmem:[%s3 + $0x1d0] sm:$0xff]
  %v2044 = vld [vmem:[%s3 + $0x1d8] sm:$0xff]
  %v2045 = vld [vmem:[%s3 + $0x1e0] sm:$0xff]
  %v2046 = vld [vmem:[%s3 + $0x1e8] sm:$0xff]
  %v2047 = vld [vmem:[%s3 + $0x1f0] sm:$0xff]
  %v2048 = vld [vmem:[%s3 + $0x1f8] sm:$0xff]
  %v2049 = vld [vmem:[%s3 + $0x200] sm:$0xff]
  %v2050 = vld [vmem:[%s3 + $0x208] sm:$0xff]
  %v2051 = vld [vmem:[%s3 + $0x210] sm:$0xff]
  %v2052 = vld [vmem:[%s3 + $0x218] sm:$0xff]
  %v2053 = vld [vmem:[%s3 + $0x220] sm:$0xff]
  %v2054 = vld [vmem:[%s3 + $0x228] sm:$0xff]
  %v2055 = vld [vmem:[%s3 + $0x230] sm:$0xff]
  %v2056 = vld [vmem:[%s3 + $0x238] sm:$0xff]
  %v2057 = vld [vmem:[%s3 + $0x240] sm:$0xff]
  %v2058 = vld [vmem:[%s3 + $0x248] sm:$0xff]
  %v2059 = vld [vmem:[%s3 + $0x250] sm:$0xff]
  %v2060 = vld [vmem:[%s3 + $0x258] sm:$0xff]
  %v2061 = vld [vmem:[%s3 + $0x260] sm:$0xff]
  %v2062 = vld [vmem:[%s3 + $0x268] sm:$0xff]
  %v2063 = vld [vmem:[%s3 + $0x270] sm:$0xff]
  %v2064 = vld [vmem:[%s3 + $0x278] sm:$0xff]
  %v2065 = vld [vmem:[%s3 + $0x280] sm:$0xff]
  %v2066 = vld [vmem:[%s3 + $0x288] sm:$0xff]
  %v2067 = vld [vmem:[%s3 + $0x290] sm:$0xff]
  %v2068 = vld [vmem:[%s3 + $0x298] sm:$0xff]
  %v2069 = vld [vmem:[%s3 + $0x2a0] sm:$0xff]
  %v2070 = vld [vmem:[%s3 + $0x2a8] sm:$0xff]
  %v2071 = vld [vmem:[%s3 + $0x2b0] sm:$0xff]
  %v2072 = vld [vmem:[%s3 + $0x2b8] sm:$0xff]
  %v2073 = vld [vmem:[%s3 + $0x2c0] sm:$0xff]
  %v2074 = vld [vmem:[%s3 + $0x2c8] sm:$0xff]
  %v2075 = vld [vmem:[%s3 + $0x2d0] sm:$0xff]
  %v2076 = vld [vmem:[%s3 + $0x2d8] sm:$0xff]
  %v2077 = vld [vmem:[%s3 + $0x2e0] sm:$0xff]
  %v2078 = vld [vmem:[%s3 + $0x2e8] sm:$0xff]
  %v2079 = vld [vmem:[%s3 + $0x2f0] sm:$0xff]
  %v2080 = vld [vmem:[%s3 + $0x2f8] sm:$0xff]
  %v2081 = vld [vmem:[%s3 + $0x300] sm:$0xff]
  %v2082 = vld [vmem:[%s3 + $0x308] sm:$0xff]
  %v2083 = vld [vmem:[%s3 + $0x310] sm:$0xff]
  %v2084 = vld [vmem:[%s3 + $0x318] sm:$0xff]
  %v2085 = vld [vmem:[%s3 + $0x320] sm:$0xff]
  %v2086 = vld [vmem:[%s3 + $0x328] sm:$0xff]
  %v2087 = vld [vmem:[%s3 + $0x330] sm:$0xff]
  %v2088 = vld [vmem:[%s3 + $0x338] sm:$0xff]
  %v2089 = vld [vmem:[%s3 + $0x340] sm:$0xff]
  %v2090 = vld [vmem:[%s3 + $0x348] sm:$0xff]
  %v2091 = vld [vmem:[%s3 + $0x350] sm:$0xff]
  %v2092 = vld [vmem:[%s3 + $0x358] sm:$0xff]
  %v2093 = vld [vmem:[%s3 + $0x360] sm:$0xff]
  %v2094 = vld [vmem:[%s3 + $0x368] sm:$0xff]
  %v2095 = vld [vmem:[%s3 + $0x370] sm:$0xff]
  %v2096 = vld [vmem:[%s3 + $0x378] sm:$0xff]
  %v2097 = vld [vmem:[%s3 + $0x380] sm:$0xff]
  %v2098 = vld [vmem:[%s3 + $0x388] sm:$0xff]
  %v2099 = vld [vmem:[%s3 + $0x390] sm:$0xff]
  %v2100 = vld [vmem:[%s3 + $0x398] sm:$0xff]
  %v2101 = vld [vmem:[%s3 + $0x3a0] sm:$0xff]
  %v2102 = vld [vmem:[%s3 + $0x3a8] sm:$0xff]
  %v2103 = vld [vmem:[%s3 + $0x3b0] sm:$0xff]
  %v2104 = vld [vmem:[%s3 + $0x3b8] sm:$0xff]
  %v2105 = vld [vmem:[%s3 + $0x3c0] sm:$0xff]
  %v2106 = vld [vmem:[%s3 + $0x3c8] sm:$0xff]
  %v2107 = vld [vmem:[%s3 + $0x3d0] sm:$0xff]
  %v2108 = vld [vmem:[%s3 + $0x3d8] sm:$0xff]
  %v2109 = vld [vmem:[%s3 + $0x3e0] sm:$0xff]
  %v2110 = vld [vmem:[%s3 + $0x3e8] sm:$0xff]
  %v2111 = vld [vmem:[%s3 + $0x3f0] sm:$0xff]
  %v2112 = vld [vmem:[%s3 + $0x3f8] sm:$0xff]
  %v2113 = vld [vmem:[%s3 + $0x400] sm:$0xff]
  %v2114 = vld [vmem:[%s3 + $0x408] sm:$0xff]
  %v2115 = vld [vmem:[%s3 + $0x410] sm:$0xff]
  %v2116 = vld [vmem:[%s3 + $0x418] sm:$0xff]
  %v2117 = vld [vmem:[%s3 + $0x420] sm:$0xff]
  %v2118 = vld [vmem:[%s3 + $0x428] sm:$0xff]
  %v2119 = vld [vmem:[%s3 + $0x430] sm:$0xff]
  %v2120 = vld [vmem:[%s3 + $0x438] sm:$0xff]
  %v2121 = vld [vmem:[%s3 + $0x440] sm:$0xff]
  %v2122 = vld [vmem:[%s3 + $0x448] sm:$0xff]
  %v2123 = vld [vmem:[%s3 + $0x450] sm:$0xff]
  %v2124 = vld [vmem:[%s3 + $0x458] sm:$0xff]
  %v2125 = vld [vmem:[%s3 + $0x460] sm:$0xff]
  %v2126 = vld [vmem:[%s3 + $0x468] sm:$0xff]
  %v2127 = vld [vmem:[%s3 + $0x470] sm:$0xff]
  %v2128 = vld [vmem:[%s3 + $0x478] sm:$0xff]
  %v2129 = vld [vmem:[%s3 + $0x480] sm:$0xff]
  %v2130 = vld [vmem:[%s3 + $0x488] sm:$0xff]
  %v2131 = vld [vmem:[%s3 + $0x490] sm:$0xff]
  %v2132 = vld [vmem:[%s3 + $0x498] sm:$0xff]
  %v2133 = vld [vmem:[%s3 + $0x4a0] sm:$0xff]
  %v2134 = vld [vmem:[%s3 + $0x4a8] sm:$0xff]
  %v2135 = vld [vmem:[%s3 + $0x4b0] sm:$0xff]
  %v2136 = vld [vmem:[%s3 + $0x4b8] sm:$0xff]
  %v2137 = vld [vmem:[%s3 + $0x4c0] sm:$0xff]
  %v2138 = vld [vmem:[%s3 + $0x4c8] sm:$0xff]
  %v2139 = vld [vmem:[%s3 + $0x4d0] sm:$0xff]
  %v2140 = vld [vmem:[%s3 + $0x4d8] sm:$0xff]
  %v2141 = vld [vmem:[%s3 + $0x4e0] sm:$0xff]
  %v2142 = vld [vmem:[%s3 + $0x4e8] sm:$0xff]
  %v2143 = vld [vmem:[%s3 + $0x4f0] sm:$0xff]
  %v2144 = vld [vmem:[%s3 + $0x4f8] sm:$0xff]
  %v2145 = vld [vmem:[%s3 + $0x500] sm:$0xff]
  %v2146 = vld [vmem:[%s3 + $0x508] sm:$0xff]
  %v2147 = vld [vmem:[%s3 + $0x510] sm:$0xff]
  %v2148 = vld [vmem:[%s3 + $0x518] sm:$0xff]
  %v2149 = vld [vmem:[%s3 + $0x520] sm:$0xff]
  %v2150 = vld [vmem:[%s3 + $0x528] sm:$0xff]
  %v2151 = vld [vmem:[%s3 + $0x530] sm:$0xff]
  %v2152 = vld [vmem:[%s3 + $0x538] sm:$0xff]
  %v2153 = vld [vmem:[%s3 + $0x540] sm:$0xff]
  %v2154 = vld [vmem:[%s3 + $0x548] sm:$0xff]
  %v2155 = vld [vmem:[%s3 + $0x550] sm:$0xff]
  %v2156 = vld [vmem:[%s3 + $0x558] sm:$0xff]
  %v2157 = vld [vmem:[%s3 + $0x560] sm:$0xff]
  %v2158 = vld [vmem:[%s3 + $0x568] sm:$0xff]
  %v2159 = vld [vmem:[%s3 + $0x570] sm:$0xff]
  %v2160 = vld [vmem:[%s3 + $0x578] sm:$0xff]
  %v2161 = vld [vmem:[%s3 + $0x580] sm:$0xff]
  %v2162 = vld [vmem:[%s3 + $0x588] sm:$0xff]
  %v2163 = vld [vmem:[%s3 + $0x590] sm:$0xff]
  %v2164 = vld [vmem:[%s3 + $0x598] sm:$0xff]
  %v2165 = vld [vmem:[%s3 + $0x5a0] sm:$0xff]
  %v2166 = vld [vmem:[%s3 + $0x5a8] sm:$0xff]
  %v2167 = vld [vmem:[%s3 + $0x5b0] sm:$0xff]
  %v2168 = vld [vmem:[%s3 + $0x5b8] sm:$0xff]
  %v2169 = vld [vmem:[%s3 + $0x5c0] sm:$0xff]
  %v2170 = vld [vmem:[%s3 + $0x5c8] sm:$0xff]
  %v2171 = vld [vmem:[%s3 + $0x5d0] sm:$0xff]
  %v2172 = vld [vmem:[%s3 + $0x5d8] sm:$0xff]
  %v2173 = vld [vmem:[%s3 + $0x5e0] sm:$0xff]
  %v2174 = vld [vmem:[%s3 + $0x5e8] sm:$0xff]
  %v2175 = vld [vmem:[%s3 + $0x5f0] sm:$0xff]
  %v2176 = vld [vmem:[%s3 + $0x5f8] sm:$0xff]
  %v2177 = vld [vmem:[%s3 + $0x600] sm:$0xff]
  %v2178 = vld [vmem:[%s3 + $0x608] sm:$0xff]
  %v2179 = vld [vmem:[%s3 + $0x610] sm:$0xff]
  %v2180 = vld [vmem:[%s3 + $0x618] sm:$0xff]
  %v2181 = vld [vmem:[%s3 + $0x620] sm:$0xff]
  %v2182 = vld [vmem:[%s3 + $0x628] sm:$0xff]
  %v2183 = vld [vmem:[%s3 + $0x630] sm:$0xff]
  %v2184 = vld [vmem:[%s3 + $0x638] sm:$0xff]
  %v2185 = vld [vmem:[%s3 + $0x640] sm:$0xff]
  %v2186 = vld [vmem:[%s3 + $0x648] sm:$0xff]
  %v2187 = vld [vmem:[%s3 + $0x650] sm:$0xff]
  %v2188 = vld [vmem:[%s3 + $0x658] sm:$0xff]
  %v2189 = vld [vmem:[%s3 + $0x660] sm:$0xff]
  %v2190 = vld [vmem:[%s3 + $0x668] sm:$0xff]
  %v2191 = vld [vmem:[%s3 + $0x670] sm:$0xff]
  %v2192 = vld [vmem:[%s3 + $0x678] sm:$0xff]
  %v2193 = vld [vmem:[%s3 + $0x680] sm:$0xff]
  %v2194 = vld [vmem:[%s3 + $0x688] sm:$0xff]
  %v2195 = vld [vmem:[%s3 + $0x690] sm:$0xff]
  %v2196 = vld [vmem:[%s3 + $0x698] sm:$0xff]
  %v2197 = vld [vmem:[%s3 + $0x6a0] sm:$0xff]
  %v2198 = vld [vmem:[%s3 + $0x6a8] sm:$0xff]
  %v2199 = vld [vmem:[%s3 + $0x6b0] sm:$0xff]
  %v2200 = vld [vmem:[%s3 + $0x6b8] sm:$0xff]
  %v2201 = vld [vmem:[%s3 + $0x6c0] sm:$0xff]
  %v2202 = vld [vmem:[%s3 + $0x6c8] sm:$0xff]
  %v2203 = vld [vmem:[%s3 + $0x6d0] sm:$0xff]
  %v2204 = vld [vmem:[%s3 + $0x6d8] sm:$0xff]
  %v2205 = vld [vmem:[%s3 + $0x6e0] sm:$0xff]
  %v2206 = vld [vmem:[%s3 + $0x6e8] sm:$0xff]
  %v2207 = vld [vmem:[%s3 + $0x6f0] sm:$0xff]
  %v2208 = vld [vmem:[%s3 + $0x6f8] sm:$0xff]
  %v2209 = vld [vmem:[%s3 + $0x700] sm:$0xff]
  %v2210 = vld [vmem:[%s3 + $0x708] sm:$0xff]
  %v2211 = vld [vmem:[%s3 + $0x710] sm:$0xff]
  %v2212 = vld [vmem:[%s3 + $0x718] sm:$0xff]
  %v2213 = vld [vmem:[%s3 + $0x720] sm:$0xff]
  %v2214 = vld [vmem:[%s3 + $0x728] sm:$0xff]
  %v2215 = vld [vmem:[%s3 + $0x730] sm:$0xff]
  %v2216 = vld [vmem:[%s3 + $0x738] sm:$0xff]
  %v2217 = vld [vmem:[%s3 + $0x740] sm:$0xff]
  %v2218 = vld [vmem:[%s3 + $0x748] sm:$0xff]
  %v2219 = vld [vmem:[%s3 + $0x750] sm:$0xff]
  %v2220 = vld [vmem:[%s3 + $0x758] sm:$0xff]
  %v2221 = vld [vmem:[%s3 + $0x760] sm:$0xff]
  %v2222 = vld [vmem:[%s3 + $0x768] sm:$0xff]
  %v2223 = vld [vmem:[%s3 + $0x770] sm:$0xff]
  %v2224 = vld [vmem:[%s3 + $0x778] sm:$0xff]
  %v2225 = vld [vmem:[%s3 + $0x780] sm:$0xff]
  %v2226 = vld [vmem:[%s3 + $0x788] sm:$0xff]
  %v2227 = vld [vmem:[%s3 + $0x790] sm:$0xff]
  %v2228 = vld [vmem:[%s3 + $0x798] sm:$0xff]
  %v2229 = vld [vmem:[%s3 + $0x7a0] sm:$0xff]
  %v2230 = vld [vmem:[%s3 + $0x7a8] sm:$0xff]
  %v2231 = vld [vmem:[%s3 + $0x7b0] sm:$0xff]
  %v2232 = vld [vmem:[%s3 + $0x7b8] sm:$0xff]
  %v2233 = vld [vmem:[%s3 + $0x7c0] sm:$0xff]
  %v2234 = vld [vmem:[%s3 + $0x7c8] sm:$0xff]
  %v2235 = vld [vmem:[%s3 + $0x7d0] sm:$0xff]
  %v2236 = vld [vmem:[%s3 + $0x7d8] sm:$0xff]
  %v2237 = vld [vmem:[%s3 + $0x7e0] sm:$0xff]
  %v2238 = vld [vmem:[%s3 + $0x7e8] sm:$0xff]
  %v2239 = vld [vmem:[%s3 + $0x7f0] sm:$0xff]
  %v2240 = vld [vmem:[%s3 + $0x7f8] sm:$0xff]
  %v2241 = vld [vmem:[%s3 + $0x800] sm:$0xff]
  %v2242 = vld [vmem:[%s3 + $0x808] sm:$0xff]
  %v2243 = vld [vmem:[%s3 + $0x810] sm:$0xff]
  %v2244 = vld [vmem:[%s3 + $0x818] sm:$0xff]
  %v2245 = vld [vmem:[%s3 + $0x820] sm:$0xff]
  %v2246 = vld [vmem:[%s3 + $0x828] sm:$0xff]
  %v2247 = vld [vmem:[%s3 + $0x830] sm:$0xff]
  %v2248 = vld [vmem:[%s3 + $0x838] sm:$0xff]
  %v2249 = vld [vmem:[%s3 + $0x840] sm:$0xff]
  %v2250 = vld [vmem:[%s3 + $0x848] sm:$0xff]
  %v2251 = vld [vmem:[%s3 + $0x850] sm:$0xff]
  %v2252 = vld [vmem:[%s3 + $0x858] sm:$0xff]
  %v2253 = vld [vmem:[%s3 + $0x860] sm:$0xff]
  %v2254 = vld [vmem:[%s3 + $0x868] sm:$0xff]
  %v2255 = vld [vmem:[%s3 + $0x870] sm:$0xff]
  %v2256 = vld [vmem:[%s3 + $0x878] sm:$0xff]
  %v2257 = vld [vmem:[%s3 + $0x880] sm:$0xff]
  %v2258 = vld [vmem:[%s3 + $0x888] sm:$0xff]
  %v2259 = vld [vmem:[%s3 + $0x890] sm:$0xff]
  %v2260 = vld [vmem:[%s3 + $0x898] sm:$0xff]
  %v2261 = vld [vmem:[%s3 + $0x8a0] sm:$0xff]
  %v2262 = vld [vmem:[%s3 + $0x8a8] sm:$0xff]
  %v2263 = vld [vmem:[%s3 + $0x8b0] sm:$0xff]
  %v2264 = vld [vmem:[%s3 + $0x8b8] sm:$0xff]
  %v2265 = vld [vmem:[%s3 + $0x8c0] sm:$0xff]
  %v2266 = vld [vmem:[%s3 + $0x8c8] sm:$0xff]
  %v2267 = vld [vmem:[%s3 + $0x8d0] sm:$0xff]
  %v2268 = vld [vmem:[%s3 + $0x8d8] sm:$0xff]
  %v2269 = vld [vmem:[%s3 + $0x8e0] sm:$0xff]
  %v2270 = vld [vmem:[%s3 + $0x8e8] sm:$0xff]
  %v2271 = vld [vmem:[%s3 + $0x8f0] sm:$0xff]
  %v2272 = vld [vmem:[%s3 + $0x8f8] sm:$0xff]
  %v2273 = vld [vmem:[%s3 + $0x900] sm:$0xff]
  %v2274 = vld [vmem:[%s3 + $0x908] sm:$0xff]
  %v2275 = vld [vmem:[%s3 + $0x910] sm:$0xff]
  %v2276 = vld [vmem:[%s3 + $0x918] sm:$0xff]
  %v2277 = vld [vmem:[%s3 + $0x920] sm:$0xff]
  %v2278 = vld [vmem:[%s3 + $0x928] sm:$0xff]
  %v2279 = vld [vmem:[%s3 + $0x930] sm:$0xff]
  %v2280 = vld [vmem:[%s3 + $0x938] sm:$0xff]
  %v2281 = vld [vmem:[%s3 + $0x940] sm:$0xff]
  %v2282 = vld [vmem:[%s3 + $0x948] sm:$0xff]
  %v2283 = vld [vmem:[%s3 + $0x950] sm:$0xff]
  %v2284 = vld [vmem:[%s3 + $0x958] sm:$0xff]
  %v2285 = vld [vmem:[%s3 + $0x960] sm:$0xff]
  %v2286 = vld [vmem:[%s3 + $0x968] sm:$0xff]
  %v2287 = vld [vmem:[%s3 + $0x970] sm:$0xff]
  %v2288 = vld [vmem:[%s3 + $0x978] sm:$0xff]
  %v2289 = vld [vmem:[%s3 + $0x980] sm:$0xff]
  %v2290 = vld [vmem:[%s3 + $0x988] sm:$0xff]
  %v2291 = vld [vmem:[%s3 + $0x990] sm:$0xff]
  %v2292 = vld [vmem:[%s3 + $0x998] sm:$0xff]
  %v2293 = vld [vmem:[%s3 + $0x9a0] sm:$0xff]
  %v2294 = vld [vmem:[%s3 + $0x9a8] sm:$0xff]
  %v2295 = vld [vmem:[%s3 + $0x9b0] sm:$0xff]
  %v2296 = vld [vmem:[%s3 + $0x9b8] sm:$0xff]
  %v2297 = vld [vmem:[%s3 + $0x9c0] sm:$0xff]
  %v2298 = vld [vmem:[%s3 + $0x9c8] sm:$0xff]
  %v2299 = vld [vmem:[%s3 + $0x9d0] sm:$0xff]
  %v2300 = vld [vmem:[%s3 + $0x9d8] sm:$0xff]
  %v2301 = vld [vmem:[%s3 + $0x9e0] sm:$0xff]
  %v2302 = vld [vmem:[%s3 + $0x9e8] sm:$0xff]
  %v2303 = vld [vmem:[%s3 + $0x9f0] sm:$0xff]
  %v2304 = vld [vmem:[%s3 + $0x9f8] sm:$0xff]
  %v2305 = vld [vmem:[%s3 + $0xa00] sm:$0xff]
  %v2306 = vld [vmem:[%s3 + $0xa08] sm:$0xff]
  %v2307 = vld [vmem:[%s3 + $0xa10] sm:$0xff]
  %v2308 = vld [vmem:[%s3 + $0xa18] sm:$0xff]
  %v2309 = vld [vmem:[%s3 + $0xa20] sm:$0xff]
  %v2310 = vld [vmem:[%s3 + $0xa28] sm:$0xff]
  %v2311 = vld [vmem:[%s3 + $0xa30] sm:$0xff]
  %v2312 = vld [vmem:[%s3 + $0xa38] sm:$0xff]
  %v2313 = vld [vmem:[%s3 + $0xa40] sm:$0xff]
  %v2314 = vld [vmem:[%s3 + $0xa48] sm:$0xff]
  %v2315 = vld [vmem:[%s3 + $0xa50] sm:$0xff]
  %v2316 = vld [vmem:[%s3 + $0xa58] sm:$0xff]
  %v2317 = vld [vmem:[%s3 + $0xa60] sm:$0xff]
  %v2318 = vld [vmem:[%s3 + $0xa68] sm:$0xff]
  %v2319 = vld [vmem:[%s3 + $0xa70] sm:$0xff]
  %v2320 = vld [vmem:[%s3 + $0xa78] sm:$0xff]
  %v2321 = vld [vmem:[%s3 + $0xa80] sm:$0xff]
  %v2322 = vld [vmem:[%s3 + $0xa88] sm:$0xff]
  %v2323 = vld [vmem:[%s3 + $0xa90] sm:$0xff]
  %v2324 = vld [vmem:[%s3 + $0xa98] sm:$0xff]
  %v2325 = vld [vmem:[%s3 + $0xaa0] sm:$0xff]
  %v2326 = vld [vmem:[%s3 + $0xaa8] sm:$0xff]
  %v2327 = vld [vmem:[%s3 + $0xab0] sm:$0xff]
  %v2328 = vld [vmem:[%s3 + $0xab8] sm:$0xff]
  %v2329 = vld [vmem:[%s3 + $0xac0] sm:$0xff]
  %v2330 = vld [vmem:[%s3 + $0xac8] sm:$0xff]
  %v2331 = vld [vmem:[%s3 + $0xad0] sm:$0xff]
  %v2332 = vld [vmem:[%s3 + $0xad8] sm:$0xff]
  %v2333 = vld [vmem:[%s3 + $0xae0] sm:$0xff]
  %v2334 = vld [vmem:[%s3 + $0xae8] sm:$0xff]
  %v2335 = vld [vmem:[%s3 + $0xaf0] sm:$0xff]
  %v2336 = vld [vmem:[%s3 + $0xaf8] sm:$0xff]
  %v2337 = vld [vmem:[%s3 + $0xb00] sm:$0xff]
  %v2338 = vld [vmem:[%s3 + $0xb08] sm:$0xff]
  %v2339 = vld [vmem:[%s3 + $0xb10] sm:$0xff]
  %v2340 = vld [vmem:[%s3 + $0xb18] sm:$0xff]
  %v2341 = vld [vmem:[%s3 + $0xb20] sm:$0xff]
  %v2342 = vld [vmem:[%s3 + $0xb28] sm:$0xff]
  %v2343 = vld [vmem:[%s3 + $0xb30] sm:$0xff]
  %v2344 = vld [vmem:[%s3 + $0xb38] sm:$0xff]
  %v2345 = vld [vmem:[%s3 + $0xb40] sm:$0xff]
  %v2346 = vld [vmem:[%s3 + $0xb48] sm:$0xff]
  %v2347 = vld [vmem:[%s3 + $0xb50] sm:$0xff]
  %v2348 = vld [vmem:[%s3 + $0xb58] sm:$0xff]
  %v2349 = vld [vmem:[%s3 + $0xb60] sm:$0xff]
  %v2350 = vld [vmem:[%s3 + $0xb68] sm:$0xff]
  %v2351 = vld [vmem:[%s3 + $0xb70] sm:$0xff]
  %v2352 = vld [vmem:[%s3 + $0xb78] sm:$0xff]
  %v2353 = vld [vmem:[%s3 + $0xb80] sm:$0xff]
  %v2354 = vld [vmem:[%s3 + $0xb88] sm:$0xff]
  %v2355 = vld [vmem:[%s3 + $0xb90] sm:$0xff]
  %v2356 = vld [vmem:[%s3 + $0xb98] sm:$0xff]
  %v2357 = vld [vmem:[%s3 + $0xba0] sm:$0xff]
  %v2358 = vld [vmem:[%s3 + $0xba8] sm:$0xff]
  %v2359 = vld [vmem:[%s3 + $0xbb0] sm:$0xff]
  %v2360 = vld [vmem:[%s3 + $0xbb8] sm:$0xff]
  %v2361 = vld [vmem:[%s3 + $0xbc0] sm:$0xff]
  %v2362 = vld [vmem:[%s3 + $0xbc8] sm:$0xff]
  %v2363 = vld [vmem:[%s3 + $0xbd0] sm:$0xff]
  %v2364 = vld [vmem:[%s3 + $0xbd8] sm:$0xff]
  %v2365 = vld [vmem:[%s3 + $0xbe0] sm:$0xff]
  %v2366 = vld [vmem:[%s3 + $0xbe8] sm:$0xff]
  %v2367 = vld [vmem:[%s3 + $0xbf0] sm:$0xff]
  %v2368 = vld [vmem:[%s3 + $0xbf8] sm:$0xff]
  %v2369 = vld [vmem:[%s3 + $0xc00] sm:$0xff]
  %v2370 = vld [vmem:[%s3 + $0xc08] sm:$0xff]
  %v2371 = vld [vmem:[%s3 + $0xc10] sm:$0xff]
  %v2372 = vld [vmem:[%s3 + $0xc18] sm:$0xff]
  %v2373 = vld [vmem:[%s3 + $0xc20] sm:$0xff]
  %v2374 = vld [vmem:[%s3 + $0xc28] sm:$0xff]
  %v2375 = vld [vmem:[%s3 + $0xc30] sm:$0xff]
  %v2376 = vld [vmem:[%s3 + $0xc38] sm:$0xff]
  %v2377 = vld [vmem:[%s3 + $0xc40] sm:$0xff]
  %v2378 = vld [vmem:[%s3 + $0xc48] sm:$0xff]
  %v2379 = vld [vmem:[%s3 + $0xc50] sm:$0xff]
  %v2380 = vld [vmem:[%s3 + $0xc58] sm:$0xff]
  %v2381 = vld [vmem:[%s3 + $0xc60] sm:$0xff]
  %v2382 = vld [vmem:[%s3 + $0xc68] sm:$0xff]
  %v2383 = vld [vmem:[%s3 + $0xc70] sm:$0xff]
  %v2384 = vld [vmem:[%s3 + $0xc78] sm:$0xff]
  %v2385 = vld [vmem:[%s3 + $0xc80] sm:$0xff]
  %v2386 = vld [vmem:[%s3 + $0xc88] sm:$0xff]
  %v2387 = vld [vmem:[%s3 + $0xc90] sm:$0xff]
  %v2388 = vld [vmem:[%s3 + $0xc98] sm:$0xff]
  %v2389 = vld [vmem:[%s3 + $0xca0] sm:$0xff]
  %v2390 = vld [vmem:[%s3 + $0xca8] sm:$0xff]
  %v2391 = vld [vmem:[%s3 + $0xcb0] sm:$0xff]
  %v2392 = vld [vmem:[%s3 + $0xcb8] sm:$0xff]
  %v2393 = vld [vmem:[%s3 + $0xcc0] sm:$0xff]
  %v2394 = vld [vmem:[%s3 + $0xcc8] sm:$0xff]
  %v2395 = vld [vmem:[%s3 + $0xcd0] sm:$0xff]
  %v2396 = vld [vmem:[%s3 + $0xcd8] sm:$0xff]
  %v2397 = vld [vmem:[%s3 + $0xce0] sm:$0xff]
  %v2398 = vld [vmem:[%s3 + $0xce8] sm:$0xff]
  %v2399 = vld [vmem:[%s3 + $0xcf0] sm:$0xff]
  %v2400 = vld [vmem:[%s3 + $0xcf8] sm:$0xff]
  %v2401 = vld [vmem:[%s3 + $0xd00] sm:$0xff]
  %v2402 = vld [vmem:[%s3 + $0xd08] sm:$0xff]
  %v2403 = vld [vmem:[%s3 + $0xd10] sm:$0xff]
  %v2404 = vld [vmem:[%s3 + $0xd18] sm:$0xff]
  %v2405 = vld [vmem:[%s3 + $0xd20] sm:$0xff]
  %v2406 = vld [vmem:[%s3 + $0xd28] sm:$0xff]
  %v2407 = vld [vmem:[%s3 + $0xd30] sm:$0xff]
  %v2408 = vld [vmem:[%s3 + $0xd38] sm:$0xff]
  %v2409 = vld [vmem:[%s3 + $0xd40] sm:$0xff]
  %v2410 = vld [vmem:[%s3 + $0xd48] sm:$0xff]
  %v2411 = vld [vmem:[%s3 + $0xd50] sm:$0xff]
  %v2412 = vld [vmem:[%s3 + $0xd58] sm:$0xff]
  %v2413 = vld [vmem:[%s3 + $0xd60] sm:$0xff]
  %v2414 = vld [vmem:[%s3 + $0xd68] sm:$0xff]
  %v2415 = vld [vmem:[%s3 + $0xd70] sm:$0xff]
  %v2416 = vld [vmem:[%s3 + $0xd78] sm:$0xff]
  %v2417 = vld [vmem:[%s3 + $0xd80] sm:$0xff]
  %v2418 = vld [vmem:[%s3 + $0xd88] sm:$0xff]
  %v2419 = vld [vmem:[%s3 + $0xd90] sm:$0xff]
  %v2420 = vld [vmem:[%s3 + $0xd98] sm:$0xff]
  %v2421 = vld [vmem:[%s3 + $0xda0] sm:$0xff]
  %v2422 = vld [vmem:[%s3 + $0xda8] sm:$0xff]
  %v2423 = vld [vmem:[%s3 + $0xdb0] sm:$0xff]
  %v2424 = vld [vmem:[%s3 + $0xdb8] sm:$0xff]
  %v2425 = vld [vmem:[%s3 + $0xdc0] sm:$0xff]
  %v2426 = vld [vmem:[%s3 + $0xdc8] sm:$0xff]
  %v2427 = vld [vmem:[%s3 + $0xdd0] sm:$0xff]
  %v2428 = vld [vmem:[%s3 + $0xdd8] sm:$0xff]
  %v2429 = vld [vmem:[%s3 + $0xde0] sm:$0xff]
  %v2430 = vld [vmem:[%s3 + $0xde8] sm:$0xff]
  %v2431 = vld [vmem:[%s3 + $0xdf0] sm:$0xff]
  %v2432 = vld [vmem:[%s3 + $0xdf8] sm:$0xff]
  %v2433 = vld [vmem:[%s3 + $0xe00] sm:$0xff]
  %v2434 = vld [vmem:[%s3 + $0xe08] sm:$0xff]
  %v2435 = vld [vmem:[%s3 + $0xe10] sm:$0xff]
  %v2436 = vld [vmem:[%s3 + $0xe18] sm:$0xff]
  %v2437 = vld [vmem:[%s3 + $0xe20] sm:$0xff]
  %v2438 = vld [vmem:[%s3 + $0xe28] sm:$0xff]
  %v2439 = vld [vmem:[%s3 + $0xe30] sm:$0xff]
  %v2440 = vld [vmem:[%s3 + $0xe38] sm:$0xff]
  %v2441 = vld [vmem:[%s3 + $0xe40] sm:$0xff]
  %v2442 = vld [vmem:[%s3 + $0xe48] sm:$0xff]
  %v2443 = vld [vmem:[%s3 + $0xe50] sm:$0xff]
  %v2444 = vld [vmem:[%s3 + $0xe58] sm:$0xff]
  %v2445 = vld [vmem:[%s3 + $0xe60] sm:$0xff]
  %v2446 = vld [vmem:[%s3 + $0xe68] sm:$0xff]
  %v2447 = vld [vmem:[%s3 + $0xe70] sm:$0xff]
  %v2448 = vld [vmem:[%s3 + $0xe78] sm:$0xff]
  %v2449 = vld [vmem:[%s3 + $0xe80] sm:$0xff]
  %v2450 = vld [vmem:[%s3 + $0xe88] sm:$0xff]
  %v2451 = vld [vmem:[%s3 + $0xe90] sm:$0xff]
  %v2452 = vld [vmem:[%s3 + $0xe98] sm:$0xff]
  %v2453 = vld [vmem:[%s3 + $0xea0] sm:$0xff]
  %v2454 = vld [vmem:[%s3 + $0xea8] sm:$0xff]
  %v2455 = vld [vmem:[%s3 + $0xeb0] sm:$0xff]
  %v2456 = vld [vmem:[%s3 + $0xeb8] sm:$0xff]
  %v2457 = vld [vmem:[%s3 + $0xec0] sm:$0xff]
  %v2458 = vld [vmem:[%s3 + $0xec8] sm:$0xff]
  %v2459 = vld [vmem:[%s3 + $0xed0] sm:$0xff]
  %v2460 = vld [vmem:[%s3 + $0xed8] sm:$0xff]
  %v2461 = vld [vmem:[%s3 + $0xee0] sm:$0xff]
  %v2462 = vld [vmem:[%s3 + $0xee8] sm:$0xff]
  %v2463 = vld [vmem:[%s3 + $0xef0] sm:$0xff]
  %v2464 = vld [vmem:[%s3 + $0xef8] sm:$0xff]
  %v2465 = vld [vmem:[%s3 + $0xf00] sm:$0xff]
  %v2466 = vld [vmem:[%s3 + $0xf08] sm:$0xff]
  %v2467 = vld [vmem:[%s3 + $0xf10] sm:$0xff]
  %v2468 = vld [vmem:[%s3 + $0xf18] sm:$0xff]
  %v2469 = vld [vmem:[%s3 + $0xf20] sm:$0xff]
  %v2470 = vld [vmem:[%s3 + $0xf28] sm:$0xff]
  %v2471 = vld [vmem:[%s3 + $0xf30] sm:$0xff]
  %v2472 = vld [vmem:[%s3 + $0xf38] sm:$0xff]
  %v2473 = vld [vmem:[%s3 + $0xf40] sm:$0xff]
  %v2474 = vld [vmem:[%s3 + $0xf48] sm:$0xff]
  %v2475 = vld [vmem:[%s3 + $0xf50] sm:$0xff]
  %v2476 = vld [vmem:[%s3 + $0xf58] sm:$0xff]
  %v2477 = vld [vmem:[%s3 + $0xf60] sm:$0xff]
  %v2478 = vld [vmem:[%s3 + $0xf68] sm:$0xff]
  %v2479 = vld [vmem:[%s3 + $0xf70] sm:$0xff]
  %v2480 = vld [vmem:[%s3 + $0xf78] sm:$0xff]
  %v2481 = vld [vmem:[%s3 + $0xf80] sm:$0xff]
  %v2482 = vld [vmem:[%s3 + $0xf88] sm:$0xff]
  %v2483 = vld [vmem:[%s3 + $0xf90] sm:$0xff]
  %v2484 = vld [vmem:[%s3 + $0xf98] sm:$0xff]
  %v2485 = vld [vmem:[%s3 + $0xfa0] sm:$0xff]
  %v2486 = vld [vmem:[%s3 + $0xfa8] sm:$0xff]
  %v2487 = vld [vmem:[%s3 + $0xfb0] sm:$0xff]
  %v2488 = vld [vmem:[%s3 + $0xfb8] sm:$0xff]
  %v2489 = vld [vmem:[%s3 + $0xfc0] sm:$0xff]
  %v2490 = vld [vmem:[%s3 + $0xfc8] sm:$0xff]
  %v2491 = vld [vmem:[%s3 + $0xfd0] sm:$0xff]
  %v2492 = vld [vmem:[%s3 + $0xfd8] sm:$0xff]
  %v2493 = vld [vmem:[%s3 + $0xfe0] sm:$0xff]
  %v2494 = vld [vmem:[%s3 + $0xfe8] sm:$0xff]
  %v2495 = vld [vmem:[%s3 + $0xff0] sm:$0xff]
  %v2496 = vld [vmem:[%s3 + $0xff8] sm:$0xff]
  %v2497 = vld [vmem:[%s4] sm:$0x3]
  %v2499 = vperm.slane %v2497, 0
  %v2500 = vperm.slane %v2497, 1
  %v3015 = vunpack.c.l.b16 %v1985
  %v3016 = vunpack.c.h.b16 %v1985
  %v3017 = vunpack.c.l.b16 %v1986
  %v3018 = vunpack.c.h.b16 %v1986
  %v3019 = vunpack.c.l.b16 %v1987
  %v3020 = vunpack.c.h.b16 %v1987
  %v3021 = vunpack.c.l.b16 %v1988
  %v3022 = vunpack.c.h.b16 %v1988
  %v3023 = vunpack.c.l.b16 %v1989
  %v3024 = vunpack.c.h.b16 %v1989
  %v3025 = vunpack.c.l.b16 %v1990
  %v3026 = vunpack.c.h.b16 %v1990
  %v3027 = vunpack.c.l.b16 %v1991
  %v3028 = vunpack.c.h.b16 %v1991
  %v3029 = vunpack.c.l.b16 %v1992
  %v3030 = vunpack.c.h.b16 %v1992
  %v3031 = vunpack.c.l.b16 %v1993
  %v3032 = vunpack.c.h.b16 %v1993
  %v3033 = vunpack.c.l.b16 %v1994
  %v3034 = vunpack.c.h.b16 %v1994
  %v3035 = vunpack.c.l.b16 %v1995
  %v3036 = vunpack.c.h.b16 %v1995
  %v3037 = vunpack.c.l.b16 %v1996
  %v3038 = vunpack.c.h.b16 %v1996
  %v3039 = vunpack.c.l.b16 %v1997
  %v3040 = vunpack.c.h.b16 %v1997
  %v3041 = vunpack.c.l.b16 %v1998
  %v3042 = vunpack.c.h.b16 %v1998
  %v3043 = vunpack.c.l.b16 %v1999
  %v3044 = vunpack.c.h.b16 %v1999
  %v3045 = vunpack.c.l.b16 %v2000
  %v3046 = vunpack.c.h.b16 %v2000
  %v3047 = vunpack.c.l.b16 %v2001
  %v3048 = vunpack.c.h.b16 %v2001
  %v3049 = vunpack.c.l.b16 %v2002
  %v3050 = vunpack.c.h.b16 %v2002
  %v3051 = vunpack.c.l.b16 %v2003
  %v3052 = vunpack.c.h.b16 %v2003
  %v3053 = vunpack.c.l.b16 %v2004
  %v3054 = vunpack.c.h.b16 %v2004
  %v3055 = vunpack.c.l.b16 %v2005
  %v3056 = vunpack.c.h.b16 %v2005
  %v3057 = vunpack.c.l.b16 %v2006
  %v3058 = vunpack.c.h.b16 %v2006
  %v3059 = vunpack.c.l.b16 %v2007
  %v3060 = vunpack.c.h.b16 %v2007
  %v3061 = vunpack.c.l.b16 %v2008
  %v3062 = vunpack.c.h.b16 %v2008
  %v3063 = vunpack.c.l.b16 %v2009
  %v3064 = vunpack.c.h.b16 %v2009
  %v3065 = vunpack.c.l.b16 %v2010
  %v3066 = vunpack.c.h.b16 %v2010
  %v3067 = vunpack.c.l.b16 %v2011
  %v3068 = vunpack.c.h.b16 %v2011
  %v3069 = vunpack.c.l.b16 %v2012
  %v3070 = vunpack.c.h.b16 %v2012
  %v3071 = vunpack.c.l.b16 %v2013
  %v3072 = vunpack.c.h.b16 %v2013
  %v3073 = vunpack.c.l.b16 %v2014
  %v3074 = vunpack.c.h.b16 %v2014
  %v3075 = vunpack.c.l.b16 %v2015
  %v3076 = vunpack.c.h.b16 %v2015
  %v3077 = vunpack.c.l.b16 %v2016
  %v3078 = vunpack.c.h.b16 %v2016
  %v3079 = vunpack.c.l.b16 %v2017
  %v3080 = vunpack.c.h.b16 %v2017
  %v3081 = vunpack.c.l.b16 %v2018
  %v3082 = vunpack.c.h.b16 %v2018
  %v3083 = vunpack.c.l.b16 %v2019
  %v3084 = vunpack.c.h.b16 %v2019
  %v3085 = vunpack.c.l.b16 %v2020
  %v3086 = vunpack.c.h.b16 %v2020
  %v3087 = vunpack.c.l.b16 %v2021
  %v3088 = vunpack.c.h.b16 %v2021
  %v3089 = vunpack.c.l.b16 %v2022
  %v3090 = vunpack.c.h.b16 %v2022
  %v3091 = vunpack.c.l.b16 %v2023
  %v3092 = vunpack.c.h.b16 %v2023
  %v3093 = vunpack.c.l.b16 %v2024
  %v3094 = vunpack.c.h.b16 %v2024
  %v3095 = vunpack.c.l.b16 %v2025
  %v3096 = vunpack.c.h.b16 %v2025
  %v3097 = vunpack.c.l.b16 %v2026
  %v3098 = vunpack.c.h.b16 %v2026
  %v3099 = vunpack.c.l.b16 %v2027
  %v3100 = vunpack.c.h.b16 %v2027
  %v3101 = vunpack.c.l.b16 %v2028
  %v3102 = vunpack.c.h.b16 %v2028
  %v3103 = vunpack.c.l.b16 %v2029
  %v3104 = vunpack.c.h.b16 %v2029
  %v3105 = vunpack.c.l.b16 %v2030
  %v3106 = vunpack.c.h.b16 %v2030
  %v3107 = vunpack.c.l.b16 %v2031
  %v3108 = vunpack.c.h.b16 %v2031
  %v3109 = vunpack.c.l.b16 %v2032
  %v3110 = vunpack.c.h.b16 %v2032
  %v3111 = vunpack.c.l.b16 %v2033
  %v3112 = vunpack.c.h.b16 %v2033
  %v3113 = vunpack.c.l.b16 %v2034
  %v3114 = vunpack.c.h.b16 %v2034
  %v3115 = vunpack.c.l.b16 %v2035
  %v3116 = vunpack.c.h.b16 %v2035
  %v3117 = vunpack.c.l.b16 %v2036
  %v3118 = vunpack.c.h.b16 %v2036
  %v3119 = vunpack.c.l.b16 %v2037
  %v3120 = vunpack.c.h.b16 %v2037
  %v3121 = vunpack.c.l.b16 %v2038
  %v3122 = vunpack.c.h.b16 %v2038
  %v3123 = vunpack.c.l.b16 %v2039
  %v3124 = vunpack.c.h.b16 %v2039
  %v3125 = vunpack.c.l.b16 %v2040
  %v3126 = vunpack.c.h.b16 %v2040
  %v3127 = vunpack.c.l.b16 %v2041
  %v3128 = vunpack.c.h.b16 %v2041
  %v3129 = vunpack.c.l.b16 %v2042
  %v3130 = vunpack.c.h.b16 %v2042
  %v3131 = vunpack.c.l.b16 %v2043
  %v3132 = vunpack.c.h.b16 %v2043
  %v3133 = vunpack.c.l.b16 %v2044
  %v3134 = vunpack.c.h.b16 %v2044
  %v3135 = vunpack.c.l.b16 %v2045
  %v3136 = vunpack.c.h.b16 %v2045
  %v3137 = vunpack.c.l.b16 %v2046
  %v3138 = vunpack.c.h.b16 %v2046
  %v3139 = vunpack.c.l.b16 %v2047
  %v3140 = vunpack.c.h.b16 %v2047
  %v3141 = vunpack.c.l.b16 %v2048
  %v3142 = vunpack.c.h.b16 %v2048
  %v3143 = vunpack.c.l.b16 %v2049
  %v3144 = vunpack.c.h.b16 %v2049
  %v3145 = vunpack.c.l.b16 %v2050
  %v3146 = vunpack.c.h.b16 %v2050
  %v3147 = vunpack.c.l.b16 %v2051
  %v3148 = vunpack.c.h.b16 %v2051
  %v3149 = vunpack.c.l.b16 %v2052
  %v3150 = vunpack.c.h.b16 %v2052
  %v3151 = vunpack.c.l.b16 %v2053
  %v3152 = vunpack.c.h.b16 %v2053
  %v3153 = vunpack.c.l.b16 %v2054
  %v3154 = vunpack.c.h.b16 %v2054
  %v3155 = vunpack.c.l.b16 %v2055
  %v3156 = vunpack.c.h.b16 %v2055
  %v3157 = vunpack.c.l.b16 %v2056
  %v3158 = vunpack.c.h.b16 %v2056
  %v3159 = vunpack.c.l.b16 %v2057
  %v3160 = vunpack.c.h.b16 %v2057
  %v3161 = vunpack.c.l.b16 %v2058
  %v3162 = vunpack.c.h.b16 %v2058
  %v3163 = vunpack.c.l.b16 %v2059
  %v3164 = vunpack.c.h.b16 %v2059
  %v3165 = vunpack.c.l.b16 %v2060
  %v3166 = vunpack.c.h.b16 %v2060
  %v3167 = vunpack.c.l.b16 %v2061
  %v3168 = vunpack.c.h.b16 %v2061
  %v3169 = vunpack.c.l.b16 %v2062
  %v3170 = vunpack.c.h.b16 %v2062
  %v3171 = vunpack.c.l.b16 %v2063
  %v3172 = vunpack.c.h.b16 %v2063
  %v3173 = vunpack.c.l.b16 %v2064
  %v3174 = vunpack.c.h.b16 %v2064
  %v3175 = vunpack.c.l.b16 %v2065
  %v3176 = vunpack.c.h.b16 %v2065
  %v3177 = vunpack.c.l.b16 %v2066
  %v3178 = vunpack.c.h.b16 %v2066
  %v3179 = vunpack.c.l.b16 %v2067
  %v3180 = vunpack.c.h.b16 %v2067
  %v3181 = vunpack.c.l.b16 %v2068
  %v3182 = vunpack.c.h.b16 %v2068
  %v3183 = vunpack.c.l.b16 %v2069
  %v3184 = vunpack.c.h.b16 %v2069
  %v3185 = vunpack.c.l.b16 %v2070
  %v3186 = vunpack.c.h.b16 %v2070
  %v3187 = vunpack.c.l.b16 %v2071
  %v3188 = vunpack.c.h.b16 %v2071
  %v3189 = vunpack.c.l.b16 %v2072
  %v3190 = vunpack.c.h.b16 %v2072
  %v3191 = vunpack.c.l.b16 %v2073
  %v3192 = vunpack.c.h.b16 %v2073
  %v3193 = vunpack.c.l.b16 %v2074
  %v3194 = vunpack.c.h.b16 %v2074
  %v3195 = vunpack.c.l.b16 %v2075
  %v3196 = vunpack.c.h.b16 %v2075
  %v3197 = vunpack.c.l.b16 %v2076
  %v3198 = vunpack.c.h.b16 %v2076
  %v3199 = vunpack.c.l.b16 %v2077
  %v3200 = vunpack.c.h.b16 %v2077
  %v3201 = vunpack.c.l.b16 %v2078
  %v3202 = vunpack.c.h.b16 %v2078
  %v3203 = vunpack.c.l.b16 %v2079
  %v3204 = vunpack.c.h.b16 %v2079
  %v3205 = vunpack.c.l.b16 %v2080
  %v3206 = vunpack.c.h.b16 %v2080
  %v3207 = vunpack.c.l.b16 %v2081
  %v3208 = vunpack.c.h.b16 %v2081
  %v3209 = vunpack.c.l.b16 %v2082
  %v3210 = vunpack.c.h.b16 %v2082
  %v3211 = vunpack.c.l.b16 %v2083
  %v3212 = vunpack.c.h.b16 %v2083
  %v3213 = vunpack.c.l.b16 %v2084
  %v3214 = vunpack.c.h.b16 %v2084
  %v3215 = vunpack.c.l.b16 %v2085
  %v3216 = vunpack.c.h.b16 %v2085
  %v3217 = vunpack.c.l.b16 %v2086
  %v3218 = vunpack.c.h.b16 %v2086
  %v3219 = vunpack.c.l.b16 %v2087
  %v3220 = vunpack.c.h.b16 %v2087
  %v3221 = vunpack.c.l.b16 %v2088
  %v3222 = vunpack.c.h.b16 %v2088
  %v3223 = vunpack.c.l.b16 %v2089
  %v3224 = vunpack.c.h.b16 %v2089
  %v3225 = vunpack.c.l.b16 %v2090
  %v3226 = vunpack.c.h.b16 %v2090
  %v3227 = vunpack.c.l.b16 %v2091
  %v3228 = vunpack.c.h.b16 %v2091
  %v3229 = vunpack.c.l.b16 %v2092
  %v3230 = vunpack.c.h.b16 %v2092
  %v3231 = vunpack.c.l.b16 %v2093
  %v3232 = vunpack.c.h.b16 %v2093
  %v3233 = vunpack.c.l.b16 %v2094
  %v3234 = vunpack.c.h.b16 %v2094
  %v3235 = vunpack.c.l.b16 %v2095
  %v3236 = vunpack.c.h.b16 %v2095
  %v3237 = vunpack.c.l.b16 %v2096
  %v3238 = vunpack.c.h.b16 %v2096
  %v3239 = vunpack.c.l.b16 %v2097
  %v3240 = vunpack.c.h.b16 %v2097
  %v3241 = vunpack.c.l.b16 %v2098
  %v3242 = vunpack.c.h.b16 %v2098
  %v3243 = vunpack.c.l.b16 %v2099
  %v3244 = vunpack.c.h.b16 %v2099
  %v3245 = vunpack.c.l.b16 %v2100
  %v3246 = vunpack.c.h.b16 %v2100
  %v3247 = vunpack.c.l.b16 %v2101
  %v3248 = vunpack.c.h.b16 %v2101
  %v3249 = vunpack.c.l.b16 %v2102
  %v3250 = vunpack.c.h.b16 %v2102
  %v3251 = vunpack.c.l.b16 %v2103
  %v3252 = vunpack.c.h.b16 %v2103
  %v3253 = vunpack.c.l.b16 %v2104
  %v3254 = vunpack.c.h.b16 %v2104
  %v3255 = vunpack.c.l.b16 %v2105
  %v3256 = vunpack.c.h.b16 %v2105
  %v3257 = vunpack.c.l.b16 %v2106
  %v3258 = vunpack.c.h.b16 %v2106
  %v3259 = vunpack.c.l.b16 %v2107
  %v3260 = vunpack.c.h.b16 %v2107
  %v3261 = vunpack.c.l.b16 %v2108
  %v3262 = vunpack.c.h.b16 %v2108
  %v3263 = vunpack.c.l.b16 %v2109
  %v3264 = vunpack.c.h.b16 %v2109
  %v3265 = vunpack.c.l.b16 %v2110
  %v3266 = vunpack.c.h.b16 %v2110
  %v3267 = vunpack.c.l.b16 %v2111
  %v3268 = vunpack.c.h.b16 %v2111
  %v3269 = vunpack.c.l.b16 %v2112
  %v3270 = vunpack.c.h.b16 %v2112
  %v3271 = vunpack.c.l.b16 %v2113
  %v3272 = vunpack.c.h.b16 %v2113
  %v3273 = vunpack.c.l.b16 %v2114
  %v3274 = vunpack.c.h.b16 %v2114
  %v3275 = vunpack.c.l.b16 %v2115
  %v3276 = vunpack.c.h.b16 %v2115
  %v3277 = vunpack.c.l.b16 %v2116
  %v3278 = vunpack.c.h.b16 %v2116
  %v3279 = vunpack.c.l.b16 %v2117
  %v3280 = vunpack.c.h.b16 %v2117
  %v3281 = vunpack.c.l.b16 %v2118
  %v3282 = vunpack.c.h.b16 %v2118
  %v3283 = vunpack.c.l.b16 %v2119
  %v3284 = vunpack.c.h.b16 %v2119
  %v3285 = vunpack.c.l.b16 %v2120
  %v3286 = vunpack.c.h.b16 %v2120
  %v3287 = vunpack.c.l.b16 %v2121
  %v3288 = vunpack.c.h.b16 %v2121
  %v3289 = vunpack.c.l.b16 %v2122
  %v3290 = vunpack.c.h.b16 %v2122
  %v3291 = vunpack.c.l.b16 %v2123
  %v3292 = vunpack.c.h.b16 %v2123
  %v3293 = vunpack.c.l.b16 %v2124
  %v3294 = vunpack.c.h.b16 %v2124
  %v3295 = vunpack.c.l.b16 %v2125
  %v3296 = vunpack.c.h.b16 %v2125
  %v3297 = vunpack.c.l.b16 %v2126
  %v3298 = vunpack.c.h.b16 %v2126
  %v3299 = vunpack.c.l.b16 %v2127
  %v3300 = vunpack.c.h.b16 %v2127
  %v3301 = vunpack.c.l.b16 %v2128
  %v3302 = vunpack.c.h.b16 %v2128
  %v3303 = vunpack.c.l.b16 %v2129
  %v3304 = vunpack.c.h.b16 %v2129
  %v3305 = vunpack.c.l.b16 %v2130
  %v3306 = vunpack.c.h.b16 %v2130
  %v3307 = vunpack.c.l.b16 %v2131
  %v3308 = vunpack.c.h.b16 %v2131
  %v3309 = vunpack.c.l.b16 %v2132
  %v3310 = vunpack.c.h.b16 %v2132
  %v3311 = vunpack.c.l.b16 %v2133
  %v3312 = vunpack.c.h.b16 %v2133
  %v3313 = vunpack.c.l.b16 %v2134
  %v3314 = vunpack.c.h.b16 %v2134
  %v3315 = vunpack.c.l.b16 %v2135
  %v3316 = vunpack.c.h.b16 %v2135
  %v3317 = vunpack.c.l.b16 %v2136
  %v3318 = vunpack.c.h.b16 %v2136
  %v3319 = vunpack.c.l.b16 %v2137
  %v3320 = vunpack.c.h.b16 %v2137
  %v3321 = vunpack.c.l.b16 %v2138
  %v3322 = vunpack.c.h.b16 %v2138
  %v3323 = vunpack.c.l.b16 %v2139
  %v3324 = vunpack.c.h.b16 %v2139
  %v3325 = vunpack.c.l.b16 %v2140
  %v3326 = vunpack.c.h.b16 %v2140
  %v3327 = vunpack.c.l.b16 %v2141
  %v3328 = vunpack.c.h.b16 %v2141
  %v3329 = vunpack.c.l.b16 %v2142
  %v3330 = vunpack.c.h.b16 %v2142
  %v3331 = vunpack.c.l.b16 %v2143
  %v3332 = vunpack.c.h.b16 %v2143
  %v3333 = vunpack.c.l.b16 %v2144
  %v3334 = vunpack.c.h.b16 %v2144
  %v3335 = vunpack.c.l.b16 %v2145
  %v3336 = vunpack.c.h.b16 %v2145
  %v3337 = vunpack.c.l.b16 %v2146
  %v3338 = vunpack.c.h.b16 %v2146
  %v3339 = vunpack.c.l.b16 %v2147
  %v3340 = vunpack.c.h.b16 %v2147
  %v3341 = vunpack.c.l.b16 %v2148
  %v3342 = vunpack.c.h.b16 %v2148
  %v3343 = vunpack.c.l.b16 %v2149
  %v3344 = vunpack.c.h.b16 %v2149
  %v3345 = vunpack.c.l.b16 %v2150
  %v3346 = vunpack.c.h.b16 %v2150
  %v3347 = vunpack.c.l.b16 %v2151
  %v3348 = vunpack.c.h.b16 %v2151
  %v3349 = vunpack.c.l.b16 %v2152
  %v3350 = vunpack.c.h.b16 %v2152
  %v3351 = vunpack.c.l.b16 %v2153
  %v3352 = vunpack.c.h.b16 %v2153
  %v3353 = vunpack.c.l.b16 %v2154
  %v3354 = vunpack.c.h.b16 %v2154
  %v3355 = vunpack.c.l.b16 %v2155
  %v3356 = vunpack.c.h.b16 %v2155
  %v3357 = vunpack.c.l.b16 %v2156
  %v3358 = vunpack.c.h.b16 %v2156
  %v3359 = vunpack.c.l.b16 %v2157
  %v3360 = vunpack.c.h.b16 %v2157
  %v3361 = vunpack.c.l.b16 %v2158
  %v3362 = vunpack.c.h.b16 %v2158
  %v3363 = vunpack.c.l.b16 %v2159
  %v3364 = vunpack.c.h.b16 %v2159
  %v3365 = vunpack.c.l.b16 %v2160
  %v3366 = vunpack.c.h.b16 %v2160
  %v3367 = vunpack.c.l.b16 %v2161
  %v3368 = vunpack.c.h.b16 %v2161
  %v3369 = vunpack.c.l.b16 %v2162
  %v3370 = vunpack.c.h.b16 %v2162
  %v3371 = vunpack.c.l.b16 %v2163
  %v3372 = vunpack.c.h.b16 %v2163
  %v3373 = vunpack.c.l.b16 %v2164
  %v3374 = vunpack.c.h.b16 %v2164
  %v3375 = vunpack.c.l.b16 %v2165
  %v3376 = vunpack.c.h.b16 %v2165
  %v3377 = vunpack.c.l.b16 %v2166
  %v3378 = vunpack.c.h.b16 %v2166
  %v3379 = vunpack.c.l.b16 %v2167
  %v3380 = vunpack.c.h.b16 %v2167
  %v3381 = vunpack.c.l.b16 %v2168
  %v3382 = vunpack.c.h.b16 %v2168
  %v3383 = vunpack.c.l.b16 %v2169
  %v3384 = vunpack.c.h.b16 %v2169
  %v3385 = vunpack.c.l.b16 %v2170
  %v3386 = vunpack.c.h.b16 %v2170
  %v3387 = vunpack.c.l.b16 %v2171
  %v3388 = vunpack.c.h.b16 %v2171
  %v3389 = vunpack.c.l.b16 %v2172
  %v3390 = vunpack.c.h.b16 %v2172
  %v3391 = vunpack.c.l.b16 %v2173
  %v3392 = vunpack.c.h.b16 %v2173
  %v3393 = vunpack.c.l.b16 %v2174
  %v3394 = vunpack.c.h.b16 %v2174
  %v3395 = vunpack.c.l.b16 %v2175
  %v3396 = vunpack.c.h.b16 %v2175
  %v3397 = vunpack.c.l.b16 %v2176
  %v3398 = vunpack.c.h.b16 %v2176
  %v3399 = vunpack.c.l.b16 %v2177
  %v3400 = vunpack.c.h.b16 %v2177
  %v3401 = vunpack.c.l.b16 %v2178
  %v3402 = vunpack.c.h.b16 %v2178
  %v3403 = vunpack.c.l.b16 %v2179
  %v3404 = vunpack.c.h.b16 %v2179
  %v3405 = vunpack.c.l.b16 %v2180
  %v3406 = vunpack.c.h.b16 %v2180
  %v3407 = vunpack.c.l.b16 %v2181
  %v3408 = vunpack.c.h.b16 %v2181
  %v3409 = vunpack.c.l.b16 %v2182
  %v3410 = vunpack.c.h.b16 %v2182
  %v3411 = vunpack.c.l.b16 %v2183
  %v3412 = vunpack.c.h.b16 %v2183
  %v3413 = vunpack.c.l.b16 %v2184
  %v3414 = vunpack.c.h.b16 %v2184
  %v3415 = vunpack.c.l.b16 %v2185
  %v3416 = vunpack.c.h.b16 %v2185
  %v3417 = vunpack.c.l.b16 %v2186
  %v3418 = vunpack.c.h.b16 %v2186
  %v3419 = vunpack.c.l.b16 %v2187
  %v3420 = vunpack.c.h.b16 %v2187
  %v3421 = vunpack.c.l.b16 %v2188
  %v3422 = vunpack.c.h.b16 %v2188
  %v3423 = vunpack.c.l.b16 %v2189
  %v3424 = vunpack.c.h.b16 %v2189
  %v3425 = vunpack.c.l.b16 %v2190
  %v3426 = vunpack.c.h.b16 %v2190
  %v3427 = vunpack.c.l.b16 %v2191
  %v3428 = vunpack.c.h.b16 %v2191
  %v3429 = vunpack.c.l.b16 %v2192
  %v3430 = vunpack.c.h.b16 %v2192
  %v3431 = vunpack.c.l.b16 %v2193
  %v3432 = vunpack.c.h.b16 %v2193
  %v3433 = vunpack.c.l.b16 %v2194
  %v3434 = vunpack.c.h.b16 %v2194
  %v3435 = vunpack.c.l.b16 %v2195
  %v3436 = vunpack.c.h.b16 %v2195
  %v3437 = vunpack.c.l.b16 %v2196
  %v3438 = vunpack.c.h.b16 %v2196
  %v3439 = vunpack.c.l.b16 %v2197
  %v3440 = vunpack.c.h.b16 %v2197
  %v3441 = vunpack.c.l.b16 %v2198
  %v3442 = vunpack.c.h.b16 %v2198
  %v3443 = vunpack.c.l.b16 %v2199
  %v3444 = vunpack.c.h.b16 %v2199
  %v3445 = vunpack.c.l.b16 %v2200
  %v3446 = vunpack.c.h.b16 %v2200
  %v3447 = vunpack.c.l.b16 %v2201
  %v3448 = vunpack.c.h.b16 %v2201
  %v3449 = vunpack.c.l.b16 %v2202
  %v3450 = vunpack.c.h.b16 %v2202
  %v3451 = vunpack.c.l.b16 %v2203
  %v3452 = vunpack.c.h.b16 %v2203
  %v3453 = vunpack.c.l.b16 %v2204
  %v3454 = vunpack.c.h.b16 %v2204
  %v3455 = vunpack.c.l.b16 %v2205
  %v3456 = vunpack.c.h.b16 %v2205
  %v3457 = vunpack.c.l.b16 %v2206
  %v3458 = vunpack.c.h.b16 %v2206
  %v3459 = vunpack.c.l.b16 %v2207
  %v3460 = vunpack.c.h.b16 %v2207
  %v3461 = vunpack.c.l.b16 %v2208
  %v3462 = vunpack.c.h.b16 %v2208
  %v3463 = vunpack.c.l.b16 %v2209
  %v3464 = vunpack.c.h.b16 %v2209
  %v3465 = vunpack.c.l.b16 %v2210
  %v3466 = vunpack.c.h.b16 %v2210
  %v3467 = vunpack.c.l.b16 %v2211
  %v3468 = vunpack.c.h.b16 %v2211
  %v3469 = vunpack.c.l.b16 %v2212
  %v3470 = vunpack.c.h.b16 %v2212
  %v3471 = vunpack.c.l.b16 %v2213
  %v3472 = vunpack.c.h.b16 %v2213
  %v3473 = vunpack.c.l.b16 %v2214
  %v3474 = vunpack.c.h.b16 %v2214
  %v3475 = vunpack.c.l.b16 %v2215
  %v3476 = vunpack.c.h.b16 %v2215
  %v3477 = vunpack.c.l.b16 %v2216
  %v3478 = vunpack.c.h.b16 %v2216
  %v3479 = vunpack.c.l.b16 %v2217
  %v3480 = vunpack.c.h.b16 %v2217
  %v3481 = vunpack.c.l.b16 %v2218
  %v3482 = vunpack.c.h.b16 %v2218
  %v3483 = vunpack.c.l.b16 %v2219
  %v3484 = vunpack.c.h.b16 %v2219
  %v3485 = vunpack.c.l.b16 %v2220
  %v3486 = vunpack.c.h.b16 %v2220
  %v3487 = vunpack.c.l.b16 %v2221
  %v3488 = vunpack.c.h.b16 %v2221
  %v3489 = vunpack.c.l.b16 %v2222
  %v3490 = vunpack.c.h.b16 %v2222
  %v3491 = vunpack.c.l.b16 %v2223
  %v3492 = vunpack.c.h.b16 %v2223
  %v3493 = vunpack.c.l.b16 %v2224
  %v3494 = vunpack.c.h.b16 %v2224
  %v3495 = vunpack.c.l.b16 %v2225
  %v3496 = vunpack.c.h.b16 %v2225
  %v3497 = vunpack.c.l.b16 %v2226
  %v3498 = vunpack.c.h.b16 %v2226
  %v3499 = vunpack.c.l.b16 %v2227
  %v3500 = vunpack.c.h.b16 %v2227
  %v3501 = vunpack.c.l.b16 %v2228
  %v3502 = vunpack.c.h.b16 %v2228
  %v3503 = vunpack.c.l.b16 %v2229
  %v3504 = vunpack.c.h.b16 %v2229
  %v3505 = vunpack.c.l.b16 %v2230
  %v3506 = vunpack.c.h.b16 %v2230
  %v3507 = vunpack.c.l.b16 %v2231
  %v3508 = vunpack.c.h.b16 %v2231
  %v3509 = vunpack.c.l.b16 %v2232
  %v3510 = vunpack.c.h.b16 %v2232
  %v3511 = vunpack.c.l.b16 %v2233
  %v3512 = vunpack.c.h.b16 %v2233
  %v3513 = vunpack.c.l.b16 %v2234
  %v3514 = vunpack.c.h.b16 %v2234
  %v3515 = vunpack.c.l.b16 %v2235
  %v3516 = vunpack.c.h.b16 %v2235
  %v3517 = vunpack.c.l.b16 %v2236
  %v3518 = vunpack.c.h.b16 %v2236
  %v3519 = vunpack.c.l.b16 %v2237
  %v3520 = vunpack.c.h.b16 %v2237
  %v3521 = vunpack.c.l.b16 %v2238
  %v3522 = vunpack.c.h.b16 %v2238
  %v3523 = vunpack.c.l.b16 %v2239
  %v3524 = vunpack.c.h.b16 %v2239
  %v3525 = vunpack.c.l.b16 %v2240
  %v3526 = vunpack.c.h.b16 %v2240
  %v3527 = vunpack.c.l.b16 %v2241
  %v3528 = vunpack.c.h.b16 %v2241
  %v3529 = vunpack.c.l.b16 %v2242
  %v3530 = vunpack.c.h.b16 %v2242
  %v3531 = vunpack.c.l.b16 %v2243
  %v3532 = vunpack.c.h.b16 %v2243
  %v3533 = vunpack.c.l.b16 %v2244
  %v3534 = vunpack.c.h.b16 %v2244
  %v3535 = vunpack.c.l.b16 %v2245
  %v3536 = vunpack.c.h.b16 %v2245
  %v3537 = vunpack.c.l.b16 %v2246
  %v3538 = vunpack.c.h.b16 %v2246
  %v3539 = vunpack.c.l.b16 %v2247
  %v3540 = vunpack.c.h.b16 %v2247
  %v3541 = vunpack.c.l.b16 %v2248
  %v3542 = vunpack.c.h.b16 %v2248
  %v3543 = vunpack.c.l.b16 %v2249
  %v3544 = vunpack.c.h.b16 %v2249
  %v3545 = vunpack.c.l.b16 %v2250
  %v3546 = vunpack.c.h.b16 %v2250
  %v3547 = vunpack.c.l.b16 %v2251
  %v3548 = vunpack.c.h.b16 %v2251
  %v3549 = vunpack.c.l.b16 %v2252
  %v3550 = vunpack.c.h.b16 %v2252
  %v3551 = vunpack.c.l.b16 %v2253
  %v3552 = vunpack.c.h.b16 %v2253
  %v3553 = vunpack.c.l.b16 %v2254
  %v3554 = vunpack.c.h.b16 %v2254
  %v3555 = vunpack.c.l.b16 %v2255
  %v3556 = vunpack.c.h.b16 %v2255
  %v3557 = vunpack.c.l.b16 %v2256
  %v3558 = vunpack.c.h.b16 %v2256
  %v3559 = vunpack.c.l.b16 %v2257
  %v3560 = vunpack.c.h.b16 %v2257
  %v3561 = vunpack.c.l.b16 %v2258
  %v3562 = vunpack.c.h.b16 %v2258
  %v3563 = vunpack.c.l.b16 %v2259
  %v3564 = vunpack.c.h.b16 %v2259
  %v3565 = vunpack.c.l.b16 %v2260
  %v3566 = vunpack.c.h.b16 %v2260
  %v3567 = vunpack.c.l.b16 %v2261
  %v3568 = vunpack.c.h.b16 %v2261
  %v3569 = vunpack.c.l.b16 %v2262
  %v3570 = vunpack.c.h.b16 %v2262
  %v3571 = vunpack.c.l.b16 %v2263
  %v3572 = vunpack.c.h.b16 %v2263
  %v3573 = vunpack.c.l.b16 %v2264
  %v3574 = vunpack.c.h.b16 %v2264
  %v3575 = vunpack.c.l.b16 %v2265
  %v3576 = vunpack.c.h.b16 %v2265
  %v3577 = vunpack.c.l.b16 %v2266
  %v3578 = vunpack.c.h.b16 %v2266
  %v3579 = vunpack.c.l.b16 %v2267
  %v3580 = vunpack.c.h.b16 %v2267
  %v3581 = vunpack.c.l.b16 %v2268
  %v3582 = vunpack.c.h.b16 %v2268
  %v3583 = vunpack.c.l.b16 %v2269
  %v3584 = vunpack.c.h.b16 %v2269
  %v3585 = vunpack.c.l.b16 %v2270
  %v3586 = vunpack.c.h.b16 %v2270
  %v3587 = vunpack.c.l.b16 %v2271
  %v3588 = vunpack.c.h.b16 %v2271
  %v3589 = vunpack.c.l.b16 %v2272
  %v3590 = vunpack.c.h.b16 %v2272
  %v3591 = vunpack.c.l.b16 %v2273
  %v3592 = vunpack.c.h.b16 %v2273
  %v3593 = vunpack.c.l.b16 %v2274
  %v3594 = vunpack.c.h.b16 %v2274
  %v3595 = vunpack.c.l.b16 %v2275
  %v3596 = vunpack.c.h.b16 %v2275
  %v3597 = vunpack.c.l.b16 %v2276
  %v3598 = vunpack.c.h.b16 %v2276
  %v3599 = vunpack.c.l.b16 %v2277
  %v3600 = vunpack.c.h.b16 %v2277
  %v3601 = vunpack.c.l.b16 %v2278
  %v3602 = vunpack.c.h.b16 %v2278
  %v3603 = vunpack.c.l.b16 %v2279
  %v3604 = vunpack.c.h.b16 %v2279
  %v3605 = vunpack.c.l.b16 %v2280
  %v3606 = vunpack.c.h.b16 %v2280
  %v3607 = vunpack.c.l.b16 %v2281
  %v3608 = vunpack.c.h.b16 %v2281
  %v3609 = vunpack.c.l.b16 %v2282
  %v3610 = vunpack.c.h.b16 %v2282
  %v3611 = vunpack.c.l.b16 %v2283
  %v3612 = vunpack.c.h.b16 %v2283
  %v3613 = vunpack.c.l.b16 %v2284
  %v3614 = vunpack.c.h.b16 %v2284
  %v3615 = vunpack.c.l.b16 %v2285
  %v3616 = vunpack.c.h.b16 %v2285
  %v3617 = vunpack.c.l.b16 %v2286
  %v3618 = vunpack.c.h.b16 %v2286
  %v3619 = vunpack.c.l.b16 %v2287
  %v3620 = vunpack.c.h.b16 %v2287
  %v3621 = vunpack.c.l.b16 %v2288
  %v3622 = vunpack.c.h.b16 %v2288
  %v3623 = vunpack.c.l.b16 %v2289
  %v3624 = vunpack.c.h.b16 %v2289
  %v3625 = vunpack.c.l.b16 %v2290
  %v3626 = vunpack.c.h.b16 %v2290
  %v3627 = vunpack.c.l.b16 %v2291
  %v3628 = vunpack.c.h.b16 %v2291
  %v3629 = vunpack.c.l.b16 %v2292
  %v3630 = vunpack.c.h.b16 %v2292
  %v3631 = vunpack.c.l.b16 %v2293
  %v3632 = vunpack.c.h.b16 %v2293
  %v3633 = vunpack.c.l.b16 %v2294
  %v3634 = vunpack.c.h.b16 %v2294
  %v3635 = vunpack.c.l.b16 %v2295
  %v3636 = vunpack.c.h.b16 %v2295
  %v3637 = vunpack.c.l.b16 %v2296
  %v3638 = vunpack.c.h.b16 %v2296
  %v3639 = vunpack.c.l.b16 %v2297
  %v3640 = vunpack.c.h.b16 %v2297
  %v3641 = vunpack.c.l.b16 %v2298
  %v3642 = vunpack.c.h.b16 %v2298
  %v3643 = vunpack.c.l.b16 %v2299
  %v3644 = vunpack.c.h.b16 %v2299
  %v3645 = vunpack.c.l.b16 %v2300
  %v3646 = vunpack.c.h.b16 %v2300
  %v3647 = vunpack.c.l.b16 %v2301
  %v3648 = vunpack.c.h.b16 %v2301
  %v3649 = vunpack.c.l.b16 %v2302
  %v3650 = vunpack.c.h.b16 %v2302
  %v3651 = vunpack.c.l.b16 %v2303
  %v3652 = vunpack.c.h.b16 %v2303
  %v3653 = vunpack.c.l.b16 %v2304
  %v3654 = vunpack.c.h.b16 %v2304
  %v3655 = vunpack.c.l.b16 %v2305
  %v3656 = vunpack.c.h.b16 %v2305
  %v3657 = vunpack.c.l.b16 %v2306
  %v3658 = vunpack.c.h.b16 %v2306
  %v3659 = vunpack.c.l.b16 %v2307
  %v3660 = vunpack.c.h.b16 %v2307
  %v3661 = vunpack.c.l.b16 %v2308
  %v3662 = vunpack.c.h.b16 %v2308
  %v3663 = vunpack.c.l.b16 %v2309
  %v3664 = vunpack.c.h.b16 %v2309
  %v3665 = vunpack.c.l.b16 %v2310
  %v3666 = vunpack.c.h.b16 %v2310
  %v3667 = vunpack.c.l.b16 %v2311
  %v3668 = vunpack.c.h.b16 %v2311
  %v3669 = vunpack.c.l.b16 %v2312
  %v3670 = vunpack.c.h.b16 %v2312
  %v3671 = vunpack.c.l.b16 %v2313
  %v3672 = vunpack.c.h.b16 %v2313
  %v3673 = vunpack.c.l.b16 %v2314
  %v3674 = vunpack.c.h.b16 %v2314
  %v3675 = vunpack.c.l.b16 %v2315
  %v3676 = vunpack.c.h.b16 %v2315
  %v3677 = vunpack.c.l.b16 %v2316
  %v3678 = vunpack.c.h.b16 %v2316
  %v3679 = vunpack.c.l.b16 %v2317
  %v3680 = vunpack.c.h.b16 %v2317
  %v3681 = vunpack.c.l.b16 %v2318
  %v3682 = vunpack.c.h.b16 %v2318
  %v3683 = vunpack.c.l.b16 %v2319
  %v3684 = vunpack.c.h.b16 %v2319
  %v3685 = vunpack.c.l.b16 %v2320
  %v3686 = vunpack.c.h.b16 %v2320
  %v3687 = vunpack.c.l.b16 %v2321
  %v3688 = vunpack.c.h.b16 %v2321
  %v3689 = vunpack.c.l.b16 %v2322
  %v3690 = vunpack.c.h.b16 %v2322
  %v3691 = vunpack.c.l.b16 %v2323
  %v3692 = vunpack.c.h.b16 %v2323
  %v3693 = vunpack.c.l.b16 %v2324
  %v3694 = vunpack.c.h.b16 %v2324
  %v3695 = vunpack.c.l.b16 %v2325
  %v3696 = vunpack.c.h.b16 %v2325
  %v3697 = vunpack.c.l.b16 %v2326
  %v3698 = vunpack.c.h.b16 %v2326
  %v3699 = vunpack.c.l.b16 %v2327
  %v3700 = vunpack.c.h.b16 %v2327
  %v3701 = vunpack.c.l.b16 %v2328
  %v3702 = vunpack.c.h.b16 %v2328
  %v3703 = vunpack.c.l.b16 %v2329
  %v3704 = vunpack.c.h.b16 %v2329
  %v3705 = vunpack.c.l.b16 %v2330
  %v3706 = vunpack.c.h.b16 %v2330
  %v3707 = vunpack.c.l.b16 %v2331
  %v3708 = vunpack.c.h.b16 %v2331
  %v3709 = vunpack.c.l.b16 %v2332
  %v3710 = vunpack.c.h.b16 %v2332
  %v3711 = vunpack.c.l.b16 %v2333
  %v3712 = vunpack.c.h.b16 %v2333
  %v3713 = vunpack.c.l.b16 %v2334
  %v3714 = vunpack.c.h.b16 %v2334
  %v3715 = vunpack.c.l.b16 %v2335
  %v3716 = vunpack.c.h.b16 %v2335
  %v3717 = vunpack.c.l.b16 %v2336
  %v3718 = vunpack.c.h.b16 %v2336
  %v3719 = vunpack.c.l.b16 %v2337
  %v3720 = vunpack.c.h.b16 %v2337
  %v3721 = vunpack.c.l.b16 %v2338
  %v3722 = vunpack.c.h.b16 %v2338
  %v3723 = vunpack.c.l.b16 %v2339
  %v3724 = vunpack.c.h.b16 %v2339
  %v3725 = vunpack.c.l.b16 %v2340
  %v3726 = vunpack.c.h.b16 %v2340
  %v3727 = vunpack.c.l.b16 %v2341
  %v3728 = vunpack.c.h.b16 %v2341
  %v3729 = vunpack.c.l.b16 %v2342
  %v3730 = vunpack.c.h.b16 %v2342
  %v3731 = vunpack.c.l.b16 %v2343
  %v3732 = vunpack.c.h.b16 %v2343
  %v3733 = vunpack.c.l.b16 %v2344
  %v3734 = vunpack.c.h.b16 %v2344
  %v3735 = vunpack.c.l.b16 %v2345
  %v3736 = vunpack.c.h.b16 %v2345
  %v3737 = vunpack.c.l.b16 %v2346
  %v3738 = vunpack.c.h.b16 %v2346
  %v3739 = vunpack.c.l.b16 %v2347
  %v3740 = vunpack.c.h.b16 %v2347
  %v3741 = vunpack.c.l.b16 %v2348
  %v3742 = vunpack.c.h.b16 %v2348
  %v3743 = vunpack.c.l.b16 %v2349
  %v3744 = vunpack.c.h.b16 %v2349
  %v3745 = vunpack.c.l.b16 %v2350
  %v3746 = vunpack.c.h.b16 %v2350
  %v3747 = vunpack.c.l.b16 %v2351
  %v3748 = vunpack.c.h.b16 %v2351
  %v3749 = vunpack.c.l.b16 %v2352
  %v3750 = vunpack.c.h.b16 %v2352
  %v3751 = vunpack.c.l.b16 %v2353
  %v3752 = vunpack.c.h.b16 %v2353
  %v3753 = vunpack.c.l.b16 %v2354
  %v3754 = vunpack.c.h.b16 %v2354
  %v3755 = vunpack.c.l.b16 %v2355
  %v3756 = vunpack.c.h.b16 %v2355
  %v3757 = vunpack.c.l.b16 %v2356
  %v3758 = vunpack.c.h.b16 %v2356
  %v3759 = vunpack.c.l.b16 %v2357
  %v3760 = vunpack.c.h.b16 %v2357
  %v3761 = vunpack.c.l.b16 %v2358
  %v3762 = vunpack.c.h.b16 %v2358
  %v3763 = vunpack.c.l.b16 %v2359
  %v3764 = vunpack.c.h.b16 %v2359
  %v3765 = vunpack.c.l.b16 %v2360
  %v3766 = vunpack.c.h.b16 %v2360
  %v3767 = vunpack.c.l.b16 %v2361
  %v3768 = vunpack.c.h.b16 %v2361
  %v3769 = vunpack.c.l.b16 %v2362
  %v3770 = vunpack.c.h.b16 %v2362
  %v3771 = vunpack.c.l.b16 %v2363
  %v3772 = vunpack.c.h.b16 %v2363
  %v3773 = vunpack.c.l.b16 %v2364
  %v3774 = vunpack.c.h.b16 %v2364
  %v3775 = vunpack.c.l.b16 %v2365
  %v3776 = vunpack.c.h.b16 %v2365
  %v3777 = vunpack.c.l.b16 %v2366
  %v3778 = vunpack.c.h.b16 %v2366
  %v3779 = vunpack.c.l.b16 %v2367
  %v3780 = vunpack.c.h.b16 %v2367
  %v3781 = vunpack.c.l.b16 %v2368
  %v3782 = vunpack.c.h.b16 %v2368
  %v3783 = vunpack.c.l.b16 %v2369
  %v3784 = vunpack.c.h.b16 %v2369
  %v3785 = vunpack.c.l.b16 %v2370
  %v3786 = vunpack.c.h.b16 %v2370
  %v3787 = vunpack.c.l.b16 %v2371
  %v3788 = vunpack.c.h.b16 %v2371
  %v3789 = vunpack.c.l.b16 %v2372
  %v3790 = vunpack.c.h.b16 %v2372
  %v3791 = vunpack.c.l.b16 %v2373
  %v3792 = vunpack.c.h.b16 %v2373
  %v3793 = vunpack.c.l.b16 %v2374
  %v3794 = vunpack.c.h.b16 %v2374
  %v3795 = vunpack.c.l.b16 %v2375
  %v3796 = vunpack.c.h.b16 %v2375
  %v3797 = vunpack.c.l.b16 %v2376
  %v3798 = vunpack.c.h.b16 %v2376
  %v3799 = vunpack.c.l.b16 %v2377
  %v3800 = vunpack.c.h.b16 %v2377
  %v3801 = vunpack.c.l.b16 %v2378
  %v3802 = vunpack.c.h.b16 %v2378
  %v3803 = vunpack.c.l.b16 %v2379
  %v3804 = vunpack.c.h.b16 %v2379
  %v3805 = vunpack.c.l.b16 %v2380
  %v3806 = vunpack.c.h.b16 %v2380
  %v3807 = vunpack.c.l.b16 %v2381
  %v3808 = vunpack.c.h.b16 %v2381
  %v3809 = vunpack.c.l.b16 %v2382
  %v3810 = vunpack.c.h.b16 %v2382
  %v3811 = vunpack.c.l.b16 %v2383
  %v3812 = vunpack.c.h.b16 %v2383
  %v3813 = vunpack.c.l.b16 %v2384
  %v3814 = vunpack.c.h.b16 %v2384
  %v3815 = vunpack.c.l.b16 %v2385
  %v3816 = vunpack.c.h.b16 %v2385
  %v3817 = vunpack.c.l.b16 %v2386
  %v3818 = vunpack.c.h.b16 %v2386
  %v3819 = vunpack.c.l.b16 %v2387
  %v3820 = vunpack.c.h.b16 %v2387
  %v3821 = vunpack.c.l.b16 %v2388
  %v3822 = vunpack.c.h.b16 %v2388
  %v3823 = vunpack.c.l.b16 %v2389
  %v3824 = vunpack.c.h.b16 %v2389
  %v3825 = vunpack.c.l.b16 %v2390
  %v3826 = vunpack.c.h.b16 %v2390
  %v3827 = vunpack.c.l.b16 %v2391
  %v3828 = vunpack.c.h.b16 %v2391
  %v3829 = vunpack.c.l.b16 %v2392
  %v3830 = vunpack.c.h.b16 %v2392
  %v3831 = vunpack.c.l.b16 %v2393
  %v3832 = vunpack.c.h.b16 %v2393
  %v3833 = vunpack.c.l.b16 %v2394
  %v3834 = vunpack.c.h.b16 %v2394
  %v3835 = vunpack.c.l.b16 %v2395
  %v3836 = vunpack.c.h.b16 %v2395
  %v3837 = vunpack.c.l.b16 %v2396
  %v3838 = vunpack.c.h.b16 %v2396
  %v3839 = vunpack.c.l.b16 %v2397
  %v3840 = vunpack.c.h.b16 %v2397
  %v3841 = vunpack.c.l.b16 %v2398
  %v3842 = vunpack.c.h.b16 %v2398
  %v3843 = vunpack.c.l.b16 %v2399
  %v3844 = vunpack.c.h.b16 %v2399
  %v3845 = vunpack.c.l.b16 %v2400
  %v3846 = vunpack.c.h.b16 %v2400
  %v3847 = vunpack.c.l.b16 %v2401
  %v3848 = vunpack.c.h.b16 %v2401
  %v3849 = vunpack.c.l.b16 %v2402
  %v3850 = vunpack.c.h.b16 %v2402
  %v3851 = vunpack.c.l.b16 %v2403
  %v3852 = vunpack.c.h.b16 %v2403
  %v3853 = vunpack.c.l.b16 %v2404
  %v3854 = vunpack.c.h.b16 %v2404
  %v3855 = vunpack.c.l.b16 %v2405
  %v3856 = vunpack.c.h.b16 %v2405
  %v3857 = vunpack.c.l.b16 %v2406
  %v3858 = vunpack.c.h.b16 %v2406
  %v3859 = vunpack.c.l.b16 %v2407
  %v3860 = vunpack.c.h.b16 %v2407
  %v3861 = vunpack.c.l.b16 %v2408
  %v3862 = vunpack.c.h.b16 %v2408
  %v3863 = vunpack.c.l.b16 %v2409
  %v3864 = vunpack.c.h.b16 %v2409
  %v3865 = vunpack.c.l.b16 %v2410
  %v3866 = vunpack.c.h.b16 %v2410
  %v3867 = vunpack.c.l.b16 %v2411
  %v3868 = vunpack.c.h.b16 %v2411
  %v3869 = vunpack.c.l.b16 %v2412
  %v3870 = vunpack.c.h.b16 %v2412
  %v3871 = vunpack.c.l.b16 %v2413
  %v3872 = vunpack.c.h.b16 %v2413
  %v3873 = vunpack.c.l.b16 %v2414
  %v3874 = vunpack.c.h.b16 %v2414
  %v3875 = vunpack.c.l.b16 %v2415
  %v3876 = vunpack.c.h.b16 %v2415
  %v3877 = vunpack.c.l.b16 %v2416
  %v3878 = vunpack.c.h.b16 %v2416
  %v3879 = vunpack.c.l.b16 %v2417
  %v3880 = vunpack.c.h.b16 %v2417
  %v3881 = vunpack.c.l.b16 %v2418
  %v3882 = vunpack.c.h.b16 %v2418
  %v3883 = vunpack.c.l.b16 %v2419
  %v3884 = vunpack.c.h.b16 %v2419
  %v3885 = vunpack.c.l.b16 %v2420
  %v3886 = vunpack.c.h.b16 %v2420
  %v3887 = vunpack.c.l.b16 %v2421
  %v3888 = vunpack.c.h.b16 %v2421
  %v3889 = vunpack.c.l.b16 %v2422
  %v3890 = vunpack.c.h.b16 %v2422
  %v3891 = vunpack.c.l.b16 %v2423
  %v3892 = vunpack.c.h.b16 %v2423
  %v3893 = vunpack.c.l.b16 %v2424
  %v3894 = vunpack.c.h.b16 %v2424
  %v3895 = vunpack.c.l.b16 %v2425
  %v3896 = vunpack.c.h.b16 %v2425
  %v3897 = vunpack.c.l.b16 %v2426
  %v3898 = vunpack.c.h.b16 %v2426
  %v3899 = vunpack.c.l.b16 %v2427
  %v3900 = vunpack.c.h.b16 %v2427
  %v3901 = vunpack.c.l.b16 %v2428
  %v3902 = vunpack.c.h.b16 %v2428
  %v3903 = vunpack.c.l.b16 %v2429
  %v3904 = vunpack.c.h.b16 %v2429
  %v3905 = vunpack.c.l.b16 %v2430
  %v3906 = vunpack.c.h.b16 %v2430
  %v3907 = vunpack.c.l.b16 %v2431
  %v3908 = vunpack.c.h.b16 %v2431
  %v3909 = vunpack.c.l.b16 %v2432
  %v3910 = vunpack.c.h.b16 %v2432
  %v3911 = vunpack.c.l.b16 %v2433
  %v3912 = vunpack.c.h.b16 %v2433
  %v3913 = vunpack.c.l.b16 %v2434
  %v3914 = vunpack.c.h.b16 %v2434
  %v3915 = vunpack.c.l.b16 %v2435
  %v3916 = vunpack.c.h.b16 %v2435
  %v3917 = vunpack.c.l.b16 %v2436
  %v3918 = vunpack.c.h.b16 %v2436
  %v3919 = vunpack.c.l.b16 %v2437
  %v3920 = vunpack.c.h.b16 %v2437
  %v3921 = vunpack.c.l.b16 %v2438
  %v3922 = vunpack.c.h.b16 %v2438
  %v3923 = vunpack.c.l.b16 %v2439
  %v3924 = vunpack.c.h.b16 %v2439
  %v3925 = vunpack.c.l.b16 %v2440
  %v3926 = vunpack.c.h.b16 %v2440
  %v3927 = vunpack.c.l.b16 %v2441
  %v3928 = vunpack.c.h.b16 %v2441
  %v3929 = vunpack.c.l.b16 %v2442
  %v3930 = vunpack.c.h.b16 %v2442
  %v3931 = vunpack.c.l.b16 %v2443
  %v3932 = vunpack.c.h.b16 %v2443
  %v3933 = vunpack.c.l.b16 %v2444
  %v3934 = vunpack.c.h.b16 %v2444
  %v3935 = vunpack.c.l.b16 %v2445
  %v3936 = vunpack.c.h.b16 %v2445
  %v3937 = vunpack.c.l.b16 %v2446
  %v3938 = vunpack.c.h.b16 %v2446
  %v3939 = vunpack.c.l.b16 %v2447
  %v3940 = vunpack.c.h.b16 %v2447
  %v3941 = vunpack.c.l.b16 %v2448
  %v3942 = vunpack.c.h.b16 %v2448
  %v3943 = vunpack.c.l.b16 %v2449
  %v3944 = vunpack.c.h.b16 %v2449
  %v3945 = vunpack.c.l.b16 %v2450
  %v3946 = vunpack.c.h.b16 %v2450
  %v3947 = vunpack.c.l.b16 %v2451
  %v3948 = vunpack.c.h.b16 %v2451
  %v3949 = vunpack.c.l.b16 %v2452
  %v3950 = vunpack.c.h.b16 %v2452
  %v3951 = vunpack.c.l.b16 %v2453
  %v3952 = vunpack.c.h.b16 %v2453
  %v3953 = vunpack.c.l.b16 %v2454
  %v3954 = vunpack.c.h.b16 %v2454
  %v3955 = vunpack.c.l.b16 %v2455
  %v3956 = vunpack.c.h.b16 %v2455
  %v3957 = vunpack.c.l.b16 %v2456
  %v3958 = vunpack.c.h.b16 %v2456
  %v3959 = vunpack.c.l.b16 %v2457
  %v3960 = vunpack.c.h.b16 %v2457
  %v3961 = vunpack.c.l.b16 %v2458
  %v3962 = vunpack.c.h.b16 %v2458
  %v3963 = vunpack.c.l.b16 %v2459
  %v3964 = vunpack.c.h.b16 %v2459
  %v3965 = vunpack.c.l.b16 %v2460
  %v3966 = vunpack.c.h.b16 %v2460
  %v3967 = vunpack.c.l.b16 %v2461
  %v3968 = vunpack.c.h.b16 %v2461
  %v3969 = vunpack.c.l.b16 %v2462
  %v3970 = vunpack.c.h.b16 %v2462
  %v3971 = vunpack.c.l.b16 %v2463
  %v3972 = vunpack.c.h.b16 %v2463
  %v3973 = vunpack.c.l.b16 %v2464
  %v3974 = vunpack.c.h.b16 %v2464
  %v3975 = vunpack.c.l.b16 %v2465
  %v3976 = vunpack.c.h.b16 %v2465
  %v3977 = vunpack.c.l.b16 %v2466
  %v3978 = vunpack.c.h.b16 %v2466
  %v3979 = vunpack.c.l.b16 %v2467
  %v3980 = vunpack.c.h.b16 %v2467
  %v3981 = vunpack.c.l.b16 %v2468
  %v3982 = vunpack.c.h.b16 %v2468
  %v3983 = vunpack.c.l.b16 %v2469
  %v3984 = vunpack.c.h.b16 %v2469
  %v3985 = vunpack.c.l.b16 %v2470
  %v3986 = vunpack.c.h.b16 %v2470
  %v3987 = vunpack.c.l.b16 %v2471
  %v3988 = vunpack.c.h.b16 %v2471
  %v3989 = vunpack.c.l.b16 %v2472
  %v3990 = vunpack.c.h.b16 %v2472
  %v3991 = vunpack.c.l.b16 %v2473
  %v3992 = vunpack.c.h.b16 %v2473
  %v3993 = vunpack.c.l.b16 %v2474
  %v3994 = vunpack.c.h.b16 %v2474
  %v3995 = vunpack.c.l.b16 %v2475
  %v3996 = vunpack.c.h.b16 %v2475
  %v3997 = vunpack.c.l.b16 %v2476
  %v3998 = vunpack.c.h.b16 %v2476
  %v3999 = vunpack.c.l.b16 %v2477
  %v4000 = vunpack.c.h.b16 %v2477
  %v4001 = vunpack.c.l.b16 %v2478
  %v4002 = vunpack.c.h.b16 %v2478
  %v4003 = vunpack.c.l.b16 %v2479
  %v4004 = vunpack.c.h.b16 %v2479
  %v4005 = vunpack.c.l.b16 %v2480
  %v4006 = vunpack.c.h.b16 %v2480
  %v4007 = vunpack.c.l.b16 %v2481
  %v4008 = vunpack.c.h.b16 %v2481
  %v4009 = vunpack.c.l.b16 %v2482
  %v4010 = vunpack.c.h.b16 %v2482
  %v4011 = vunpack.c.l.b16 %v2483
  %v4012 = vunpack.c.h.b16 %v2483
  %v4013 = vunpack.c.l.b16 %v2484
  %v4014 = vunpack.c.h.b16 %v2484
  %v4015 = vunpack.c.l.b16 %v2485
  %v4016 = vunpack.c.h.b16 %v2485
  %v4017 = vunpack.c.l.b16 %v2486
  %v4018 = vunpack.c.h.b16 %v2486
  %v4019 = vunpack.c.l.b16 %v2487
  %v4020 = vunpack.c.h.b16 %v2487
  %v4021 = vunpack.c.l.b16 %v2488
  %v4022 = vunpack.c.h.b16 %v2488
  %v4023 = vunpack.c.l.b16 %v2489
  %v4024 = vunpack.c.h.b16 %v2489
  %v4025 = vunpack.c.l.b16 %v2490
  %v4026 = vunpack.c.h.b16 %v2490
  %v4027 = vunpack.c.l.b16 %v2491
  %v4028 = vunpack.c.h.b16 %v2491
  %v4029 = vunpack.c.l.b16 %v2492
  %v4030 = vunpack.c.h.b16 %v2492
  %v4031 = vunpack.c.l.b16 %v2493
  %v4032 = vunpack.c.h.b16 %v2493
  %v4033 = vunpack.c.l.b16 %v2494
  %v4034 = vunpack.c.h.b16 %v2494
  %v4035 = vunpack.c.l.b16 %v2495
  %v4036 = vunpack.c.h.b16 %v2495
  %v4037 = vunpack.c.l.b16 %v2496
  %v4038 = vunpack.c.h.b16 %v2496
  %v4039 = vpack.c.b16 %v3017, %v3015
  %v4040 = vpack.c.b16 %v3018, %v3016
  %v4041 = vpack.c.b16 %v3021, %v3019
  %v4042 = vpack.c.b16 %v3022, %v3020
  %v4043 = vpack.c.b16 %v3025, %v3023
  %v4044 = vpack.c.b16 %v3026, %v3024
  %v4045 = vpack.c.b16 %v3029, %v3027
  %v4046 = vpack.c.b16 %v3030, %v3028
  %v4047 = vpack.c.b16 %v3033, %v3031
  %v4048 = vpack.c.b16 %v3034, %v3032
  %v4049 = vpack.c.b16 %v3037, %v3035
  %v4050 = vpack.c.b16 %v3038, %v3036
  %v4051 = vpack.c.b16 %v3041, %v3039
  %v4052 = vpack.c.b16 %v3042, %v3040
  %v4053 = vpack.c.b16 %v3045, %v3043
  %v4054 = vpack.c.b16 %v3046, %v3044
  %v4055 = vpack.c.b16 %v3049, %v3047
  %v4056 = vpack.c.b16 %v3050, %v3048
  %v4057 = vpack.c.b16 %v3053, %v3051
  %v4058 = vpack.c.b16 %v3054, %v3052
  %v4059 = vpack.c.b16 %v3057, %v3055
  %v4060 = vpack.c.b16 %v3058, %v3056
  %v4061 = vpack.c.b16 %v3061, %v3059
  %v4062 = vpack.c.b16 %v3062, %v3060
  %v4063 = vpack.c.b16 %v3065, %v3063
  %v4064 = vpack.c.b16 %v3066, %v3064
  %v4065 = vpack.c.b16 %v3069, %v3067
  %v4066 = vpack.c.b16 %v3070, %v3068
  %v4067 = vpack.c.b16 %v3073, %v3071
  %v4068 = vpack.c.b16 %v3074, %v3072
  %v4069 = vpack.c.b16 %v3077, %v3075
  %v4070 = vpack.c.b16 %v3078, %v3076
  %v4071 = vpack.c.b16 %v3081, %v3079
  %v4072 = vpack.c.b16 %v3082, %v3080
  %v4073 = vpack.c.b16 %v3085, %v3083
  %v4074 = vpack.c.b16 %v3086, %v3084
  %v4075 = vpack.c.b16 %v3089, %v3087
  %v4076 = vpack.c.b16 %v3090, %v3088
  %v4077 = vpack.c.b16 %v3093, %v3091
  %v4078 = vpack.c.b16 %v3094, %v3092
  %v4079 = vpack.c.b16 %v3097, %v3095
  %v4080 = vpack.c.b16 %v3098, %v3096
  %v4081 = vpack.c.b16 %v3101, %v3099
  %v4082 = vpack.c.b16 %v3102, %v3100
  %v4083 = vpack.c.b16 %v3105, %v3103
  %v4084 = vpack.c.b16 %v3106, %v3104
  %v4085 = vpack.c.b16 %v3109, %v3107
  %v4086 = vpack.c.b16 %v3110, %v3108
  %v4087 = vpack.c.b16 %v3113, %v3111
  %v4088 = vpack.c.b16 %v3114, %v3112
  %v4089 = vpack.c.b16 %v3117, %v3115
  %v4090 = vpack.c.b16 %v3118, %v3116
  %v4091 = vpack.c.b16 %v3121, %v3119
  %v4092 = vpack.c.b16 %v3122, %v3120
  %v4093 = vpack.c.b16 %v3125, %v3123
  %v4094 = vpack.c.b16 %v3126, %v3124
  %v4095 = vpack.c.b16 %v3129, %v3127
  %v4096 = vpack.c.b16 %v3130, %v3128
  %v4097 = vpack.c.b16 %v3133, %v3131
  %v4098 = vpack.c.b16 %v3134, %v3132
  %v4099 = vpack.c.b16 %v3137, %v3135
  %v4100 = vpack.c.b16 %v3138, %v3136
  %v4101 = vpack.c.b16 %v3141, %v3139
  %v4102 = vpack.c.b16 %v3142, %v3140
  %v4103 = vpack.c.b16 %v3145, %v3143
  %v4104 = vpack.c.b16 %v3146, %v3144
  %v4105 = vpack.c.b16 %v3149, %v3147
  %v4106 = vpack.c.b16 %v3150, %v3148
  %v4107 = vpack.c.b16 %v3153, %v3151
  %v4108 = vpack.c.b16 %v3154, %v3152
  %v4109 = vpack.c.b16 %v3157, %v3155
  %v4110 = vpack.c.b16 %v3158, %v3156
  %v4111 = vpack.c.b16 %v3161, %v3159
  %v4112 = vpack.c.b16 %v3162, %v3160
  %v4113 = vpack.c.b16 %v3165, %v3163
  %v4114 = vpack.c.b16 %v3166, %v3164
  %v4115 = vpack.c.b16 %v3169, %v3167
  %v4116 = vpack.c.b16 %v3170, %v3168
  %v4117 = vpack.c.b16 %v3173, %v3171
  %v4118 = vpack.c.b16 %v3174, %v3172
  %v4119 = vpack.c.b16 %v3177, %v3175
  %v4120 = vpack.c.b16 %v3178, %v3176
  %v4121 = vpack.c.b16 %v3181, %v3179
  %v4122 = vpack.c.b16 %v3182, %v3180
  %v4123 = vpack.c.b16 %v3185, %v3183
  %v4124 = vpack.c.b16 %v3186, %v3184
  %v4125 = vpack.c.b16 %v3189, %v3187
  %v4126 = vpack.c.b16 %v3190, %v3188
  %v4127 = vpack.c.b16 %v3193, %v3191
  %v4128 = vpack.c.b16 %v3194, %v3192
  %v4129 = vpack.c.b16 %v3197, %v3195
  %v4130 = vpack.c.b16 %v3198, %v3196
  %v4131 = vpack.c.b16 %v3201, %v3199
  %v4132 = vpack.c.b16 %v3202, %v3200
  %v4133 = vpack.c.b16 %v3205, %v3203
  %v4134 = vpack.c.b16 %v3206, %v3204
  %v4135 = vpack.c.b16 %v3209, %v3207
  %v4136 = vpack.c.b16 %v3210, %v3208
  %v4137 = vpack.c.b16 %v3213, %v3211
  %v4138 = vpack.c.b16 %v3214, %v3212
  %v4139 = vpack.c.b16 %v3217, %v3215
  %v4140 = vpack.c.b16 %v3218, %v3216
  %v4141 = vpack.c.b16 %v3221, %v3219
  %v4142 = vpack.c.b16 %v3222, %v3220
  %v4143 = vpack.c.b16 %v3225, %v3223
  %v4144 = vpack.c.b16 %v3226, %v3224
  %v4145 = vpack.c.b16 %v3229, %v3227
  %v4146 = vpack.c.b16 %v3230, %v3228
  %v4147 = vpack.c.b16 %v3233, %v3231
  %v4148 = vpack.c.b16 %v3234, %v3232
  %v4149 = vpack.c.b16 %v3237, %v3235
  %v4150 = vpack.c.b16 %v3238, %v3236
  %v4151 = vpack.c.b16 %v3241, %v3239
  %v4152 = vpack.c.b16 %v3242, %v3240
  %v4153 = vpack.c.b16 %v3245, %v3243
  %v4154 = vpack.c.b16 %v3246, %v3244
  %v4155 = vpack.c.b16 %v3249, %v3247
  %v4156 = vpack.c.b16 %v3250, %v3248
  %v4157 = vpack.c.b16 %v3253, %v3251
  %v4158 = vpack.c.b16 %v3254, %v3252
  %v4159 = vpack.c.b16 %v3257, %v3255
  %v4160 = vpack.c.b16 %v3258, %v3256
  %v4161 = vpack.c.b16 %v3261, %v3259
  %v4162 = vpack.c.b16 %v3262, %v3260
  %v4163 = vpack.c.b16 %v3265, %v3263
  %v4164 = vpack.c.b16 %v3266, %v3264
  %v4165 = vpack.c.b16 %v3269, %v3267
  %v4166 = vpack.c.b16 %v3270, %v3268
  %v4167 = vpack.c.b16 %v3273, %v3271
  %v4168 = vpack.c.b16 %v3274, %v3272
  %v4169 = vpack.c.b16 %v3277, %v3275
  %v4170 = vpack.c.b16 %v3278, %v3276
  %v4171 = vpack.c.b16 %v3281, %v3279
  %v4172 = vpack.c.b16 %v3282, %v3280
  %v4173 = vpack.c.b16 %v3285, %v3283
  %v4174 = vpack.c.b16 %v3286, %v3284
  %v4175 = vpack.c.b16 %v3289, %v3287
  %v4176 = vpack.c.b16 %v3290, %v3288
  %v4177 = vpack.c.b16 %v3293, %v3291
  %v4178 = vpack.c.b16 %v3294, %v3292
  %v4179 = vpack.c.b16 %v3297, %v3295
  %v4180 = vpack.c.b16 %v3298, %v3296
  %v4181 = vpack.c.b16 %v3301, %v3299
  %v4182 = vpack.c.b16 %v3302, %v3300
  %v4183 = vpack.c.b16 %v3305, %v3303
  %v4184 = vpack.c.b16 %v3306, %v3304
  %v4185 = vpack.c.b16 %v3309, %v3307
  %v4186 = vpack.c.b16 %v3310, %v3308
  %v4187 = vpack.c.b16 %v3313, %v3311
  %v4188 = vpack.c.b16 %v3314, %v3312
  %v4189 = vpack.c.b16 %v3317, %v3315
  %v4190 = vpack.c.b16 %v3318, %v3316
  %v4191 = vpack.c.b16 %v3321, %v3319
  %v4192 = vpack.c.b16 %v3322, %v3320
  %v4193 = vpack.c.b16 %v3325, %v3323
  %v4194 = vpack.c.b16 %v3326, %v3324
  %v4195 = vpack.c.b16 %v3329, %v3327
  %v4196 = vpack.c.b16 %v3330, %v3328
  %v4197 = vpack.c.b16 %v3333, %v3331
  %v4198 = vpack.c.b16 %v3334, %v3332
  %v4199 = vpack.c.b16 %v3337, %v3335
  %v4200 = vpack.c.b16 %v3338, %v3336
  %v4201 = vpack.c.b16 %v3341, %v3339
  %v4202 = vpack.c.b16 %v3342, %v3340
  %v4203 = vpack.c.b16 %v3345, %v3343
  %v4204 = vpack.c.b16 %v3346, %v3344
  %v4205 = vpack.c.b16 %v3349, %v3347
  %v4206 = vpack.c.b16 %v3350, %v3348
  %v4207 = vpack.c.b16 %v3353, %v3351
  %v4208 = vpack.c.b16 %v3354, %v3352
  %v4209 = vpack.c.b16 %v3357, %v3355
  %v4210 = vpack.c.b16 %v3358, %v3356
  %v4211 = vpack.c.b16 %v3361, %v3359
  %v4212 = vpack.c.b16 %v3362, %v3360
  %v4213 = vpack.c.b16 %v3365, %v3363
  %v4214 = vpack.c.b16 %v3366, %v3364
  %v4215 = vpack.c.b16 %v3369, %v3367
  %v4216 = vpack.c.b16 %v3370, %v3368
  %v4217 = vpack.c.b16 %v3373, %v3371
  %v4218 = vpack.c.b16 %v3374, %v3372
  %v4219 = vpack.c.b16 %v3377, %v3375
  %v4220 = vpack.c.b16 %v3378, %v3376
  %v4221 = vpack.c.b16 %v3381, %v3379
  %v4222 = vpack.c.b16 %v3382, %v3380
  %v4223 = vpack.c.b16 %v3385, %v3383
  %v4224 = vpack.c.b16 %v3386, %v3384
  %v4225 = vpack.c.b16 %v3389, %v3387
  %v4226 = vpack.c.b16 %v3390, %v3388
  %v4227 = vpack.c.b16 %v3393, %v3391
  %v4228 = vpack.c.b16 %v3394, %v3392
  %v4229 = vpack.c.b16 %v3397, %v3395
  %v4230 = vpack.c.b16 %v3398, %v3396
  %v4231 = vpack.c.b16 %v3401, %v3399
  %v4232 = vpack.c.b16 %v3402, %v3400
  %v4233 = vpack.c.b16 %v3405, %v3403
  %v4234 = vpack.c.b16 %v3406, %v3404
  %v4235 = vpack.c.b16 %v3409, %v3407
  %v4236 = vpack.c.b16 %v3410, %v3408
  %v4237 = vpack.c.b16 %v3413, %v3411
  %v4238 = vpack.c.b16 %v3414, %v3412
  %v4239 = vpack.c.b16 %v3417, %v3415
  %v4240 = vpack.c.b16 %v3418, %v3416
  %v4241 = vpack.c.b16 %v3421, %v3419
  %v4242 = vpack.c.b16 %v3422, %v3420
  %v4243 = vpack.c.b16 %v3425, %v3423
  %v4244 = vpack.c.b16 %v3426, %v3424
  %v4245 = vpack.c.b16 %v3429, %v3427
  %v4246 = vpack.c.b16 %v3430, %v3428
  %v4247 = vpack.c.b16 %v3433, %v3431
  %v4248 = vpack.c.b16 %v3434, %v3432
  %v4249 = vpack.c.b16 %v3437, %v3435
  %v4250 = vpack.c.b16 %v3438, %v3436
  %v4251 = vpack.c.b16 %v3441, %v3439
  %v4252 = vpack.c.b16 %v3442, %v3440
  %v4253 = vpack.c.b16 %v3445, %v3443
  %v4254 = vpack.c.b16 %v3446, %v3444
  %v4255 = vpack.c.b16 %v3449, %v3447
  %v4256 = vpack.c.b16 %v3450, %v3448
  %v4257 = vpack.c.b16 %v3453, %v3451
  %v4258 = vpack.c.b16 %v3454, %v3452
  %v4259 = vpack.c.b16 %v3457, %v3455
  %v4260 = vpack.c.b16 %v3458, %v3456
  %v4261 = vpack.c.b16 %v3461, %v3459
  %v4262 = vpack.c.b16 %v3462, %v3460
  %v4263 = vpack.c.b16 %v3465, %v3463
  %v4264 = vpack.c.b16 %v3466, %v3464
  %v4265 = vpack.c.b16 %v3469, %v3467
  %v4266 = vpack.c.b16 %v3470, %v3468
  %v4267 = vpack.c.b16 %v3473, %v3471
  %v4268 = vpack.c.b16 %v3474, %v3472
  %v4269 = vpack.c.b16 %v3477, %v3475
  %v4270 = vpack.c.b16 %v3478, %v3476
  %v4271 = vpack.c.b16 %v3481, %v3479
  %v4272 = vpack.c.b16 %v3482, %v3480
  %v4273 = vpack.c.b16 %v3485, %v3483
  %v4274 = vpack.c.b16 %v3486, %v3484
  %v4275 = vpack.c.b16 %v3489, %v3487
  %v4276 = vpack.c.b16 %v3490, %v3488
  %v4277 = vpack.c.b16 %v3493, %v3491
  %v4278 = vpack.c.b16 %v3494, %v3492
  %v4279 = vpack.c.b16 %v3497, %v3495
  %v4280 = vpack.c.b16 %v3498, %v3496
  %v4281 = vpack.c.b16 %v3501, %v3499
  %v4282 = vpack.c.b16 %v3502, %v3500
  %v4283 = vpack.c.b16 %v3505, %v3503
  %v4284 = vpack.c.b16 %v3506, %v3504
  %v4285 = vpack.c.b16 %v3509, %v3507
  %v4286 = vpack.c.b16 %v3510, %v3508
  %v4287 = vpack.c.b16 %v3513, %v3511
  %v4288 = vpack.c.b16 %v3514, %v3512
  %v4289 = vpack.c.b16 %v3517, %v3515
  %v4290 = vpack.c.b16 %v3518, %v3516
  %v4291 = vpack.c.b16 %v3521, %v3519
  %v4292 = vpack.c.b16 %v3522, %v3520
  %v4293 = vpack.c.b16 %v3525, %v3523
  %v4294 = vpack.c.b16 %v3526, %v3524
  %v4295 = vpack.c.b16 %v3529, %v3527
  %v4296 = vpack.c.b16 %v3530, %v3528
  %v4297 = vpack.c.b16 %v3533, %v3531
  %v4298 = vpack.c.b16 %v3534, %v3532
  %v4299 = vpack.c.b16 %v3537, %v3535
  %v4300 = vpack.c.b16 %v3538, %v3536
  %v4301 = vpack.c.b16 %v3541, %v3539
  %v4302 = vpack.c.b16 %v3542, %v3540
  %v4303 = vpack.c.b16 %v3545, %v3543
  %v4304 = vpack.c.b16 %v3546, %v3544
  %v4305 = vpack.c.b16 %v3549, %v3547
  %v4306 = vpack.c.b16 %v3550, %v3548
  %v4307 = vpack.c.b16 %v3553, %v3551
  %v4308 = vpack.c.b16 %v3554, %v3552
  %v4309 = vpack.c.b16 %v3557, %v3555
  %v4310 = vpack.c.b16 %v3558, %v3556
  %v4311 = vpack.c.b16 %v3561, %v3559
  %v4312 = vpack.c.b16 %v3562, %v3560
  %v4313 = vpack.c.b16 %v3565, %v3563
  %v4314 = vpack.c.b16 %v3566, %v3564
  %v4315 = vpack.c.b16 %v3569, %v3567
  %v4316 = vpack.c.b16 %v3570, %v3568
  %v4317 = vpack.c.b16 %v3573, %v3571
  %v4318 = vpack.c.b16 %v3574, %v3572
  %v4319 = vpack.c.b16 %v3577, %v3575
  %v4320 = vpack.c.b16 %v3578, %v3576
  %v4321 = vpack.c.b16 %v3581, %v3579
  %v4322 = vpack.c.b16 %v3582, %v3580
  %v4323 = vpack.c.b16 %v3585, %v3583
  %v4324 = vpack.c.b16 %v3586, %v3584
  %v4325 = vpack.c.b16 %v3589, %v3587
  %v4326 = vpack.c.b16 %v3590, %v3588
  %v4327 = vpack.c.b16 %v3593, %v3591
  %v4328 = vpack.c.b16 %v3594, %v3592
  %v4329 = vpack.c.b16 %v3597, %v3595
  %v4330 = vpack.c.b16 %v3598, %v3596
  %v4331 = vpack.c.b16 %v3601, %v3599
  %v4332 = vpack.c.b16 %v3602, %v3600
  %v4333 = vpack.c.b16 %v3605, %v3603
  %v4334 = vpack.c.b16 %v3606, %v3604
  %v4335 = vpack.c.b16 %v3609, %v3607
  %v4336 = vpack.c.b16 %v3610, %v3608
  %v4337 = vpack.c.b16 %v3613, %v3611
  %v4338 = vpack.c.b16 %v3614, %v3612
  %v4339 = vpack.c.b16 %v3617, %v3615
  %v4340 = vpack.c.b16 %v3618, %v3616
  %v4341 = vpack.c.b16 %v3621, %v3619
  %v4342 = vpack.c.b16 %v3622, %v3620
  %v4343 = vpack.c.b16 %v3625, %v3623
  %v4344 = vpack.c.b16 %v3626, %v3624
  %v4345 = vpack.c.b16 %v3629, %v3627
  %v4346 = vpack.c.b16 %v3630, %v3628
  %v4347 = vpack.c.b16 %v3633, %v3631
  %v4348 = vpack.c.b16 %v3634, %v3632
  %v4349 = vpack.c.b16 %v3637, %v3635
  %v4350 = vpack.c.b16 %v3638, %v3636
  %v4351 = vpack.c.b16 %v3641, %v3639
  %v4352 = vpack.c.b16 %v3642, %v3640
  %v4353 = vpack.c.b16 %v3645, %v3643
  %v4354 = vpack.c.b16 %v3646, %v3644
  %v4355 = vpack.c.b16 %v3649, %v3647
  %v4356 = vpack.c.b16 %v3650, %v3648
  %v4357 = vpack.c.b16 %v3653, %v3651
  %v4358 = vpack.c.b16 %v3654, %v3652
  %v4359 = vpack.c.b16 %v3657, %v3655
  %v4360 = vpack.c.b16 %v3658, %v3656
  %v4361 = vpack.c.b16 %v3661, %v3659
  %v4362 = vpack.c.b16 %v3662, %v3660
  %v4363 = vpack.c.b16 %v3665, %v3663
  %v4364 = vpack.c.b16 %v3666, %v3664
  %v4365 = vpack.c.b16 %v3669, %v3667
  %v4366 = vpack.c.b16 %v3670, %v3668
  %v4367 = vpack.c.b16 %v3673, %v3671
  %v4368 = vpack.c.b16 %v3674, %v3672
  %v4369 = vpack.c.b16 %v3677, %v3675
  %v4370 = vpack.c.b16 %v3678, %v3676
  %v4371 = vpack.c.b16 %v3681, %v3679
  %v4372 = vpack.c.b16 %v3682, %v3680
  %v4373 = vpack.c.b16 %v3685, %v3683
  %v4374 = vpack.c.b16 %v3686, %v3684
  %v4375 = vpack.c.b16 %v3689, %v3687
  %v4376 = vpack.c.b16 %v3690, %v3688
  %v4377 = vpack.c.b16 %v3693, %v3691
  %v4378 = vpack.c.b16 %v3694, %v3692
  %v4379 = vpack.c.b16 %v3697, %v3695
  %v4380 = vpack.c.b16 %v3698, %v3696
  %v4381 = vpack.c.b16 %v3701, %v3699
  %v4382 = vpack.c.b16 %v3702, %v3700
  %v4383 = vpack.c.b16 %v3705, %v3703
  %v4384 = vpack.c.b16 %v3706, %v3704
  %v4385 = vpack.c.b16 %v3709, %v3707
  %v4386 = vpack.c.b16 %v3710, %v3708
  %v4387 = vpack.c.b16 %v3713, %v3711
  %v4388 = vpack.c.b16 %v3714, %v3712
  %v4389 = vpack.c.b16 %v3717, %v3715
  %v4390 = vpack.c.b16 %v3718, %v3716
  %v4391 = vpack.c.b16 %v3721, %v3719
  %v4392 = vpack.c.b16 %v3722, %v3720
  %v4393 = vpack.c.b16 %v3725, %v3723
  %v4394 = vpack.c.b16 %v3726, %v3724
  %v4395 = vpack.c.b16 %v3729, %v3727
  %v4396 = vpack.c.b16 %v3730, %v3728
  %v4397 = vpack.c.b16 %v3733, %v3731
  %v4398 = vpack.c.b16 %v3734, %v3732
  %v4399 = vpack.c.b16 %v3737, %v3735
  %v4400 = vpack.c.b16 %v3738, %v3736
  %v4401 = vpack.c.b16 %v3741, %v3739
  %v4402 = vpack.c.b16 %v3742, %v3740
  %v4403 = vpack.c.b16 %v3745, %v3743
  %v4404 = vpack.c.b16 %v3746, %v3744
  %v4405 = vpack.c.b16 %v3749, %v3747
  %v4406 = vpack.c.b16 %v3750, %v3748
  %v4407 = vpack.c.b16 %v3753, %v3751
  %v4408 = vpack.c.b16 %v3754, %v3752
  %v4409 = vpack.c.b16 %v3757, %v3755
  %v4410 = vpack.c.b16 %v3758, %v3756
  %v4411 = vpack.c.b16 %v3761, %v3759
  %v4412 = vpack.c.b16 %v3762, %v3760
  %v4413 = vpack.c.b16 %v3765, %v3763
  %v4414 = vpack.c.b16 %v3766, %v3764
  %v4415 = vpack.c.b16 %v3769, %v3767
  %v4416 = vpack.c.b16 %v3770, %v3768
  %v4417 = vpack.c.b16 %v3773, %v3771
  %v4418 = vpack.c.b16 %v3774, %v3772
  %v4419 = vpack.c.b16 %v3777, %v3775
  %v4420 = vpack.c.b16 %v3778, %v3776
  %v4421 = vpack.c.b16 %v3781, %v3779
  %v4422 = vpack.c.b16 %v3782, %v3780
  %v4423 = vpack.c.b16 %v3785, %v3783
  %v4424 = vpack.c.b16 %v3786, %v3784
  %v4425 = vpack.c.b16 %v3789, %v3787
  %v4426 = vpack.c.b16 %v3790, %v3788
  %v4427 = vpack.c.b16 %v3793, %v3791
  %v4428 = vpack.c.b16 %v3794, %v3792
  %v4429 = vpack.c.b16 %v3797, %v3795
  %v4430 = vpack.c.b16 %v3798, %v3796
  %v4431 = vpack.c.b16 %v3801, %v3799
  %v4432 = vpack.c.b16 %v3802, %v3800
  %v4433 = vpack.c.b16 %v3805, %v3803
  %v4434 = vpack.c.b16 %v3806, %v3804
  %v4435 = vpack.c.b16 %v3809, %v3807
  %v4436 = vpack.c.b16 %v3810, %v3808
  %v4437 = vpack.c.b16 %v3813, %v3811
  %v4438 = vpack.c.b16 %v3814, %v3812
  %v4439 = vpack.c.b16 %v3817, %v3815
  %v4440 = vpack.c.b16 %v3818, %v3816
  %v4441 = vpack.c.b16 %v3821, %v3819
  %v4442 = vpack.c.b16 %v3822, %v3820
  %v4443 = vpack.c.b16 %v3825, %v3823
  %v4444 = vpack.c.b16 %v3826, %v3824
  %v4445 = vpack.c.b16 %v3829, %v3827
  %v4446 = vpack.c.b16 %v3830, %v3828
  %v4447 = vpack.c.b16 %v3833, %v3831
  %v4448 = vpack.c.b16 %v3834, %v3832
  %v4449 = vpack.c.b16 %v3837, %v3835
  %v4450 = vpack.c.b16 %v3838, %v3836
  %v4451 = vpack.c.b16 %v3841, %v3839
  %v4452 = vpack.c.b16 %v3842, %v3840
  %v4453 = vpack.c.b16 %v3845, %v3843
  %v4454 = vpack.c.b16 %v3846, %v3844
  %v4455 = vpack.c.b16 %v3849, %v3847
  %v4456 = vpack.c.b16 %v3850, %v3848
  %v4457 = vpack.c.b16 %v3853, %v3851
  %v4458 = vpack.c.b16 %v3854, %v3852
  %v4459 = vpack.c.b16 %v3857, %v3855
  %v4460 = vpack.c.b16 %v3858, %v3856
  %v4461 = vpack.c.b16 %v3861, %v3859
  %v4462 = vpack.c.b16 %v3862, %v3860
  %v4463 = vpack.c.b16 %v3865, %v3863
  %v4464 = vpack.c.b16 %v3866, %v3864
  %v4465 = vpack.c.b16 %v3869, %v3867
  %v4466 = vpack.c.b16 %v3870, %v3868
  %v4467 = vpack.c.b16 %v3873, %v3871
  %v4468 = vpack.c.b16 %v3874, %v3872
  %v4469 = vpack.c.b16 %v3877, %v3875
  %v4470 = vpack.c.b16 %v3878, %v3876
  %v4471 = vpack.c.b16 %v3881, %v3879
  %v4472 = vpack.c.b16 %v3882, %v3880
  %v4473 = vpack.c.b16 %v3885, %v3883
  %v4474 = vpack.c.b16 %v3886, %v3884
  %v4475 = vpack.c.b16 %v3889, %v3887
  %v4476 = vpack.c.b16 %v3890, %v3888
  %v4477 = vpack.c.b16 %v3893, %v3891
  %v4478 = vpack.c.b16 %v3894, %v3892
  %v4479 = vpack.c.b16 %v3897, %v3895
  %v4480 = vpack.c.b16 %v3898, %v3896
  %v4481 = vpack.c.b16 %v3901, %v3899
  %v4482 = vpack.c.b16 %v3902, %v3900
  %v4483 = vpack.c.b16 %v3905, %v3903
  %v4484 = vpack.c.b16 %v3906, %v3904
  %v4485 = vpack.c.b16 %v3909, %v3907
  %v4486 = vpack.c.b16 %v3910, %v3908
  %v4487 = vpack.c.b16 %v3913, %v3911
  %v4488 = vpack.c.b16 %v3914, %v3912
  %v4489 = vpack.c.b16 %v3917, %v3915
  %v4490 = vpack.c.b16 %v3918, %v3916
  %v4491 = vpack.c.b16 %v3921, %v3919
  %v4492 = vpack.c.b16 %v3922, %v3920
  %v4493 = vpack.c.b16 %v3925, %v3923
  %v4494 = vpack.c.b16 %v3926, %v3924
  %v4495 = vpack.c.b16 %v3929, %v3927
  %v4496 = vpack.c.b16 %v3930, %v3928
  %v4497 = vpack.c.b16 %v3933, %v3931
  %v4498 = vpack.c.b16 %v3934, %v3932
  %v4499 = vpack.c.b16 %v3937, %v3935
  %v4500 = vpack.c.b16 %v3938, %v3936
  %v4501 = vpack.c.b16 %v3941, %v3939
  %v4502 = vpack.c.b16 %v3942, %v3940
  %v4503 = vpack.c.b16 %v3945, %v3943
  %v4504 = vpack.c.b16 %v3946, %v3944
  %v4505 = vpack.c.b16 %v3949, %v3947
  %v4506 = vpack.c.b16 %v3950, %v3948
  %v4507 = vpack.c.b16 %v3953, %v3951
  %v4508 = vpack.c.b16 %v3954, %v3952
  %v4509 = vpack.c.b16 %v3957, %v3955
  %v4510 = vpack.c.b16 %v3958, %v3956
  %v4511 = vpack.c.b16 %v3961, %v3959
  %v4512 = vpack.c.b16 %v3962, %v3960
  %v4513 = vpack.c.b16 %v3965, %v3963
  %v4514 = vpack.c.b16 %v3966, %v3964
  %v4515 = vpack.c.b16 %v3969, %v3967
  %v4516 = vpack.c.b16 %v3970, %v3968
  %v4517 = vpack.c.b16 %v3973, %v3971
  %v4518 = vpack.c.b16 %v3974, %v3972
  %v4519 = vpack.c.b16 %v3977, %v3975
  %v4520 = vpack.c.b16 %v3978, %v3976
  %v4521 = vpack.c.b16 %v3981, %v3979
  %v4522 = vpack.c.b16 %v3982, %v3980
  %v4523 = vpack.c.b16 %v3985, %v3983
  %v4524 = vpack.c.b16 %v3986, %v3984
  %v4525 = vpack.c.b16 %v3989, %v3987
  %v4526 = vpack.c.b16 %v3990, %v3988
  %v4527 = vpack.c.b16 %v3993, %v3991
  %v4528 = vpack.c.b16 %v3994, %v3992
  %v4529 = vpack.c.b16 %v3997, %v3995
  %v4530 = vpack.c.b16 %v3998, %v3996
  %v4531 = vpack.c.b16 %v4001, %v3999
  %v4532 = vpack.c.b16 %v4002, %v4000
  %v4533 = vpack.c.b16 %v4005, %v4003
  %v4534 = vpack.c.b16 %v4006, %v4004
  %v4535 = vpack.c.b16 %v4009, %v4007
  %v4536 = vpack.c.b16 %v4010, %v4008
  %v4537 = vpack.c.b16 %v4013, %v4011
  %v4538 = vpack.c.b16 %v4014, %v4012
  %v4539 = vpack.c.b16 %v4017, %v4015
  %v4540 = vpack.c.b16 %v4018, %v4016
  %v4541 = vpack.c.b16 %v4021, %v4019
  %v4542 = vpack.c.b16 %v4022, %v4020
  %v4543 = vpack.c.b16 %v4025, %v4023
  %v4544 = vpack.c.b16 %v4026, %v4024
  %v4545 = vpack.c.b16 %v4029, %v4027
  %v4546 = vpack.c.b16 %v4030, %v4028
  %v4547 = vpack.c.b16 %v4033, %v4031
  %v4548 = vpack.c.b16 %v4034, %v4032
  %v4549 = vpack.c.b16 %v4037, %v4035
  %v4550 = vpack.c.b16 %v4038, %v4036
  %5063 = vmatpush.bf16.msra.mxu0 %v4053
  %5064 = vmatpush.bf16.msra.mxu0 %v4051
  %5065 = vmatpush.bf16.msra.mxu0 %v4049
  %5066 = vmatpush.bf16.msra.mxu0 %v4047
  %5067 = vmatpush.bf16.msra.mxu0 %v4045
  %5068 = vmatpush.bf16.msra.mxu0 %v4043
  %5069 = vmatpush.bf16.msra.mxu0 %v4041
  %5070 = vmatpush.bf16.msra.mxu0 %v4039
  %5071 = vmatmul.bf16.gmra.mxu0 %v1953
  %v5072 = vpop.f32.mrf.mxu0
  %v5073 = vadd.f32 %v2499, %v5072
  %v5074 = vpop.f32.mrf.mxu0
  %5075 = vdwg.mxu0
  %5076 = vmatpush.bf16.msra.mxu0 %v4069
  %5077 = vmatpush.bf16.msra.mxu0 %v4067
  %5078 = vmatpush.bf16.msra.mxu0 %v4065
  %5079 = vmatpush.bf16.msra.mxu0 %v4063
  %5080 = vmatpush.bf16.msra.mxu0 %v4061
  %5081 = vmatpush.bf16.msra.mxu0 %v4059
  %5082 = vmatpush.bf16.msra.mxu0 %v4057
  %5083 = vmatpush.bf16.msra.mxu0 %v4055
  %5084 = vmatmul.bf16.gmra.mxu0 %v1954
  %v5085 = vpop.f32.mrf.mxu0
  %v5086 = vadd.f32 %v5073, %v5085
  %v5087 = vpop.f32.mrf.mxu0
  %5088 = vdwg.mxu0
  %5089 = vmatpush.bf16.msra.mxu0 %v4085
  %5090 = vmatpush.bf16.msra.mxu0 %v4083
  %5091 = vmatpush.bf16.msra.mxu0 %v4081
  %5092 = vmatpush.bf16.msra.mxu0 %v4079
  %5093 = vmatpush.bf16.msra.mxu0 %v4077
  %5094 = vmatpush.bf16.msra.mxu0 %v4075
  %5095 = vmatpush.bf16.msra.mxu0 %v4073
  %5096 = vmatpush.bf16.msra.mxu0 %v4071
  %5097 = vmatmul.bf16.gmra.mxu0 %v1955
  %v5098 = vpop.f32.mrf.mxu0
  %v5099 = vadd.f32 %v5086, %v5098
  %v5100 = vpop.f32.mrf.mxu0
  %5101 = vdwg.mxu0
  %5102 = vmatpush.bf16.msra.mxu0 %v4101
  %5103 = vmatpush.bf16.msra.mxu0 %v4099
  %5104 = vmatpush.bf16.msra.mxu0 %v4097
  %5105 = vmatpush.bf16.msra.mxu0 %v4095
  %5106 = vmatpush.bf16.msra.mxu0 %v4093
  %5107 = vmatpush.bf16.msra.mxu0 %v4091
  %5108 = vmatpush.bf16.msra.mxu0 %v4089
  %5109 = vmatpush.bf16.msra.mxu0 %v4087
  %5110 = vmatmul.bf16.gmra.mxu0 %v1956
  %v5111 = vpop.f32.mrf.mxu0
  %v5112 = vadd.f32 %v5099, %v5111
  %v5113 = vpop.f32.mrf.mxu0
  %5114 = vdwg.mxu0
  %5115 = vmatpush.bf16.msra.mxu0 %v4117
  %5116 = vmatpush.bf16.msra.mxu0 %v4115
  %5117 = vmatpush.bf16.msra.mxu0 %v4113
  %5118 = vmatpush.bf16.msra.mxu0 %v4111
  %5119 = vmatpush.bf16.msra.mxu0 %v4109
  %5120 = vmatpush.bf16.msra.mxu0 %v4107
  %5121 = vmatpush.bf16.msra.mxu0 %v4105
  %5122 = vmatpush.bf16.msra.mxu0 %v4103
  %5123 = vmatmul.bf16.gmra.mxu0 %v1957
  %v5124 = vpop.f32.mrf.mxu0
  %v5125 = vadd.f32 %v5112, %v5124
  %v5126 = vpop.f32.mrf.mxu0
  %5127 = vdwg.mxu0
  %5128 = vmatpush.bf16.msra.mxu0 %v4133
  %5129 = vmatpush.bf16.msra.mxu0 %v4131
  %5130 = vmatpush.bf16.msra.mxu0 %v4129
  %5131 = vmatpush.bf16.msra.mxu0 %v4127
  %5132 = vmatpush.bf16.msra.mxu0 %v4125
  %5133 = vmatpush.bf16.msra.mxu0 %v4123
  %5134 = vmatpush.bf16.msra.mxu0 %v4121
  %5135 = vmatpush.bf16.msra.mxu0 %v4119
  %5136 = vmatmul.bf16.gmra.mxu0 %v1958
  %v5137 = vpop.f32.mrf.mxu0
  %v5138 = vadd.f32 %v5125, %v5137
  %v5139 = vpop.f32.mrf.mxu0
  %5140 = vdwg.mxu0
  %5141 = vmatpush.bf16.msra.mxu0 %v4149
  %5142 = vmatpush.bf16.msra.mxu0 %v4147
  %5143 = vmatpush.bf16.msra.mxu0 %v4145
  %5144 = vmatpush.bf16.msra.mxu0 %v4143
  %5145 = vmatpush.bf16.msra.mxu0 %v4141
  %5146 = vmatpush.bf16.msra.mxu0 %v4139
  %5147 = vmatpush.bf16.msra.mxu0 %v4137
  %5148 = vmatpush.bf16.msra.mxu0 %v4135
  %5149 = vmatmul.bf16.gmra.mxu0 %v1959
  %v5150 = vpop.f32.mrf.mxu0
  %v5151 = vadd.f32 %v5138, %v5150
  %v5152 = vpop.f32.mrf.mxu0
  %5153 = vdwg.mxu0
  %5154 = vmatpush.bf16.msra.mxu0 %v4165
  %5155 = vmatpush.bf16.msra.mxu0 %v4163
  %5156 = vmatpush.bf16.msra.mxu0 %v4161
  %5157 = vmatpush.bf16.msra.mxu0 %v4159
  %5158 = vmatpush.bf16.msra.mxu0 %v4157
  %5159 = vmatpush.bf16.msra.mxu0 %v4155
  %5160 = vmatpush.bf16.msra.mxu0 %v4153
  %5161 = vmatpush.bf16.msra.mxu0 %v4151
  %5162 = vmatmul.bf16.gmra.mxu0 %v1960
  %v5163 = vpop.f32.mrf.mxu0
  %v5164 = vadd.f32 %v5151, %v5163
  %v5165 = vpop.f32.mrf.mxu0
  %5166 = vdwg.mxu0
  %5167 = vmatpush.bf16.msra.mxu0 %v4181
  %5168 = vmatpush.bf16.msra.mxu0 %v4179
  %5169 = vmatpush.bf16.msra.mxu0 %v4177
  %5170 = vmatpush.bf16.msra.mxu0 %v4175
  %5171 = vmatpush.bf16.msra.mxu0 %v4173
  %5172 = vmatpush.bf16.msra.mxu0 %v4171
  %5173 = vmatpush.bf16.msra.mxu0 %v4169
  %5174 = vmatpush.bf16.msra.mxu0 %v4167
  %5175 = vmatmul.bf16.gmra.mxu0 %v1961
  %v5176 = vpop.f32.mrf.mxu0
  %v5177 = vadd.f32 %v5164, %v5176
  %v5178 = vpop.f32.mrf.mxu0
  %5179 = vdwg.mxu0
  %5180 = vmatpush.bf16.msra.mxu0 %v4197
  %5181 = vmatpush.bf16.msra.mxu0 %v4195
  %5182 = vmatpush.bf16.msra.mxu0 %v4193
  %5183 = vmatpush.bf16.msra.mxu0 %v4191
  %5184 = vmatpush.bf16.msra.mxu0 %v4189
  %5185 = vmatpush.bf16.msra.mxu0 %v4187
  %5186 = vmatpush.bf16.msra.mxu0 %v4185
  %5187 = vmatpush.bf16.msra.mxu0 %v4183
  %5188 = vmatmul.bf16.gmra.mxu0 %v1962
  %v5189 = vpop.f32.mrf.mxu0
  %v5190 = vadd.f32 %v5177, %v5189
  %v5191 = vpop.f32.mrf.mxu0
  %5192 = vdwg.mxu0
  %5193 = vmatpush.bf16.msra.mxu0 %v4213
  %5194 = vmatpush.bf16.msra.mxu0 %v4211
  %5195 = vmatpush.bf16.msra.mxu0 %v4209
  %5196 = vmatpush.bf16.msra.mxu0 %v4207
  %5197 = vmatpush.bf16.msra.mxu0 %v4205
  %5198 = vmatpush.bf16.msra.mxu0 %v4203
  %5199 = vmatpush.bf16.msra.mxu0 %v4201
  %5200 = vmatpush.bf16.msra.mxu0 %v4199
  %5201 = vmatmul.bf16.gmra.mxu0 %v1963
  %v5202 = vpop.f32.mrf.mxu0
  %v5203 = vadd.f32 %v5190, %v5202
  %v5204 = vpop.f32.mrf.mxu0
  %5205 = vdwg.mxu0
  %5206 = vmatpush.bf16.msra.mxu0 %v4229
  %5207 = vmatpush.bf16.msra.mxu0 %v4227
  %5208 = vmatpush.bf16.msra.mxu0 %v4225
  %5209 = vmatpush.bf16.msra.mxu0 %v4223
  %5210 = vmatpush.bf16.msra.mxu0 %v4221
  %5211 = vmatpush.bf16.msra.mxu0 %v4219
  %5212 = vmatpush.bf16.msra.mxu0 %v4217
  %5213 = vmatpush.bf16.msra.mxu0 %v4215
  %5214 = vmatmul.bf16.gmra.mxu0 %v1964
  %v5215 = vpop.f32.mrf.mxu0
  %v5216 = vadd.f32 %v5203, %v5215
  %v5217 = vpop.f32.mrf.mxu0
  %5218 = vdwg.mxu0
  %5219 = vmatpush.bf16.msra.mxu0 %v4245
  %5220 = vmatpush.bf16.msra.mxu0 %v4243
  %5221 = vmatpush.bf16.msra.mxu0 %v4241
  %5222 = vmatpush.bf16.msra.mxu0 %v4239
  %5223 = vmatpush.bf16.msra.mxu0 %v4237
  %5224 = vmatpush.bf16.msra.mxu0 %v4235
  %5225 = vmatpush.bf16.msra.mxu0 %v4233
  %5226 = vmatpush.bf16.msra.mxu0 %v4231
  %5227 = vmatmul.bf16.gmra.mxu0 %v1965
  %v5228 = vpop.f32.mrf.mxu0
  %v5229 = vadd.f32 %v5216, %v5228
  %v5230 = vpop.f32.mrf.mxu0
  %5231 = vdwg.mxu0
  %5232 = vmatpush.bf16.msra.mxu0 %v4261
  %5233 = vmatpush.bf16.msra.mxu0 %v4259
  %5234 = vmatpush.bf16.msra.mxu0 %v4257
  %5235 = vmatpush.bf16.msra.mxu0 %v4255
  %5236 = vmatpush.bf16.msra.mxu0 %v4253
  %5237 = vmatpush.bf16.msra.mxu0 %v4251
  %5238 = vmatpush.bf16.msra.mxu0 %v4249
  %5239 = vmatpush.bf16.msra.mxu0 %v4247
  %5240 = vmatmul.bf16.gmra.mxu0 %v1966
  %v5241 = vpop.f32.mrf.mxu0
  %v5242 = vadd.f32 %v5229, %v5241
  %v5243 = vpop.f32.mrf.mxu0
  %5244 = vdwg.mxu0
  %5245 = vmatpush.bf16.msra.mxu0 %v4277
  %5246 = vmatpush.bf16.msra.mxu0 %v4275
  %5247 = vmatpush.bf16.msra.mxu0 %v4273
  %5248 = vmatpush.bf16.msra.mxu0 %v4271
  %5249 = vmatpush.bf16.msra.mxu0 %v4269
  %5250 = vmatpush.bf16.msra.mxu0 %v4267
  %5251 = vmatpush.bf16.msra.mxu0 %v4265
  %5252 = vmatpush.bf16.msra.mxu0 %v4263
  %5253 = vmatmul.bf16.gmra.mxu0 %v1967
  %v5254 = vpop.f32.mrf.mxu0
  %v5255 = vadd.f32 %v5242, %v5254
  %v5256 = vpop.f32.mrf.mxu0
  %5257 = vdwg.mxu0
  %5258 = vmatpush.bf16.msra.mxu0 %v4293
  %5259 = vmatpush.bf16.msra.mxu0 %v4291
  %5260 = vmatpush.bf16.msra.mxu0 %v4289
  %5261 = vmatpush.bf16.msra.mxu0 %v4287
  %5262 = vmatpush.bf16.msra.mxu0 %v4285
  %5263 = vmatpush.bf16.msra.mxu0 %v4283
  %5264 = vmatpush.bf16.msra.mxu0 %v4281
  %5265 = vmatpush.bf16.msra.mxu0 %v4279
  %5266 = vmatmul.bf16.gmra.mxu0 %v1968
  %v5267 = vpop.f32.mrf.mxu0
  %v5268 = vadd.f32 %v5255, %v5267
  %v5269 = vpop.f32.mrf.mxu0
  %5270 = vdwg.mxu0
  %5271 = vmatpush.bf16.msra.mxu0 %v4309
  %5272 = vmatpush.bf16.msra.mxu0 %v4307
  %5273 = vmatpush.bf16.msra.mxu0 %v4305
  %5274 = vmatpush.bf16.msra.mxu0 %v4303
  %5275 = vmatpush.bf16.msra.mxu0 %v4301
  %5276 = vmatpush.bf16.msra.mxu0 %v4299
  %5277 = vmatpush.bf16.msra.mxu0 %v4297
  %5278 = vmatpush.bf16.msra.mxu0 %v4295
  %5279 = vmatmul.bf16.gmra.mxu0 %v1969
  %v5280 = vpop.f32.mrf.mxu0
  %v5281 = vadd.f32 %v5268, %v5280
  %v5282 = vpop.f32.mrf.mxu0
  %5283 = vdwg.mxu0
  %5284 = vmatpush.bf16.msra.mxu0 %v4325
  %5285 = vmatpush.bf16.msra.mxu0 %v4323
  %5286 = vmatpush.bf16.msra.mxu0 %v4321
  %5287 = vmatpush.bf16.msra.mxu0 %v4319
  %5288 = vmatpush.bf16.msra.mxu0 %v4317
  %5289 = vmatpush.bf16.msra.mxu0 %v4315
  %5290 = vmatpush.bf16.msra.mxu0 %v4313
  %5291 = vmatpush.bf16.msra.mxu0 %v4311
  %5292 = vmatmul.bf16.gmra.mxu0 %v1970
  %v5293 = vpop.f32.mrf.mxu0
  %v5294 = vadd.f32 %v5281, %v5293
  %v5295 = vpop.f32.mrf.mxu0
  %5296 = vdwg.mxu0
  %5297 = vmatpush.bf16.msra.mxu0 %v4341
  %5298 = vmatpush.bf16.msra.mxu0 %v4339
  %5299 = vmatpush.bf16.msra.mxu0 %v4337
  %5300 = vmatpush.bf16.msra.mxu0 %v4335
  %5301 = vmatpush.bf16.msra.mxu0 %v4333
  %5302 = vmatpush.bf16.msra.mxu0 %v4331
  %5303 = vmatpush.bf16.msra.mxu0 %v4329
  %5304 = vmatpush.bf16.msra.mxu0 %v4327
  %5305 = vmatmul.bf16.gmra.mxu0 %v1971
  %v5306 = vpop.f32.mrf.mxu0
  %v5307 = vadd.f32 %v5294, %v5306
  %v5308 = vpop.f32.mrf.mxu0
  %5309 = vdwg.mxu0
  %5310 = vmatpush.bf16.msra.mxu0 %v4357
  %5311 = vmatpush.bf16.msra.mxu0 %v4355
  %5312 = vmatpush.bf16.msra.mxu0 %v4353
  %5313 = vmatpush.bf16.msra.mxu0 %v4351
  %5314 = vmatpush.bf16.msra.mxu0 %v4349
  %5315 = vmatpush.bf16.msra.mxu0 %v4347
  %5316 = vmatpush.bf16.msra.mxu0 %v4345
  %5317 = vmatpush.bf16.msra.mxu0 %v4343
  %5318 = vmatmul.bf16.gmra.mxu0 %v1972
  %v5319 = vpop.f32.mrf.mxu0
  %v5320 = vadd.f32 %v5307, %v5319
  %v5321 = vpop.f32.mrf.mxu0
  %5322 = vdwg.mxu0
  %5323 = vmatpush.bf16.msra.mxu0 %v4373
  %5324 = vmatpush.bf16.msra.mxu0 %v4371
  %5325 = vmatpush.bf16.msra.mxu0 %v4369
  %5326 = vmatpush.bf16.msra.mxu0 %v4367
  %5327 = vmatpush.bf16.msra.mxu0 %v4365
  %5328 = vmatpush.bf16.msra.mxu0 %v4363
  %5329 = vmatpush.bf16.msra.mxu0 %v4361
  %5330 = vmatpush.bf16.msra.mxu0 %v4359
  %5331 = vmatmul.bf16.gmra.mxu0 %v1973
  %v5332 = vpop.f32.mrf.mxu0
  %v5333 = vadd.f32 %v5320, %v5332
  %v5334 = vpop.f32.mrf.mxu0
  %5335 = vdwg.mxu0
  %5336 = vmatpush.bf16.msra.mxu0 %v4389
  %5337 = vmatpush.bf16.msra.mxu0 %v4387
  %5338 = vmatpush.bf16.msra.mxu0 %v4385
  %5339 = vmatpush.bf16.msra.mxu0 %v4383
  %5340 = vmatpush.bf16.msra.mxu0 %v4381
  %5341 = vmatpush.bf16.msra.mxu0 %v4379
  %5342 = vmatpush.bf16.msra.mxu0 %v4377
  %5343 = vmatpush.bf16.msra.mxu0 %v4375
  %5344 = vmatmul.bf16.gmra.mxu0 %v1974
  %v5345 = vpop.f32.mrf.mxu0
  %v5346 = vadd.f32 %v5333, %v5345
  %v5347 = vpop.f32.mrf.mxu0
  %5348 = vdwg.mxu0
  %5349 = vmatpush.bf16.msra.mxu0 %v4405
  %5350 = vmatpush.bf16.msra.mxu0 %v4403
  %5351 = vmatpush.bf16.msra.mxu0 %v4401
  %5352 = vmatpush.bf16.msra.mxu0 %v4399
  %5353 = vmatpush.bf16.msra.mxu0 %v4397
  %5354 = vmatpush.bf16.msra.mxu0 %v4395
  %5355 = vmatpush.bf16.msra.mxu0 %v4393
  %5356 = vmatpush.bf16.msra.mxu0 %v4391
  %5357 = vmatmul.bf16.gmra.mxu0 %v1975
  %v5358 = vpop.f32.mrf.mxu0
  %v5359 = vadd.f32 %v5346, %v5358
  %v5360 = vpop.f32.mrf.mxu0
  %5361 = vdwg.mxu0
  %5362 = vmatpush.bf16.msra.mxu0 %v4421
  %5363 = vmatpush.bf16.msra.mxu0 %v4419
  %5364 = vmatpush.bf16.msra.mxu0 %v4417
  %5365 = vmatpush.bf16.msra.mxu0 %v4415
  %5366 = vmatpush.bf16.msra.mxu0 %v4413
  %5367 = vmatpush.bf16.msra.mxu0 %v4411
  %5368 = vmatpush.bf16.msra.mxu0 %v4409
  %5369 = vmatpush.bf16.msra.mxu0 %v4407
  %5370 = vmatmul.bf16.gmra.mxu0 %v1976
  %v5371 = vpop.f32.mrf.mxu0
  %v5372 = vadd.f32 %v5359, %v5371
  %v5373 = vpop.f32.mrf.mxu0
  %5374 = vdwg.mxu0
  %5375 = vmatpush.bf16.msra.mxu0 %v4437
  %5376 = vmatpush.bf16.msra.mxu0 %v4435
  %5377 = vmatpush.bf16.msra.mxu0 %v4433
  %5378 = vmatpush.bf16.msra.mxu0 %v4431
  %5379 = vmatpush.bf16.msra.mxu0 %v4429
  %5380 = vmatpush.bf16.msra.mxu0 %v4427
  %5381 = vmatpush.bf16.msra.mxu0 %v4425
  %5382 = vmatpush.bf16.msra.mxu0 %v4423
  %5383 = vmatmul.bf16.gmra.mxu0 %v1977
  %v5384 = vpop.f32.mrf.mxu0
  %v5385 = vadd.f32 %v5372, %v5384
  %v5386 = vpop.f32.mrf.mxu0
  %5387 = vdwg.mxu0
  %5388 = vmatpush.bf16.msra.mxu0 %v4453
  %5389 = vmatpush.bf16.msra.mxu0 %v4451
  %5390 = vmatpush.bf16.msra.mxu0 %v4449
  %5391 = vmatpush.bf16.msra.mxu0 %v4447
  %5392 = vmatpush.bf16.msra.mxu0 %v4445
  %5393 = vmatpush.bf16.msra.mxu0 %v4443
  %5394 = vmatpush.bf16.msra.mxu0 %v4441
  %5395 = vmatpush.bf16.msra.mxu0 %v4439
  %5396 = vmatmul.bf16.gmra.mxu0 %v1978
  %v5397 = vpop.f32.mrf.mxu0
  %v5398 = vadd.f32 %v5385, %v5397
  %v5399 = vpop.f32.mrf.mxu0
  %5400 = vdwg.mxu0
  %5401 = vmatpush.bf16.msra.mxu0 %v4469
  %5402 = vmatpush.bf16.msra.mxu0 %v4467
  %5403 = vmatpush.bf16.msra.mxu0 %v4465
  %5404 = vmatpush.bf16.msra.mxu0 %v4463
  %5405 = vmatpush.bf16.msra.mxu0 %v4461
  %5406 = vmatpush.bf16.msra.mxu0 %v4459
  %5407 = vmatpush.bf16.msra.mxu0 %v4457
  %5408 = vmatpush.bf16.msra.mxu0 %v4455
  %5409 = vmatmul.bf16.gmra.mxu0 %v1979
  %v5410 = vpop.f32.mrf.mxu0
  %v5411 = vadd.f32 %v5398, %v5410
  %v5412 = vpop.f32.mrf.mxu0
  %5413 = vdwg.mxu0
  %5414 = vmatpush.bf16.msra.mxu0 %v4485
  %5415 = vmatpush.bf16.msra.mxu0 %v4483
  %5416 = vmatpush.bf16.msra.mxu0 %v4481
  %5417 = vmatpush.bf16.msra.mxu0 %v4479
  %5418 = vmatpush.bf16.msra.mxu0 %v4477
  %5419 = vmatpush.bf16.msra.mxu0 %v4475
  %5420 = vmatpush.bf16.msra.mxu0 %v4473
  %5421 = vmatpush.bf16.msra.mxu0 %v4471
  %5422 = vmatmul.bf16.gmra.mxu0 %v1980
  %v5423 = vpop.f32.mrf.mxu0
  %v5424 = vadd.f32 %v5411, %v5423
  %v5425 = vpop.f32.mrf.mxu0
  %5426 = vdwg.mxu0
  %5427 = vmatpush.bf16.msra.mxu0 %v4501
  %5428 = vmatpush.bf16.msra.mxu0 %v4499
  %5429 = vmatpush.bf16.msra.mxu0 %v4497
  %5430 = vmatpush.bf16.msra.mxu0 %v4495
  %5431 = vmatpush.bf16.msra.mxu0 %v4493
  %5432 = vmatpush.bf16.msra.mxu0 %v4491
  %5433 = vmatpush.bf16.msra.mxu0 %v4489
  %5434 = vmatpush.bf16.msra.mxu0 %v4487
  %5435 = vmatmul.bf16.gmra.mxu0 %v1981
  %v5436 = vpop.f32.mrf.mxu0
  %v5437 = vadd.f32 %v5424, %v5436
  %v5438 = vpop.f32.mrf.mxu0
  %5439 = vdwg.mxu0
  %5440 = vmatpush.bf16.msra.mxu0 %v4517
  %5441 = vmatpush.bf16.msra.mxu0 %v4515
  %5442 = vmatpush.bf16.msra.mxu0 %v4513
  %5443 = vmatpush.bf16.msra.mxu0 %v4511
  %5444 = vmatpush.bf16.msra.mxu0 %v4509
  %5445 = vmatpush.bf16.msra.mxu0 %v4507
  %5446 = vmatpush.bf16.msra.mxu0 %v4505
  %5447 = vmatpush.bf16.msra.mxu0 %v4503
  %5448 = vmatmul.bf16.gmra.mxu0 %v1982
  %v5449 = vpop.f32.mrf.mxu0
  %v5450 = vadd.f32 %v5437, %v5449
  %v5451 = vpop.f32.mrf.mxu0
  %5452 = vdwg.mxu0
  %5453 = vmatpush.bf16.msra.mxu0 %v4533
  %5454 = vmatpush.bf16.msra.mxu0 %v4531
  %5455 = vmatpush.bf16.msra.mxu0 %v4529
  %5456 = vmatpush.bf16.msra.mxu0 %v4527
  %5457 = vmatpush.bf16.msra.mxu0 %v4525
  %5458 = vmatpush.bf16.msra.mxu0 %v4523
  %5459 = vmatpush.bf16.msra.mxu0 %v4521
  %5460 = vmatpush.bf16.msra.mxu0 %v4519
  %5461 = vmatmul.bf16.gmra.mxu0 %v1983
  %v5462 = vpop.f32.mrf.mxu0
  %v5463 = vadd.f32 %v5450, %v5462
  %v5464 = vpop.f32.mrf.mxu0
  %5465 = vdwg.mxu0
  %5466 = vmatpush.bf16.msra.mxu0 %v4549
  %5467 = vmatpush.bf16.msra.mxu0 %v4547
  %5468 = vmatpush.bf16.msra.mxu0 %v4545
  %5469 = vmatpush.bf16.msra.mxu0 %v4543
  %5470 = vmatpush.bf16.msra.mxu0 %v4541
  %5471 = vmatpush.bf16.msra.mxu0 %v4539
  %5472 = vmatpush.bf16.msra.mxu0 %v4537
  %5473 = vmatpush.bf16.msra.mxu0 %v4535
  %5474 = vmatmul.bf16.gmra.mxu0 %v1984
  %v5475 = vpop.f32.mrf.mxu0
  %v5476 = vadd.f32 %v5463, %v5475
  %v5477 = vpop.f32.mrf.mxu0
  %5478 = vdwg.mxu0
  %5479 = vmatpush.bf16.msra.mxu0 %v4054
  %5480 = vmatpush.bf16.msra.mxu0 %v4052
  %5481 = vmatpush.bf16.msra.mxu0 %v4050
  %5482 = vmatpush.bf16.msra.mxu0 %v4048
  %5483 = vmatpush.bf16.msra.mxu0 %v4046
  %5484 = vmatpush.bf16.msra.mxu0 %v4044
  %5485 = vmatpush.bf16.msra.mxu0 %v4042
  %5486 = vmatpush.bf16.msra.mxu0 %v4040
  %5487 = vmatmul.bf16.gmra.mxu0 %v1953
  %v5488 = vpop.f32.mrf.mxu0
  %v5489 = vadd.f32 %v2500, %v5488
  %v5490 = vpop.f32.mrf.mxu0
  %5491 = vdwg.mxu0
  %5492 = vmatpush.bf16.msra.mxu0 %v4070
  %5493 = vmatpush.bf16.msra.mxu0 %v4068
  %5494 = vmatpush.bf16.msra.mxu0 %v4066
  %5495 = vmatpush.bf16.msra.mxu0 %v4064
  %5496 = vmatpush.bf16.msra.mxu0 %v4062
  %5497 = vmatpush.bf16.msra.mxu0 %v4060
  %5498 = vmatpush.bf16.msra.mxu0 %v4058
  %5499 = vmatpush.bf16.msra.mxu0 %v4056
  %5500 = vmatmul.bf16.gmra.mxu0 %v1954
  %v5501 = vpop.f32.mrf.mxu0
  %v5502 = vadd.f32 %v5489, %v5501
  %v5503 = vpop.f32.mrf.mxu0
  %5504 = vdwg.mxu0
  %5505 = vmatpush.bf16.msra.mxu0 %v4086
  %5506 = vmatpush.bf16.msra.mxu0 %v4084
  %5507 = vmatpush.bf16.msra.mxu0 %v4082
  %5508 = vmatpush.bf16.msra.mxu0 %v4080
  %5509 = vmatpush.bf16.msra.mxu0 %v4078
  %5510 = vmatpush.bf16.msra.mxu0 %v4076
  %5511 = vmatpush.bf16.msra.mxu0 %v4074
  %5512 = vmatpush.bf16.msra.mxu0 %v4072
  %5513 = vmatmul.bf16.gmra.mxu0 %v1955
  %v5514 = vpop.f32.mrf.mxu0
  %v5515 = vadd.f32 %v5502, %v5514
  %v5516 = vpop.f32.mrf.mxu0
  %5517 = vdwg.mxu0
  %5518 = vmatpush.bf16.msra.mxu0 %v4102
  %5519 = vmatpush.bf16.msra.mxu0 %v4100
  %5520 = vmatpush.bf16.msra.mxu0 %v4098
  %5521 = vmatpush.bf16.msra.mxu0 %v4096
  %5522 = vmatpush.bf16.msra.mxu0 %v4094
  %5523 = vmatpush.bf16.msra.mxu0 %v4092
  %5524 = vmatpush.bf16.msra.mxu0 %v4090
  %5525 = vmatpush.bf16.msra.mxu0 %v4088
  %5526 = vmatmul.bf16.gmra.mxu0 %v1956
  %v5527 = vpop.f32.mrf.mxu0
  %v5528 = vadd.f32 %v5515, %v5527
  %v5529 = vpop.f32.mrf.mxu0
  %5530 = vdwg.mxu0
  %5531 = vmatpush.bf16.msra.mxu0 %v4118
  %5532 = vmatpush.bf16.msra.mxu0 %v4116
  %5533 = vmatpush.bf16.msra.mxu0 %v4114
  %5534 = vmatpush.bf16.msra.mxu0 %v4112
  %5535 = vmatpush.bf16.msra.mxu0 %v4110
  %5536 = vmatpush.bf16.msra.mxu0 %v4108
  %5537 = vmatpush.bf16.msra.mxu0 %v4106
  %5538 = vmatpush.bf16.msra.mxu0 %v4104
  %5539 = vmatmul.bf16.gmra.mxu0 %v1957
  %v5540 = vpop.f32.mrf.mxu0
  %v5541 = vadd.f32 %v5528, %v5540
  %v5542 = vpop.f32.mrf.mxu0
  %5543 = vdwg.mxu0
  %5544 = vmatpush.bf16.msra.mxu0 %v4134
  %5545 = vmatpush.bf16.msra.mxu0 %v4132
  %5546 = vmatpush.bf16.msra.mxu0 %v4130
  %5547 = vmatpush.bf16.msra.mxu0 %v4128
  %5548 = vmatpush.bf16.msra.mxu0 %v4126
  %5549 = vmatpush.bf16.msra.mxu0 %v4124
  %5550 = vmatpush.bf16.msra.mxu0 %v4122
  %5551 = vmatpush.bf16.msra.mxu0 %v4120
  %5552 = vmatmul.bf16.gmra.mxu0 %v1958
  %v5553 = vpop.f32.mrf.mxu0
  %v5554 = vadd.f32 %v5541, %v5553
  %v5555 = vpop.f32.mrf.mxu0
  %5556 = vdwg.mxu0
  %5557 = vmatpush.bf16.msra.mxu0 %v4150
  %5558 = vmatpush.bf16.msra.mxu0 %v4148
  %5559 = vmatpush.bf16.msra.mxu0 %v4146
  %5560 = vmatpush.bf16.msra.mxu0 %v4144
  %5561 = vmatpush.bf16.msra.mxu0 %v4142
  %5562 = vmatpush.bf16.msra.mxu0 %v4140
  %5563 = vmatpush.bf16.msra.mxu0 %v4138
  %5564 = vmatpush.bf16.msra.mxu0 %v4136
  %5565 = vmatmul.bf16.gmra.mxu0 %v1959
  %v5566 = vpop.f32.mrf.mxu0
  %v5567 = vadd.f32 %v5554, %v5566
  %v5568 = vpop.f32.mrf.mxu0
  %5569 = vdwg.mxu0
  %5570 = vmatpush.bf16.msra.mxu0 %v4166
  %5571 = vmatpush.bf16.msra.mxu0 %v4164
  %5572 = vmatpush.bf16.msra.mxu0 %v4162
  %5573 = vmatpush.bf16.msra.mxu0 %v4160
  %5574 = vmatpush.bf16.msra.mxu0 %v4158
  %5575 = vmatpush.bf16.msra.mxu0 %v4156
  %5576 = vmatpush.bf16.msra.mxu0 %v4154
  %5577 = vmatpush.bf16.msra.mxu0 %v4152
  %5578 = vmatmul.bf16.gmra.mxu0 %v1960
  %v5579 = vpop.f32.mrf.mxu0
  %v5580 = vadd.f32 %v5567, %v5579
  %v5581 = vpop.f32.mrf.mxu0
  %5582 = vdwg.mxu0
  %5583 = vmatpush.bf16.msra.mxu0 %v4182
  %5584 = vmatpush.bf16.msra.mxu0 %v4180
  %5585 = vmatpush.bf16.msra.mxu0 %v4178
  %5586 = vmatpush.bf16.msra.mxu0 %v4176
  %5587 = vmatpush.bf16.msra.mxu0 %v4174
  %5588 = vmatpush.bf16.msra.mxu0 %v4172
  %5589 = vmatpush.bf16.msra.mxu0 %v4170
  %5590 = vmatpush.bf16.msra.mxu0 %v4168
  %5591 = vmatmul.bf16.gmra.mxu0 %v1961
  %v5592 = vpop.f32.mrf.mxu0
  %v5593 = vadd.f32 %v5580, %v5592
  %v5594 = vpop.f32.mrf.mxu0
  %5595 = vdwg.mxu0
  %5596 = vmatpush.bf16.msra.mxu0 %v4198
  %5597 = vmatpush.bf16.msra.mxu0 %v4196
  %5598 = vmatpush.bf16.msra.mxu0 %v4194
  %5599 = vmatpush.bf16.msra.mxu0 %v4192
  %5600 = vmatpush.bf16.msra.mxu0 %v4190
  %5601 = vmatpush.bf16.msra.mxu0 %v4188
  %5602 = vmatpush.bf16.msra.mxu0 %v4186
  %5603 = vmatpush.bf16.msra.mxu0 %v4184
  %5604 = vmatmul.bf16.gmra.mxu0 %v1962
  %v5605 = vpop.f32.mrf.mxu0
  %v5606 = vadd.f32 %v5593, %v5605
  %v5607 = vpop.f32.mrf.mxu0
  %5608 = vdwg.mxu0
  %5609 = vmatpush.bf16.msra.mxu0 %v4214
  %5610 = vmatpush.bf16.msra.mxu0 %v4212
  %5611 = vmatpush.bf16.msra.mxu0 %v4210
  %5612 = vmatpush.bf16.msra.mxu0 %v4208
  %5613 = vmatpush.bf16.msra.mxu0 %v4206
  %5614 = vmatpush.bf16.msra.mxu0 %v4204
  %5615 = vmatpush.bf16.msra.mxu0 %v4202
  %5616 = vmatpush.bf16.msra.mxu0 %v4200
  %5617 = vmatmul.bf16.gmra.mxu0 %v1963
  %v5618 = vpop.f32.mrf.mxu0
  %v5619 = vadd.f32 %v5606, %v5618
  %v5620 = vpop.f32.mrf.mxu0
  %5621 = vdwg.mxu0
  %5622 = vmatpush.bf16.msra.mxu0 %v4230
  %5623 = vmatpush.bf16.msra.mxu0 %v4228
  %5624 = vmatpush.bf16.msra.mxu0 %v4226
  %5625 = vmatpush.bf16.msra.mxu0 %v4224
  %5626 = vmatpush.bf16.msra.mxu0 %v4222
  %5627 = vmatpush.bf16.msra.mxu0 %v4220
  %5628 = vmatpush.bf16.msra.mxu0 %v4218
  %5629 = vmatpush.bf16.msra.mxu0 %v4216
  %5630 = vmatmul.bf16.gmra.mxu0 %v1964
  %v5631 = vpop.f32.mrf.mxu0
  %v5632 = vadd.f32 %v5619, %v5631
  %v5633 = vpop.f32.mrf.mxu0
  %5634 = vdwg.mxu0
  %5635 = vmatpush.bf16.msra.mxu0 %v4246
  %5636 = vmatpush.bf16.msra.mxu0 %v4244
  %5637 = vmatpush.bf16.msra.mxu0 %v4242
  %5638 = vmatpush.bf16.msra.mxu0 %v4240
  %5639 = vmatpush.bf16.msra.mxu0 %v4238
  %5640 = vmatpush.bf16.msra.mxu0 %v4236
  %5641 = vmatpush.bf16.msra.mxu0 %v4234
  %5642 = vmatpush.bf16.msra.mxu0 %v4232
  %5643 = vmatmul.bf16.gmra.mxu0 %v1965
  %v5644 = vpop.f32.mrf.mxu0
  %v5645 = vadd.f32 %v5632, %v5644
  %v5646 = vpop.f32.mrf.mxu0
  %5647 = vdwg.mxu0
  %5648 = vmatpush.bf16.msra.mxu0 %v4262
  %5649 = vmatpush.bf16.msra.mxu0 %v4260
  %5650 = vmatpush.bf16.msra.mxu0 %v4258
  %5651 = vmatpush.bf16.msra.mxu0 %v4256
  %5652 = vmatpush.bf16.msra.mxu0 %v4254
  %5653 = vmatpush.bf16.msra.mxu0 %v4252
  %5654 = vmatpush.bf16.msra.mxu0 %v4250
  %5655 = vmatpush.bf16.msra.mxu0 %v4248
  %5656 = vmatmul.bf16.gmra.mxu0 %v1966
  %v5657 = vpop.f32.mrf.mxu0
  %v5658 = vadd.f32 %v5645, %v5657
  %v5659 = vpop.f32.mrf.mxu0
  %5660 = vdwg.mxu0
  %5661 = vmatpush.bf16.msra.mxu0 %v4278
  %5662 = vmatpush.bf16.msra.mxu0 %v4276
  %5663 = vmatpush.bf16.msra.mxu0 %v4274
  %5664 = vmatpush.bf16.msra.mxu0 %v4272
  %5665 = vmatpush.bf16.msra.mxu0 %v4270
  %5666 = vmatpush.bf16.msra.mxu0 %v4268
  %5667 = vmatpush.bf16.msra.mxu0 %v4266
  %5668 = vmatpush.bf16.msra.mxu0 %v4264
  %5669 = vmatmul.bf16.gmra.mxu0 %v1967
  %v5670 = vpop.f32.mrf.mxu0
  %v5671 = vadd.f32 %v5658, %v5670
  %v5672 = vpop.f32.mrf.mxu0
  %5673 = vdwg.mxu0
  %5674 = vmatpush.bf16.msra.mxu0 %v4294
  %5675 = vmatpush.bf16.msra.mxu0 %v4292
  %5676 = vmatpush.bf16.msra.mxu0 %v4290
  %5677 = vmatpush.bf16.msra.mxu0 %v4288
  %5678 = vmatpush.bf16.msra.mxu0 %v4286
  %5679 = vmatpush.bf16.msra.mxu0 %v4284
  %5680 = vmatpush.bf16.msra.mxu0 %v4282
  %5681 = vmatpush.bf16.msra.mxu0 %v4280
  %5682 = vmatmul.bf16.gmra.mxu0 %v1968
  %v5683 = vpop.f32.mrf.mxu0
  %v5684 = vadd.f32 %v5671, %v5683
  %v5685 = vpop.f32.mrf.mxu0
  %5686 = vdwg.mxu0
  %5687 = vmatpush.bf16.msra.mxu0 %v4310
  %5688 = vmatpush.bf16.msra.mxu0 %v4308
  %5689 = vmatpush.bf16.msra.mxu0 %v4306
  %5690 = vmatpush.bf16.msra.mxu0 %v4304
  %5691 = vmatpush.bf16.msra.mxu0 %v4302
  %5692 = vmatpush.bf16.msra.mxu0 %v4300
  %5693 = vmatpush.bf16.msra.mxu0 %v4298
  %5694 = vmatpush.bf16.msra.mxu0 %v4296
  %5695 = vmatmul.bf16.gmra.mxu0 %v1969
  %v5696 = vpop.f32.mrf.mxu0
  %v5697 = vadd.f32 %v5684, %v5696
  %v5698 = vpop.f32.mrf.mxu0
  %5699 = vdwg.mxu0
  %5700 = vmatpush.bf16.msra.mxu0 %v4326
  %5701 = vmatpush.bf16.msra.mxu0 %v4324
  %5702 = vmatpush.bf16.msra.mxu0 %v4322
  %5703 = vmatpush.bf16.msra.mxu0 %v4320
  %5704 = vmatpush.bf16.msra.mxu0 %v4318
  %5705 = vmatpush.bf16.msra.mxu0 %v4316
  %5706 = vmatpush.bf16.msra.mxu0 %v4314
  %5707 = vmatpush.bf16.msra.mxu0 %v4312
  %5708 = vmatmul.bf16.gmra.mxu0 %v1970
  %v5709 = vpop.f32.mrf.mxu0
  %v5710 = vadd.f32 %v5697, %v5709
  %v5711 = vpop.f32.mrf.mxu0
  %5712 = vdwg.mxu0
  %5713 = vmatpush.bf16.msra.mxu0 %v4342
  %5714 = vmatpush.bf16.msra.mxu0 %v4340
  %5715 = vmatpush.bf16.msra.mxu0 %v4338
  %5716 = vmatpush.bf16.msra.mxu0 %v4336
  %5717 = vmatpush.bf16.msra.mxu0 %v4334
  %5718 = vmatpush.bf16.msra.mxu0 %v4332
  %5719 = vmatpush.bf16.msra.mxu0 %v4330
  %5720 = vmatpush.bf16.msra.mxu0 %v4328
  %5721 = vmatmul.bf16.gmra.mxu0 %v1971
  %v5722 = vpop.f32.mrf.mxu0
  %v5723 = vadd.f32 %v5710, %v5722
  %v5724 = vpop.f32.mrf.mxu0
  %5725 = vdwg.mxu0
  %5726 = vmatpush.bf16.msra.mxu0 %v4358
  %5727 = vmatpush.bf16.msra.mxu0 %v4356
  %5728 = vmatpush.bf16.msra.mxu0 %v4354
  %5729 = vmatpush.bf16.msra.mxu0 %v4352
  %5730 = vmatpush.bf16.msra.mxu0 %v4350
  %5731 = vmatpush.bf16.msra.mxu0 %v4348
  %5732 = vmatpush.bf16.msra.mxu0 %v4346
  %5733 = vmatpush.bf16.msra.mxu0 %v4344
  %5734 = vmatmul.bf16.gmra.mxu0 %v1972
  %v5735 = vpop.f32.mrf.mxu0
  %v5736 = vadd.f32 %v5723, %v5735
  %v5737 = vpop.f32.mrf.mxu0
  %5738 = vdwg.mxu0
  %5739 = vmatpush.bf16.msra.mxu0 %v4374
  %5740 = vmatpush.bf16.msra.mxu0 %v4372
  %5741 = vmatpush.bf16.msra.mxu0 %v4370
  %5742 = vmatpush.bf16.msra.mxu0 %v4368
  %5743 = vmatpush.bf16.msra.mxu0 %v4366
  %5744 = vmatpush.bf16.msra.mxu0 %v4364
  %5745 = vmatpush.bf16.msra.mxu0 %v4362
  %5746 = vmatpush.bf16.msra.mxu0 %v4360
  %5747 = vmatmul.bf16.gmra.mxu0 %v1973
  %v5748 = vpop.f32.mrf.mxu0
  %v5749 = vadd.f32 %v5736, %v5748
  %v5750 = vpop.f32.mrf.mxu0
  %5751 = vdwg.mxu0
  %5752 = vmatpush.bf16.msra.mxu0 %v4390
  %5753 = vmatpush.bf16.msra.mxu0 %v4388
  %5754 = vmatpush.bf16.msra.mxu0 %v4386
  %5755 = vmatpush.bf16.msra.mxu0 %v4384
  %5756 = vmatpush.bf16.msra.mxu0 %v4382
  %5757 = vmatpush.bf16.msra.mxu0 %v4380
  %5758 = vmatpush.bf16.msra.mxu0 %v4378
  %5759 = vmatpush.bf16.msra.mxu0 %v4376
  %5760 = vmatmul.bf16.gmra.mxu0 %v1974
  %v5761 = vpop.f32.mrf.mxu0
  %v5762 = vadd.f32 %v5749, %v5761
  %v5763 = vpop.f32.mrf.mxu0
  %5764 = vdwg.mxu0
  %5765 = vmatpush.bf16.msra.mxu0 %v4406
  %5766 = vmatpush.bf16.msra.mxu0 %v4404
  %5767 = vmatpush.bf16.msra.mxu0 %v4402
  %5768 = vmatpush.bf16.msra.mxu0 %v4400
  %5769 = vmatpush.bf16.msra.mxu0 %v4398
  %5770 = vmatpush.bf16.msra.mxu0 %v4396
  %5771 = vmatpush.bf16.msra.mxu0 %v4394
  %5772 = vmatpush.bf16.msra.mxu0 %v4392
  %5773 = vmatmul.bf16.gmra.mxu0 %v1975
  %v5774 = vpop.f32.mrf.mxu0
  %v5775 = vadd.f32 %v5762, %v5774
  %v5776 = vpop.f32.mrf.mxu0
  %5777 = vdwg.mxu0
  %5778 = vmatpush.bf16.msra.mxu0 %v4422
  %5779 = vmatpush.bf16.msra.mxu0 %v4420
  %5780 = vmatpush.bf16.msra.mxu0 %v4418
  %5781 = vmatpush.bf16.msra.mxu0 %v4416
  %5782 = vmatpush.bf16.msra.mxu0 %v4414
  %5783 = vmatpush.bf16.msra.mxu0 %v4412
  %5784 = vmatpush.bf16.msra.mxu0 %v4410
  %5785 = vmatpush.bf16.msra.mxu0 %v4408
  %5786 = vmatmul.bf16.gmra.mxu0 %v1976
  %v5787 = vpop.f32.mrf.mxu0
  %v5788 = vadd.f32 %v5775, %v5787
  %v5789 = vpop.f32.mrf.mxu0
  %5790 = vdwg.mxu0
  %5791 = vmatpush.bf16.msra.mxu0 %v4438
  %5792 = vmatpush.bf16.msra.mxu0 %v4436
  %5793 = vmatpush.bf16.msra.mxu0 %v4434
  %5794 = vmatpush.bf16.msra.mxu0 %v4432
  %5795 = vmatpush.bf16.msra.mxu0 %v4430
  %5796 = vmatpush.bf16.msra.mxu0 %v4428
  %5797 = vmatpush.bf16.msra.mxu0 %v4426
  %5798 = vmatpush.bf16.msra.mxu0 %v4424
  %5799 = vmatmul.bf16.gmra.mxu0 %v1977
  %v5800 = vpop.f32.mrf.mxu0
  %v5801 = vadd.f32 %v5788, %v5800
  %v5802 = vpop.f32.mrf.mxu0
  %5803 = vdwg.mxu0
  %5804 = vmatpush.bf16.msra.mxu0 %v4454
  %5805 = vmatpush.bf16.msra.mxu0 %v4452
  %5806 = vmatpush.bf16.msra.mxu0 %v4450
  %5807 = vmatpush.bf16.msra.mxu0 %v4448
  %5808 = vmatpush.bf16.msra.mxu0 %v4446
  %5809 = vmatpush.bf16.msra.mxu0 %v4444
  %5810 = vmatpush.bf16.msra.mxu0 %v4442
  %5811 = vmatpush.bf16.msra.mxu0 %v4440
  %5812 = vmatmul.bf16.gmra.mxu0 %v1978
  %v5813 = vpop.f32.mrf.mxu0
  %v5814 = vadd.f32 %v5801, %v5813
  %v5815 = vpop.f32.mrf.mxu0
  %5816 = vdwg.mxu0
  %5817 = vmatpush.bf16.msra.mxu0 %v4470
  %5818 = vmatpush.bf16.msra.mxu0 %v4468
  %5819 = vmatpush.bf16.msra.mxu0 %v4466
  %5820 = vmatpush.bf16.msra.mxu0 %v4464
  %5821 = vmatpush.bf16.msra.mxu0 %v4462
  %5822 = vmatpush.bf16.msra.mxu0 %v4460
  %5823 = vmatpush.bf16.msra.mxu0 %v4458
  %5824 = vmatpush.bf16.msra.mxu0 %v4456
  %5825 = vmatmul.bf16.gmra.mxu0 %v1979
  %v5826 = vpop.f32.mrf.mxu0
  %v5827 = vadd.f32 %v5814, %v5826
  %v5828 = vpop.f32.mrf.mxu0
  %5829 = vdwg.mxu0
  %5830 = vmatpush.bf16.msra.mxu0 %v4486
  %5831 = vmatpush.bf16.msra.mxu0 %v4484
  %5832 = vmatpush.bf16.msra.mxu0 %v4482
  %5833 = vmatpush.bf16.msra.mxu0 %v4480
  %5834 = vmatpush.bf16.msra.mxu0 %v4478
  %5835 = vmatpush.bf16.msra.mxu0 %v4476
  %5836 = vmatpush.bf16.msra.mxu0 %v4474
  %5837 = vmatpush.bf16.msra.mxu0 %v4472
  %5838 = vmatmul.bf16.gmra.mxu0 %v1980
  %v5839 = vpop.f32.mrf.mxu0
  %v5840 = vadd.f32 %v5827, %v5839
  %v5841 = vpop.f32.mrf.mxu0
  %5842 = vdwg.mxu0
  %5843 = vmatpush.bf16.msra.mxu0 %v4502
  %5844 = vmatpush.bf16.msra.mxu0 %v4500
  %5845 = vmatpush.bf16.msra.mxu0 %v4498
  %5846 = vmatpush.bf16.msra.mxu0 %v4496
  %5847 = vmatpush.bf16.msra.mxu0 %v4494
  %5848 = vmatpush.bf16.msra.mxu0 %v4492
  %5849 = vmatpush.bf16.msra.mxu0 %v4490
  %5850 = vmatpush.bf16.msra.mxu0 %v4488
  %5851 = vmatmul.bf16.gmra.mxu0 %v1981
  %v5852 = vpop.f32.mrf.mxu0
  %v5853 = vadd.f32 %v5840, %v5852
  %v5854 = vpop.f32.mrf.mxu0
  %5855 = vdwg.mxu0
  %5856 = vmatpush.bf16.msra.mxu0 %v4518
  %5857 = vmatpush.bf16.msra.mxu0 %v4516
  %5858 = vmatpush.bf16.msra.mxu0 %v4514
  %5859 = vmatpush.bf16.msra.mxu0 %v4512
  %5860 = vmatpush.bf16.msra.mxu0 %v4510
  %5861 = vmatpush.bf16.msra.mxu0 %v4508
  %5862 = vmatpush.bf16.msra.mxu0 %v4506
  %5863 = vmatpush.bf16.msra.mxu0 %v4504
  %5864 = vmatmul.bf16.gmra.mxu0 %v1982
  %v5865 = vpop.f32.mrf.mxu0
  %v5866 = vadd.f32 %v5853, %v5865
  %v5867 = vpop.f32.mrf.mxu0
  %5868 = vdwg.mxu0
  %5869 = vmatpush.bf16.msra.mxu0 %v4534
  %5870 = vmatpush.bf16.msra.mxu0 %v4532
  %5871 = vmatpush.bf16.msra.mxu0 %v4530
  %5872 = vmatpush.bf16.msra.mxu0 %v4528
  %5873 = vmatpush.bf16.msra.mxu0 %v4526
  %5874 = vmatpush.bf16.msra.mxu0 %v4524
  %5875 = vmatpush.bf16.msra.mxu0 %v4522
  %5876 = vmatpush.bf16.msra.mxu0 %v4520
  %5877 = vmatmul.bf16.gmra.mxu0 %v1983
  %v5878 = vpop.f32.mrf.mxu0
  %v5879 = vadd.f32 %v5866, %v5878
  %v5880 = vpop.f32.mrf.mxu0
  %5881 = vdwg.mxu0
  %5882 = vmatpush.bf16.msra.mxu0 %v4550
  %5883 = vmatpush.bf16.msra.mxu0 %v4548
  %5884 = vmatpush.bf16.msra.mxu0 %v4546
  %5885 = vmatpush.bf16.msra.mxu0 %v4544
  %5886 = vmatpush.bf16.msra.mxu0 %v4542
  %5887 = vmatpush.bf16.msra.mxu0 %v4540
  %5888 = vmatpush.bf16.msra.mxu0 %v4538
  %5889 = vmatpush.bf16.msra.mxu0 %v4536
  %5890 = vmatmul.bf16.gmra.mxu0 %v1984
  %v5891 = vpop.f32.mrf.mxu0
  %v5892 = vadd.f32 %v5879, %v5891
  %v5893 = vpop.f32.mrf.mxu0
  %5894 = vdwg.mxu0
  %v5895 = vmax.f32 %v5476, 0.0
  %v5896 = vmax.f32 %v5892, 0.0
  %v5897 = vpack.c.bf16 %v5895, %v5895
  %v5898 = vpack.c.bf16 %v5896, %v5896
  %v5899 = vld [vmem:[%s5] sm:$0xf]
  %v5900 = vld [vmem:[%s5 + $0x4] sm:$0xf]
  %v5901 = vld [vmem:[%s5 + $0x8] sm:$0xf]
  %v5902 = vld [vmem:[%s5 + $0xc] sm:$0xf]
  %v5903 = vld [vmem:[%s5 + $0x10] sm:$0xf]
  %v5904 = vld [vmem:[%s5 + $0x14] sm:$0xf]
  %v5905 = vld [vmem:[%s5 + $0x18] sm:$0xf]
  %v5906 = vld [vmem:[%s5 + $0x1c] sm:$0xf]
  %v5907 = vld [vmem:[%s5 + $0x20] sm:$0xf]
  %v5908 = vld [vmem:[%s5 + $0x24] sm:$0xf]
  %v5909 = vld [vmem:[%s5 + $0x28] sm:$0xf]
  %v5910 = vld [vmem:[%s5 + $0x2c] sm:$0xf]
  %v5911 = vld [vmem:[%s5 + $0x30] sm:$0xf]
  %v5912 = vld [vmem:[%s5 + $0x34] sm:$0xf]
  %v5913 = vld [vmem:[%s5 + $0x38] sm:$0xf]
  %v5914 = vld [vmem:[%s5 + $0x3c] sm:$0xf]
  %v5915 = vld [vmem:[%s5 + $0x40] sm:$0xf]
  %v5916 = vld [vmem:[%s5 + $0x44] sm:$0xf]
  %v5917 = vld [vmem:[%s5 + $0x48] sm:$0xf]
  %v5918 = vld [vmem:[%s5 + $0x4c] sm:$0xf]
  %v5919 = vld [vmem:[%s5 + $0x50] sm:$0xf]
  %v5920 = vld [vmem:[%s5 + $0x54] sm:$0xf]
  %v5921 = vld [vmem:[%s5 + $0x58] sm:$0xf]
  %v5922 = vld [vmem:[%s5 + $0x5c] sm:$0xf]
  %v5923 = vld [vmem:[%s5 + $0x60] sm:$0xf]
  %v5924 = vld [vmem:[%s5 + $0x64] sm:$0xf]
  %v5925 = vld [vmem:[%s5 + $0x68] sm:$0xf]
  %v5926 = vld [vmem:[%s5 + $0x6c] sm:$0xf]
  %v5927 = vld [vmem:[%s5 + $0x70] sm:$0xf]
  %v5928 = vld [vmem:[%s5 + $0x74] sm:$0xf]
  %v5929 = vld [vmem:[%s5 + $0x78] sm:$0xf]
  %v5930 = vld [vmem:[%s5 + $0x7c] sm:$0xf]
  %v5931 = vld [vmem:[%s6] sm:$0x1]
  %v5933 = vperm.slane %v5931, 0
  %v5967 = vunpack.c.l.b16 %v5899
  %v5968 = vunpack.c.l.b16 %v5900
  %v5969 = vunpack.c.l.b16 %v5901
  %v5970 = vunpack.c.l.b16 %v5902
  %v5971 = vunpack.c.l.b16 %v5903
  %v5972 = vunpack.c.l.b16 %v5904
  %v5973 = vunpack.c.l.b16 %v5905
  %v5974 = vunpack.c.l.b16 %v5906
  %v5975 = vunpack.c.l.b16 %v5907
  %v5976 = vunpack.c.l.b16 %v5908
  %v5977 = vunpack.c.l.b16 %v5909
  %v5978 = vunpack.c.l.b16 %v5910
  %v5979 = vunpack.c.l.b16 %v5911
  %v5980 = vunpack.c.l.b16 %v5912
  %v5981 = vunpack.c.l.b16 %v5913
  %v5982 = vunpack.c.l.b16 %v5914
  %v5983 = vunpack.c.l.b16 %v5915
  %v5984 = vunpack.c.l.b16 %v5916
  %v5985 = vunpack.c.l.b16 %v5917
  %v5986 = vunpack.c.l.b16 %v5918
  %v5987 = vunpack.c.l.b16 %v5919
  %v5988 = vunpack.c.l.b16 %v5920
  %v5989 = vunpack.c.l.b16 %v5921
  %v5990 = vunpack.c.l.b16 %v5922
  %v5991 = vunpack.c.l.b16 %v5923
  %v5992 = vunpack.c.l.b16 %v5924
  %v5993 = vunpack.c.l.b16 %v5925
  %v5994 = vunpack.c.l.b16 %v5926
  %v5995 = vunpack.c.l.b16 %v5927
  %v5996 = vunpack.c.l.b16 %v5928
  %v5997 = vunpack.c.l.b16 %v5929
  %v5998 = vunpack.c.l.b16 %v5930
  %v5999 = vpack.c.b16 %v5968, %v5967
  %v6000 = vpack.c.b16 %v5970, %v5969
  %v6001 = vpack.c.b16 %v5972, %v5971
  %v6002 = vpack.c.b16 %v5974, %v5973
  %v6003 = vpack.c.b16 %v5976, %v5975
  %v6004 = vpack.c.b16 %v5978, %v5977
  %v6005 = vpack.c.b16 %v5980, %v5979
  %v6006 = vpack.c.b16 %v5982, %v5981
  %v6007 = vpack.c.b16 %v5984, %v5983
  %v6008 = vpack.c.b16 %v5986, %v5985
  %v6009 = vpack.c.b16 %v5988, %v5987
  %v6010 = vpack.c.b16 %v5990, %v5989
  %v6011 = vpack.c.b16 %v5992, %v5991
  %v6012 = vpack.c.b16 %v5994, %v5993
  %v6013 = vpack.c.b16 %v5996, %v5995
  %v6014 = vpack.c.b16 %v5998, %v5997
  %6031 = vmatpush.bf16.msra.mxu0 %v6006
  %6032 = vmatpush.bf16.msra.mxu0 %v6005
  %6033 = vmatpush.bf16.msra.mxu0 %v6004
  %6034 = vmatpush.bf16.msra.mxu0 %v6003
  %6035 = vmatpush.bf16.msra.mxu0 %v6002
  %6036 = vmatpush.bf16.msra.mxu0 %v6001
  %6037 = vmatpush.bf16.msra.mxu0 %v6000
  %6038 = vmatpush.bf16.msra.mxu0 %v5999
  %6039 = vmatmul.bf16.gmra.mxu0 %v5897
  %v6040 = vpop.f32.mrf.mxu0
  %v6041 = vadd.f32 %v5933, %v6040
  %v6042 = vpop.f32.mrf.mxu0
  %6043 = vdwg.mxu0
  %6044 = vmatpush.bf16.msra.mxu0 %v6014
  %6045 = vmatpush.bf16.msra.mxu0 %v6013
  %6046 = vmatpush.bf16.msra.mxu0 %v6012
  %6047 = vmatpush.bf16.msra.mxu0 %v6011
  %6048 = vmatpush.bf16.msra.mxu0 %v6010
  %6049 = vmatpush.bf16.msra.mxu0 %v6009
  %6050 = vmatpush.bf16.msra.mxu0 %v6008
  %6051 = vmatpush.bf16.msra.mxu0 %v6007
  %6052 = vmatmul.bf16.gmra.mxu0 %v5898
  %v6053 = vpop.f32.mrf.mxu0
  %v6054 = vadd.f32 %v6041, %v6053
  %v6055 = vpop.f32.mrf.mxu0
  %6056 = vdwg.mxu0
  %6057 = vst [vmem:[%s7] sm:$0xff] %v6054
  // Predicated region
  $region30: #{pong_qnet_forward.1} parent=0 // pred_check
    _
  $region31: #{pong_qnet_forward.1} parent=0 // pred_check_branch
    %6059 = sbr.rel (0) target = $region33
  $region32: #{pong_qnet_forward.1} parent=0 // pred_region
    _
  $region33: #{pong_qnet_forward.1} parent=0 // pred_fallthru
    _
  // Predicated region
  $region34: #{pong_qnet_forward.1} parent=0 // pred_check
    _
  $region35: #{pong_qnet_forward.1} parent=0 // pred_check_branch
    %6061 = sbr.rel (0) target = $region37
  $region36: #{pong_qnet_forward.1} parent=0 // pred_region
    _
  $region37: #{pong_qnet_forward.1} parent=0 // pred_fallthru
    _

</llo_original>
